<compile_context>
chip_gen: v5e
topology: v5e:2x2
jax: 0.10.0
libtpu: 0.0.40
codegen_flags: <defaults>
</compile_context>

<pallas_src>
import functools

import jax
import jax.numpy as jnp
from jax.experimental import pallas as pl
from jax.experimental.pallas import tpu as pltpu

EPS = 1e-5
K = 5   # conv kernel size
S = 2   # stride
P = 1   # padding


# ---------------------------------------------------------------------------
# Pallas kernels
# ---------------------------------------------------------------------------
def _conv_bn_relu_kernel(pT_ref, wT_ref, b_ref, g_ref, be_ref, o_ref):
    # MXU: (Cout, K*K*Cin) @ (K*K*Cin, M) -> (Cout, M); M is lane-dense.
    y = jnp.dot(wT_ref[...], pT_ref[...], preferred_element_type=jnp.float32)
    y = y + b_ref[...]                               # (Cout, 1) bcast over lanes

    # BatchNorm2d (training mode): per-channel biased stats over M = N*Ho*Wo,
    # computed in one pass (s1, s2) fused into the matmul epilogue.
    # Cross-lane reductions go to the XLU slot (overlaps with VALU work).
    inv_m = 1.0 / y.shape[1]
    s1 = jnp.sum(y, axis=1, keepdims=True)           # (Cout, 1)
    s2 = jnp.sum(y * y, axis=1, keepdims=True)       # (Cout, 1)
    mean = s1 * inv_m
    var = jnp.maximum(s2 * inv_m - mean * mean, 0.0)
    scale = jax.lax.rsqrt(var + EPS) * g_ref[...]    # rsqrt -> EUP
    shift = be_ref[...] - mean * scale

    # Normalize + affine + ReLU, lane-dense store.
    o_ref[...] = jnp.maximum(y * scale + shift, 0.0)


def _conv_sigmoid_kernel(pT_ref, wT_ref, b_ref, o_ref):
    y = jnp.dot(wT_ref[...], pT_ref[...], preferred_element_type=jnp.float32)
    y = y + b_ref[...]
    # Numerically-stable sigmoid; reciprocal routed to the EUP (approx=True).
    z = jnp.exp(-jnp.abs(y))
    inv = pl.reciprocal(1.0 + z, approx=True)
    o_ref[...] = jnp.where(y >= 0.0, inv, z * inv)


def _full_spec(shape):
    # single-block (whole-array) VMEM spec on a trivial grid
    return pl.BlockSpec(shape, lambda i: (0,) * len(shape))


def conv_bn_relu_call(patchesT, w2t, bias, gamma, beta):
    kkc, m = patchesT.shape
    cout = w2t.shape[0]
    return pl.pallas_call(
        _conv_bn_relu_kernel,
        out_shape=jax.ShapeDtypeStruct((cout, m), jnp.float32),
        grid=(1,),
        in_specs=[
            _full_spec((kkc, m)),
            _full_spec((cout, kkc)),
            _full_spec((cout, 1)),
            _full_spec((cout, 1)),
            _full_spec((cout, 1)),
        ],
        out_specs=_full_spec((cout, m)),
        compiler_params=pltpu.CompilerParams(dimension_semantics=("arbitrary",)),
    )(patchesT, w2t, bias, gamma, beta)


def conv_sigmoid_call(patchesT, w2t, bias):
    kkc, m = patchesT.shape
    cout = w2t.shape[0]
    return pl.pallas_call(
        _conv_sigmoid_kernel,
        out_shape=jax.ShapeDtypeStruct((cout, m), jnp.float32),
        grid=(1,),
        in_specs=[
            _full_spec((kkc, m)),
            _full_spec((cout, kkc)),
            _full_spec((cout, 1)),
        ],
        out_specs=_full_spec((cout, m)),
        compiler_params=pltpu.CompilerParams(dimension_semantics=("arbitrary",)),
    )(patchesT, w2t, bias)


# ---------------------------------------------------------------------------
# Glue: im2col (transposed, lane-dense) + one-time parameter packing
# ---------------------------------------------------------------------------
def im2col_T(x_nhwc):
    """x_nhwc: (N, H, W, C) -> patches^T (K*K*C, N*Ho*Wo), plus (N, Ho, Wo).

    Row order of the K*K*C axis is (kh, kw, ci); the M column axis is ordered
    as n * Ho*Wo + ho * Wo + wo.
    """
    n, h, w, c = x_nhwc.shape
    xp = jnp.pad(x_nhwc, ((0, 0), (P, P), (P, P), (0, 0)))
    hp, wp = h + 2 * P, w + 2 * P
    ho = (hp - K) // S + 1
    wo = (wp - K) // S + 1
    cols = []
    for kh in range(K):
        for kw in range(K):
            cols.append(
                xp[:, kh:kh + S * (ho - 1) + 1:S, kw:kw + S * (wo - 1) + 1:S, :]
            )
    patches = jnp.concatenate(cols, axis=-1)                # (N, Ho, Wo, K*K*C)
    patchesT = patches.reshape(n * ho * wo, K * K * c).T    # (K*K*C, M)
    return patchesT, (n, ho, wo)


def pack_params(params):
    """One-time packing: PyTorch (Cout, Cin, kh, kw) -> (Cout, K*K*Cin) matching
    the (kh, kw, ci) row order of im2col_T; biases/BN params -> (Cout, 1)."""
    packed = []
    for p in params:
        w = p["w"]                                          # (Cout, Cin, K, K)
        cout = w.shape[0]
        w2t = jnp.transpose(w, (0, 2, 3, 1)).reshape(cout, -1)
        entry = {"w2t": w2t, "b": p["b"].reshape(cout, 1)}
        if "gamma" in p:
            entry["gamma"] = p["gamma"].reshape(cout, 1)
            entry["beta"] = p["beta"].reshape(cout, 1)
        packed.append(entry)
    return packed


def critic_forward(x_nchw, packed):
    """Forward pass of Critic.  x_nchw: (N, 3, H, W) -> (N, 1, Ho, Wo)."""
    x = jnp.transpose(x_nchw, (0, 2, 3, 1)).astype(jnp.float32)  # NHWC
    n_layers = len(packed)
    for li, p in enumerate(packed):
        patchesT, (n, ho, wo) = im2col_T(x)
        cout = p["w2t"].shape[0]
        if li < n_layers - 1:
            y = conv_bn_relu_call(patchesT, p["w2t"], p["b"], p["gamma"], p["beta"])
        else:
            y = conv_sigmoid_call(patchesT, p["w2t"], p["b"])
        # (Cout, N*Ho*Wo) -> NHWC activation for the next layer's im2col
        x = jnp.transpose(y.reshape(cout, n, ho, wo), (1, 2, 3, 0))
    return jnp.transpose(x, (0, 3, 1, 2))                   # back to NCHW


# ---------------------------------------------------------------------------
# Pure-JAX reference (lax.conv) for a correctness cross-check
# ---------------------------------------------------------------------------
def critic_forward_ref(x_nchw, params):
    x = x_nchw.astype(jnp.float32)
    n_layers = len(params)
    for li, p in enumerate(params):
        y = jax.lax.conv_general_dilated(
            x, p["w"], window_strides=(S, S), padding=[(P, P), (P, P)],
            dimension_numbers=("NCHW", "OIHW", "NCHW"))
        y = y + p["b"].reshape(1, -1, 1, 1)
        if li < n_layers - 1:
            mean = jnp.mean(y, axis=(0, 2, 3), keepdims=True)
            var = jnp.mean((y - mean) ** 2, axis=(0, 2, 3), keepdims=True)
            y = (y - mean) * jax.lax.rsqrt(var + EPS)
            y = y * p["gamma"].reshape(1, -1, 1, 1) + p["beta"].reshape(1, -1, 1, 1)
            y = jnp.maximum(y, 0.0)
        else:
            y = jax.nn.sigmoid(y)
        x = y
    return x


# ---------------------------------------------------------------------------
# Deterministic parameter construction (module __init__ shapes)
# ---------------------------------------------------------------------------
def make_params(conv_dim=8, key=jax.random.PRNGKey(42)):
    chans = [3, conv_dim, conv_dim * 2, conv_dim * 4, conv_dim * 8, 1]
    params = []
    for li in range(5):
        cin, cout = chans[li], chans[li + 1]
        key, kw_, kb_ = jax.random.split(key, 3)
        w = 0.05 * jax.random.normal(kw_, (cout, cin, K, K), jnp.float32)
        b = 0.05 * jax.random.normal(kb_, (cout,), jnp.float32)
        layer = {"w": w, "b": b}
        if li < 4:  # BatchNorm2d params (PyTorch init: gamma=1, beta=0)
            layer["gamma"] = jnp.ones((cout,), jnp.float32)
            layer["beta"] = jnp.zeros((cout,), jnp.float32)
        params.append(layer)
    return params


if __name__ == "__main__":
    # Small deterministic input.  Spatial size 64 so that five stride-2 convs
    # with k=5, p=1 are valid: 64 -> 31 -> 15 -> 7 -> 3 -> 1.
    batch, in_ch, hw = 2, 3, 64
    conv_dim = 8
    x = jax.random.normal(jax.random.PRNGKey(0), (batch, in_ch, hw, hw), jnp.float32)
    params = make_params(conv_dim=conv_dim)

    # Parameter packing hoisted out of the per-forward hot path (done once).
    packed = pack_params(params)

    fwd = jax.jit(functools.partial(critic_forward, packed=packed))
    out = jax.block_until_ready(fwd(x))

    assert out.shape == (batch, 1, 1, 1), out.shape
    assert bool(jnp.all(jnp.isfinite(out)))

    # Cross-check against a pure-JAX (XLA conv) reference of the same module.
    ref = jax.block_until_ready(critic_forward_ref(x, params))
    assert bool(jnp.allclose(out, ref, atol=2e-3, rtol=2e-3)), \
        float(jnp.max(jnp.abs(out - ref)))

    print("KERNEL_OK")
</pallas_src>

<mosaic_0001>
module attributes {stable_mosaic.version = 11 : i64} {
  func.func @_conv_bn_relu_kernel(%arg0: i32, %arg1: memref<75x1922xf32, #tpu.memory_space<vmem>>, %arg2: memref<8x75xf32, #tpu.memory_space<vmem>>, %arg3: memref<8x1xf32, #tpu.memory_space<vmem>>, %arg4: memref<8x1xf32, #tpu.memory_space<vmem>>, %arg5: memref<8x1xf32, #tpu.memory_space<vmem>>, %arg6: memref<8x1922xf32, #tpu.memory_space<vmem>>) attributes {dimension_semantics = [#tpu.dimension_semantics<arbitrary>], iteration_bounds = array<i64: 1>, scalar_prefetch = 0 : i64, scratch_operands = 0 : i64, tpu.core_type = #tpu.core_type<tc>, window_params = [{pipeline_mode = #tpu.pipeline_mode<synchronous>, transform_indices = @transform_0, window_bounds = array<i64: 75, 1922>}, {pipeline_mode = #tpu.pipeline_mode<synchronous>, transform_indices = @transform_1, window_bounds = array<i64: 8, 75>}, {pipeline_mode = #tpu.pipeline_mode<synchronous>, transform_indices = @transform_2, window_bounds = array<i64: 8, 1>}, {pipeline_mode = #tpu.pipeline_mode<synchronous>, transform_indices = @transform_3, window_bounds = array<i64: 8, 1>}, {pipeline_mode = #tpu.pipeline_mode<synchronous>, transform_indices = @transform_4, window_bounds = array<i64: 8, 1>}, {pipeline_mode = #tpu.pipeline_mode<synchronous>, transform_indices = @transform_5, window_bounds = array<i64: 8, 1922>}]} {
    %c0 = arith.constant 0 : index
    %c0_0 = arith.constant 0 : index
    %0 = vector.load %arg2[%c0, %c0_0] : memref<8x75xf32, #tpu.memory_space<vmem>>, vector<8x75xf32>
    %c0_1 = arith.constant 0 : index
    %c0_2 = arith.constant 0 : index
    %1 = vector.load %arg1[%c0_1, %c0_2] : memref<75x1922xf32, #tpu.memory_space<vmem>>, vector<75x1922xf32>
    %cst = arith.constant dense<0.000000e+00> : vector<8x1922xf32>
    %2 = tpu.matmul %0, %1, %cst {dimension_numbers = #tpu.dot_dimension_numbers<[1], [0], [0], [1], [0, 0, 1, 1], [], []>} : vector<8x75xf32>, vector<75x1922xf32>, vector<8x1922xf32> -> vector<8x1922xf32>
    %c0_3 = arith.constant 0 : index
    %c0_4 = arith.constant 0 : index
    %3 = vector.load %arg3[%c0_3, %c0_4] : memref<8x1xf32, #tpu.memory_space<vmem>>, vector<8x1xf32>
    %4 = vector.broadcast %3 : vector<8x1xf32> to vector<8x1922xf32>
    %5 = arith.addf %2, %4 : vector<8x1922xf32>
    %cst_5 = arith.constant dense<0.000000e+00> : vector<8xf32>
    %6 = vector.multi_reduction <add>, %5, %cst_5 [1] : vector<8x1922xf32> to vector<8xf32>
    %7 = vector.shape_cast %6 : vector<8xf32> to vector<8x1xf32>
    %8 = arith.mulf %5, %5 : vector<8x1922xf32>
    %cst_6 = arith.constant dense<0.000000e+00> : vector<8xf32>
    %9 = vector.multi_reduction <add>, %8, %cst_6 [1] : vector<8x1922xf32> to vector<8xf32>
    %10 = vector.shape_cast %9 : vector<8xf32> to vector<8x1xf32>
    %cst_7 = arith.constant 5.20291389E-4 : f32
    %11 = vector.broadcast %cst_7 : f32 to vector<8x1xf32>
    %12 = arith.mulf %7, %11 : vector<8x1xf32>
    %cst_8 = arith.constant 5.20291389E-4 : f32
    %13 = vector.broadcast %cst_8 : f32 to vector<8x1xf32>
    %14 = arith.mulf %10, %13 : vector<8x1xf32>
    %15 = arith.mulf %12, %12 : vector<8x1xf32>
    %16 = arith.subf %14, %15 : vector<8x1xf32>
    %cst_9 = arith.constant 0.000000e+00 : f32
    %17 = vector.broadcast %cst_9 : f32 to vector<8x1xf32>
    %18 = arith.maximumf %16, %17 : vector<8x1xf32>
    %cst_10 = arith.constant 9.99999974E-6 : f32
    %19 = vector.broadcast %cst_10 : f32 to vector<8x1xf32>
    %20 = arith.addf %18, %19 : vector<8x1xf32>
    %21 = math.rsqrt %20 : vector<8x1xf32>
    %c0_11 = arith.constant 0 : index
    %c0_12 = arith.constant 0 : index
    %22 = vector.load %arg4[%c0_11, %c0_12] : memref<8x1xf32, #tpu.memory_space<vmem>>, vector<8x1xf32>
    %23 = arith.mulf %21, %22 : vector<8x1xf32>
    %c0_13 = arith.constant 0 : index
    %c0_14 = arith.constant 0 : index
    %24 = vector.load %arg5[%c0_13, %c0_14] : memref<8x1xf32, #tpu.memory_space<vmem>>, vector<8x1xf32>
    %25 = arith.mulf %12, %23 : vector<8x1xf32>
    %26 = arith.subf %24, %25 : vector<8x1xf32>
    %27 = vector.broadcast %23 : vector<8x1xf32> to vector<8x1922xf32>
    %28 = arith.mulf %5, %27 : vector<8x1922xf32>
    %29 = vector.broadcast %26 : vector<8x1xf32> to vector<8x1922xf32>
    %30 = arith.addf %28, %29 : vector<8x1922xf32>
    %cst_15 = arith.constant 0.000000e+00 : f32
    %31 = vector.broadcast %cst_15 : f32 to vector<8x1922xf32>
    %32 = arith.maximumf %30, %31 : vector<8x1922xf32>
    %c0_16 = arith.constant 0 : index
    %c0_17 = arith.constant 0 : index
    %33 = vector.load %arg6[%c0_16, %c0_17] : memref<8x1922xf32, #tpu.memory_space<vmem>>, vector<8x1922xf32>
    tpu.vector_store %arg6[%c0_16, %c0_17], %32 {strides = array<i32>} : memref<8x1922xf32, #tpu.memory_space<vmem>>, vector<8x1922xf32>,
    return
  }
  func.func @transform_0(%arg0: i32) -> (i32, i32) {
    %c0_i32 = arith.constant 0 : i32
    %c0_i32_0 = arith.constant 0 : i32
    %c0_i32_1 = arith.constant 0 : i32
    return %c0_i32, %c0_i32_0 : i32, i32
  }
  func.func @transform_1(%arg0: i32) -> (i32, i32) {
    %c0_i32 = arith.constant 0 : i32
    %c0_i32_0 = arith.constant 0 : i32
    %c0_i32_1 = arith.constant 0 : i32
    return %c0_i32, %c0_i32_0 : i32, i32
  }
  func.func @transform_2(%arg0: i32) -> (i32, i32) {
    %c0_i32 = arith.constant 0 : i32
    %c0_i32_0 = arith.constant 0 : i32
    %c0_i32_1 = arith.constant 0 : i32
    return %c0_i32, %c0_i32_0 : i32, i32
  }
  func.func @transform_3(%arg0: i32) -> (i32, i32) {
    %c0_i32 = arith.constant 0 : i32
    %c0_i32_0 = arith.constant 0 : i32
    %c0_i32_1 = arith.constant 0 : i32
    return %c0_i32, %c0_i32_0 : i32, i32
  }
  func.func @transform_4(%arg0: i32) -> (i32, i32) {
    %c0_i32 = arith.constant 0 : i32
    %c0_i32_0 = arith.constant 0 : i32
    %c0_i32_1 = arith.constant 0 : i32
    return %c0_i32, %c0_i32_0 : i32, i32
  }
  func.func @transform_5(%arg0: i32) -> (i32, i32) {
    %c0_i32 = arith.constant 0 : i32
    %c0_i32_0 = arith.constant 0 : i32
    %c0_i32_1 = arith.constant 0 : i32
    return %c0_i32, %c0_i32_0 : i32, i32
  }
}

module attributes {stable_mosaic.version = 11 : i64} {
  func.func @_conv_bn_relu_kernel(%arg0: i32, %arg1: memref<200x450xf32, #tpu.memory_space<vmem>>, %arg2: memref<16x200xf32, #tpu.memory_space<vmem>>, %arg3: memref<16x1xf32, #tpu.memory_space<vmem>>, %arg4: memref<16x1xf32, #tpu.memory_space<vmem>>, %arg5: memref<16x1xf32, #tpu.memory_space<vmem>>, %arg6: memref<16x450xf32, #tpu.memory_space<vmem>>) attributes {dimension_semantics = [#tpu.dimension_semantics<arbitrary>], iteration_bounds = array<i64: 1>, scalar_prefetch = 0 : i64, scratch_operands = 0 : i64, tpu.core_type = #tpu.core_type<tc>, window_params = [{pipeline_mode = #tpu.pipeline_mode<synchronous>, transform_indices = @transform_0, window_bounds = array<i64: 200, 450>}, {pipeline_mode = #tpu.pipeline_mode<synchronous>, transform_indices = @transform_1, window_bounds = array<i64: 16, 200>}, {pipeline_mode = #tpu.pipeline_mode<synchronous>, transform_indices = @transform_2, window_bounds = array<i64: 16, 1>}, {pipeline_mode = #tpu.pipeline_mode<synchronous>, transform_indices = @transform_3, window_bounds = array<i64: 16, 1>}, {pipeline_mode = #tpu.pipeline_mode<synchronous>, transform_indices = @transform_4, window_bounds = array<i64: 16, 1>}, {pipeline_mode = #tpu.pipeline_mode<synchronous>, transform_indices = @transform_5, window_bounds = array<i64: 16, 450>}]} {
    %c0 = arith.constant 0 : index
    %c0_0 = arith.constant 0 : index
    %0 = vector.load %arg2[%c0, %c0_0] : memref<16x200xf32, #tpu.memory_space<vmem>>, vector<16x200xf32>
    %c0_1 = arith.constant 0 : index
    %c0_2 = arith.constant 0 : index
    %1 = vector.load %arg1[%c0_1, %c0_2] : memref<200x450xf32, #tpu.memory_space<vmem>>, vector<200x450xf32>
    %cst = arith.constant dense<0.000000e+00> : vector<16x450xf32>
    %2 = tpu.matmul %0, %1, %cst {dimension_numbers = #tpu.dot_dimension_numbers<[1], [0], [0], [1], [0, 0, 1, 1], [], []>} : vector<16x200xf32>, vector<200x450xf32>, vector<16x450xf32> -> vector<16x450xf32>
    %c0_3 = arith.constant 0 : index
    %c0_4 = arith.constant 0 : index
    %3 = vector.load %arg3[%c0_3, %c0_4] : memref<16x1xf32, #tpu.memory_space<vmem>>, vector<16x1xf32>
    %4 = vector.broadcast %3 : vector<16x1xf32> to vector<16x450xf32>
    %5 = arith.addf %2, %4 : vector<16x450xf32>
    %cst_5 = arith.constant dense<0.000000e+00> : vector<16xf32>
    %6 = vector.multi_reduction <add>, %5, %cst_5 [1] : vector<16x450xf32> to vector<16xf32>
    %7 = vector.shape_cast %6 : vector<16xf32> to vector<16x1xf32>
    %8 = arith.mulf %5, %5 : vector<16x450xf32>
    %cst_6 = arith.constant dense<0.000000e+00> : vector<16xf32>
    %9 = vector.multi_reduction <add>, %8, %cst_6 [1] : vector<16x450xf32> to vector<16xf32>
    %10 = vector.shape_cast %9 : vector<16xf32> to vector<16x1xf32>
    %cst_7 = arith.constant 0.00222222228 : f32
    %11 = vector.broadcast %cst_7 : f32 to vector<16x1xf32>
    %12 = arith.mulf %7, %11 : vector<16x1xf32>
    %cst_8 = arith.constant 0.00222222228 : f32
    %13 = vector.broadcast %cst_8 : f32 to vector<16x1xf32>
    %14 = arith.mulf %10, %13 : vector<16x1xf32>
    %15 = arith.mulf %12, %12 : vector<16x1xf32>
    %16 = arith.subf %14, %15 : vector<16x1xf32>
    %cst_9 = arith.constant 0.000000e+00 : f32
    %17 = vector.broadcast %cst_9 : f32 to vector<16x1xf32>
    %18 = arith.maximumf %16, %17 : vector<16x1xf32>
    %cst_10 = arith.constant 9.99999974E-6 : f32
    %19 = vector.broadcast %cst_10 : f32 to vector<16x1xf32>
    %20 = arith.addf %18, %19 : vector<16x1xf32>
    %21 = math.rsqrt %20 : vector<16x1xf32>
    %c0_11 = arith.constant 0 : index
    %c0_12 = arith.constant 0 : index
    %22 = vector.load %arg4[%c0_11, %c0_12] : memref<16x1xf32, #tpu.memory_space<vmem>>, vector<16x1xf32>
    %23 = arith.mulf %21, %22 : vector<16x1xf32>
    %c0_13 = arith.constant 0 : index
    %c0_14 = arith.constant 0 : index
    %24 = vector.load %arg5[%c0_13, %c0_14] : memref<16x1xf32, #tpu.memory_space<vmem>>, vector<16x1xf32>
    %25 = arith.mulf %12, %23 : vector<16x1xf32>
    %26 = arith.subf %24, %25 : vector<16x1xf32>
    %27 = vector.broadcast %23 : vector<16x1xf32> to vector<16x450xf32>
    %28 = arith.mulf %5, %27 : vector<16x450xf32>
    %29 = vector.broadcast %26 : vector<16x1xf32> to vector<16x450xf32>
    %30 = arith.addf %28, %29 : vector<16x450xf32>
    %cst_15 = arith.constant 0.000000e+00 : f32
    %31 = vector.broadcast %cst_15 : f32 to vector<16x450xf32>
    %32 = arith.maximumf %30, %31 : vector<16x450xf32>
    %c0_16 = arith.constant 0 : index
    %c0_17 = arith.constant 0 : index
    %33 = vector.load %arg6[%c0_16, %c0_17] : memref<16x450xf32, #tpu.memory_space<vmem>>, vector<16x450xf32>
    tpu.vector_store %arg6[%c0_16, %c0_17], %32 {strides = array<i32>} : memref<16x450xf32, #tpu.memory_space<vmem>>, vector<16x450xf32>,
    return
  }
  func.func @transform_0(%arg0: i32) -> (i32, i32) {
    %c0_i32 = arith.constant 0 : i32
    %c0_i32_0 = arith.constant 0 : i32
    %c0_i32_1 = arith.constant 0 : i32
    return %c0_i32, %c0_i32_0 : i32, i32
  }
  func.func @transform_1(%arg0: i32) -> (i32, i32) {
    %c0_i32 = arith.constant 0 : i32
    %c0_i32_0 = arith.constant 0 : i32
    %c0_i32_1 = arith.constant 0 : i32
    return %c0_i32, %c0_i32_0 : i32, i32
  }
  func.func @transform_2(%arg0: i32) -> (i32, i32) {
    %c0_i32 = arith.constant 0 : i32
    %c0_i32_0 = arith.constant 0 : i32
    %c0_i32_1 = arith.constant 0 : i32
    return %c0_i32, %c0_i32_0 : i32, i32
  }
  func.func @transform_3(%arg0: i32) -> (i32, i32) {
    %c0_i32 = arith.constant 0 : i32
    %c0_i32_0 = arith.constant 0 : i32
    %c0_i32_1 = arith.constant 0 : i32
    return %c0_i32, %c0_i32_0 : i32, i32
  }
  func.func @transform_4(%arg0: i32) -> (i32, i32) {
    %c0_i32 = arith.constant 0 : i32
    %c0_i32_0 = arith.constant 0 : i32
    %c0_i32_1 = arith.constant 0 : i32
    return %c0_i32, %c0_i32_0 : i32, i32
  }
  func.func @transform_5(%arg0: i32) -> (i32, i32) {
    %c0_i32 = arith.constant 0 : i32
    %c0_i32_0 = arith.constant 0 : i32
    %c0_i32_1 = arith.constant 0 : i32
    return %c0_i32, %c0_i32_0 : i32, i32
  }
}

module attributes {stable_mosaic.version = 11 : i64} {
  func.func @_conv_bn_relu_kernel(%arg0: i32, %arg1: memref<400x98xf32, #tpu.memory_space<vmem>>, %arg2: memref<32x400xf32, #tpu.memory_space<vmem>>, %arg3: memref<32x1xf32, #tpu.memory_space<vmem>>, %arg4: memref<32x1xf32, #tpu.memory_space<vmem>>, %arg5: memref<32x1xf32, #tpu.memory_space<vmem>>, %arg6: memref<32x98xf32, #tpu.memory_space<vmem>>) attributes {dimension_semantics = [#tpu.dimension_semantics<arbitrary>], iteration_bounds = array<i64: 1>, scalar_prefetch = 0 : i64, scratch_operands = 0 : i64, tpu.core_type = #tpu.core_type<tc>, window_params = [{pipeline_mode = #tpu.pipeline_mode<synchronous>, transform_indices = @transform_0, window_bounds = array<i64: 400, 98>}, {pipeline_mode = #tpu.pipeline_mode<synchronous>, transform_indices = @transform_1, window_bounds = array<i64: 32, 400>}, {pipeline_mode = #tpu.pipeline_mode<synchronous>, transform_indices = @transform_2, window_bounds = array<i64: 32, 1>}, {pipeline_mode = #tpu.pipeline_mode<synchronous>, transform_indices = @transform_3, window_bounds = array<i64: 32, 1>}, {pipeline_mode = #tpu.pipeline_mode<synchronous>, transform_indices = @transform_4, window_bounds = array<i64: 32, 1>}, {pipeline_mode = #tpu.pipeline_mode<synchronous>, transform_indices = @transform_5, window_bounds = array<i64: 32, 98>}]} {
    %c0 = arith.constant 0 : index
    %c0_0 = arith.constant 0 : index
    %0 = vector.load %arg2[%c0, %c0_0] : memref<32x400xf32, #tpu.memory_space<vmem>>, vector<32x400xf32>
    %c0_1 = arith.constant 0 : index
    %c0_2 = arith.constant 0 : index
    %1 = vector.load %arg1[%c0_1, %c0_2] : memref<400x98xf32, #tpu.memory_space<vmem>>, vector<400x98xf32>
    %cst = arith.constant dense<0.000000e+00> : vector<32x98xf32>
    %2 = tpu.matmul %0, %1, %cst {dimension_numbers = #tpu.dot_dimension_numbers<[1], [0], [0], [1], [0, 0, 1, 1], [], []>} : vector<32x400xf32>, vector<400x98xf32>, vector<32x98xf32> -> vector<32x98xf32>
    %c0_3 = arith.constant 0 : index
    %c0_4 = arith.constant 0 : index
    %3 = vector.load %arg3[%c0_3, %c0_4] : memref<32x1xf32, #tpu.memory_space<vmem>>, vector<32x1xf32>
    %4 = vector.broadcast %3 : vector<32x1xf32> to vector<32x98xf32>
    %5 = arith.addf %2, %4 : vector<32x98xf32>
    %cst_5 = arith.constant dense<0.000000e+00> : vector<32xf32>
    %6 = vector.multi_reduction <add>, %5, %cst_5 [1] : vector<32x98xf32> to vector<32xf32>
    %7 = vector.shape_cast %6 : vector<32xf32> to vector<32x1xf32>
    %8 = arith.mulf %5, %5 : vector<32x98xf32>
    %cst_6 = arith.constant dense<0.000000e+00> : vector<32xf32>
    %9 = vector.multi_reduction <add>, %8, %cst_6 [1] : vector<32x98xf32> to vector<32xf32>
    %10 = vector.shape_cast %9 : vector<32xf32> to vector<32x1xf32>
    %cst_7 = arith.constant 0.0102040814 : f32
    %11 = vector.broadcast %cst_7 : f32 to vector<32x1xf32>
    %12 = arith.mulf %7, %11 : vector<32x1xf32>
    %cst_8 = arith.constant 0.0102040814 : f32
    %13 = vector.broadcast %cst_8 : f32 to vector<32x1xf32>
    %14 = arith.mulf %10, %13 : vector<32x1xf32>
    %15 = arith.mulf %12, %12 : vector<32x1xf32>
    %16 = arith.subf %14, %15 : vector<32x1xf32>
    %cst_9 = arith.constant 0.000000e+00 : f32
    %17 = vector.broadcast %cst_9 : f32 to vector<32x1xf32>
    %18 = arith.maximumf %16, %17 : vector<32x1xf32>
    %cst_10 = arith.constant 9.99999974E-6 : f32
    %19 = vector.broadcast %cst_10 : f32 to vector<32x1xf32>
    %20 = arith.addf %18, %19 : vector<32x1xf32>
    %21 = math.rsqrt %20 : vector<32x1xf32>
    %c0_11 = arith.constant 0 : index
    %c0_12 = arith.constant 0 : index
    %22 = vector.load %arg4[%c0_11, %c0_12] : memref<32x1xf32, #tpu.memory_space<vmem>>, vector<32x1xf32>
    %23 = arith.mulf %21, %22 : vector<32x1xf32>
    %c0_13 = arith.constant 0 : index
    %c0_14 = arith.constant 0 : index
    %24 = vector.load %arg5[%c0_13, %c0_14] : memref<32x1xf32, #tpu.memory_space<vmem>>, vector<32x1xf32>
    %25 = arith.mulf %12, %23 : vector<32x1xf32>
    %26 = arith.subf %24, %25 : vector<32x1xf32>
    %27 = vector.broadcast %23 : vector<32x1xf32> to vector<32x98xf32>
    %28 = arith.mulf %5, %27 : vector<32x98xf32>
    %29 = vector.broadcast %26 : vector<32x1xf32> to vector<32x98xf32>
    %30 = arith.addf %28, %29 : vector<32x98xf32>
    %cst_15 = arith.constant 0.000000e+00 : f32
    %31 = vector.broadcast %cst_15 : f32 to vector<32x98xf32>
    %32 = arith.maximumf %30, %31 : vector<32x98xf32>
    %c0_16 = arith.constant 0 : index
    %c0_17 = arith.constant 0 : index
    %33 = vector.load %arg6[%c0_16, %c0_17] : memref<32x98xf32, #tpu.memory_space<vmem>>, vector<32x98xf32>
    tpu.vector_store %arg6[%c0_16, %c0_17], %32 {strides = array<i32>} : memref<32x98xf32, #tpu.memory_space<vmem>>, vector<32x98xf32>,
    return
  }
  func.func @transform_0(%arg0: i32) -> (i32, i32) {
    %c0_i32 = arith.constant 0 : i32
    %c0_i32_0 = arith.constant 0 : i32
    %c0_i32_1 = arith.constant 0 : i32
    return %c0_i32, %c0_i32_0 : i32, i32
  }
  func.func @transform_1(%arg0: i32) -> (i32, i32) {
    %c0_i32 = arith.constant 0 : i32
    %c0_i32_0 = arith.constant 0 : i32
    %c0_i32_1 = arith.constant 0 : i32
    return %c0_i32, %c0_i32_0 : i32, i32
  }
  func.func @transform_2(%arg0: i32) -> (i32, i32) {
    %c0_i32 = arith.constant 0 : i32
    %c0_i32_0 = arith.constant 0 : i32
    %c0_i32_1 = arith.constant 0 : i32
    return %c0_i32, %c0_i32_0 : i32, i32
  }
  func.func @transform_3(%arg0: i32) -> (i32, i32) {
    %c0_i32 = arith.constant 0 : i32
    %c0_i32_0 = arith.constant 0 : i32
    %c0_i32_1 = arith.constant 0 : i32
    return %c0_i32, %c0_i32_0 : i32, i32
  }
  func.func @transform_4(%arg0: i32) -> (i32, i32) {
    %c0_i32 = arith.constant 0 : i32
    %c0_i32_0 = arith.constant 0 : i32
    %c0_i32_1 = arith.constant 0 : i32
    return %c0_i32, %c0_i32_0 : i32, i32
  }
  func.func @transform_5(%arg0: i32) -> (i32, i32) {
    %c0_i32 = arith.constant 0 : i32
    %c0_i32_0 = arith.constant 0 : i32
    %c0_i32_1 = arith.constant 0 : i32
    return %c0_i32, %c0_i32_0 : i32, i32
  }
}

module attributes {stable_mosaic.version = 11 : i64} {
  func.func @_conv_bn_relu_kernel(%arg0: i32, %arg1: memref<800x18xf32, #tpu.memory_space<vmem>>, %arg2: memref<64x800xf32, #tpu.memory_space<vmem>>, %arg3: memref<64x1xf32, #tpu.memory_space<vmem>>, %arg4: memref<64x1xf32, #tpu.memory_space<vmem>>, %arg5: memref<64x1xf32, #tpu.memory_space<vmem>>, %arg6: memref<64x18xf32, #tpu.memory_space<vmem>>) attributes {dimension_semantics = [#tpu.dimension_semantics<arbitrary>], iteration_bounds = array<i64: 1>, scalar_prefetch = 0 : i64, scratch_operands = 0 : i64, tpu.core_type = #tpu.core_type<tc>, window_params = [{pipeline_mode = #tpu.pipeline_mode<synchronous>, transform_indices = @transform_0, window_bounds = array<i64: 800, 18>}, {pipeline_mode = #tpu.pipeline_mode<synchronous>, transform_indices = @transform_1, window_bounds = array<i64: 64, 800>}, {pipeline_mode = #tpu.pipeline_mode<synchronous>, transform_indices = @transform_2, window_bounds = array<i64: 64, 1>}, {pipeline_mode = #tpu.pipeline_mode<synchronous>, transform_indices = @transform_3, window_bounds = array<i64: 64, 1>}, {pipeline_mode = #tpu.pipeline_mode<synchronous>, transform_indices = @transform_4, window_bounds = array<i64: 64, 1>}, {pipeline_mode = #tpu.pipeline_mode<synchronous>, transform_indices = @transform_5, window_bounds = array<i64: 64, 18>}]} {
    %c0 = arith.constant 0 : index
    %c0_0 = arith.constant 0 : index
    %0 = vector.load %arg2[%c0, %c0_0] : memref<64x800xf32, #tpu.memory_space<vmem>>, vector<64x800xf32>
    %c0_1 = arith.constant 0 : index
    %c0_2 = arith.constant 0 : index
    %1 = vector.load %arg1[%c0_1, %c0_2] : memref<800x18xf32, #tpu.memory_space<vmem>>, vector<800x18xf32>
    %cst = arith.constant dense<0.000000e+00> : vector<64x18xf32>
    %2 = tpu.matmul %0, %1, %cst {dimension_numbers = #tpu.dot_dimension_numbers<[1], [0], [0], [1], [0, 0, 1, 1], [], []>} : vector<64x800xf32>, vector<800x18xf32>, vector<64x18xf32> -> vector<64x18xf32>
    %c0_3 = arith.constant 0 : index
    %c0_4 = arith.constant 0 : index
    %3 = vector.load %arg3[%c0_3, %c0_4] : memref<64x1xf32, #tpu.memory_space<vmem>>, vector<64x1xf32>
    %4 = vector.broadcast %3 : vector<64x1xf32> to vector<64x18xf32>
    %5 = arith.addf %2, %4 : vector<64x18xf32>
    %cst_5 = arith.constant dense<0.000000e+00> : vector<64xf32>
    %6 = vector.multi_reduction <add>, %5, %cst_5 [1] : vector<64x18xf32> to vector<64xf32>
    %7 = vector.shape_cast %6 : vector<64xf32> to vector<64x1xf32>
    %8 = arith.mulf %5, %5 : vector<64x18xf32>
    %cst_6 = arith.constant dense<0.000000e+00> : vector<64xf32>
    %9 = vector.multi_reduction <add>, %8, %cst_6 [1] : vector<64x18xf32> to vector<64xf32>
    %10 = vector.shape_cast %9 : vector<64xf32> to vector<64x1xf32>
    %cst_7 = arith.constant 0.055555556 : f32
    %11 = vector.broadcast %cst_7 : f32 to vector<64x1xf32>
    %12 = arith.mulf %7, %11 : vector<64x1xf32>
    %cst_8 = arith.constant 0.055555556 : f32
    %13 = vector.broadcast %cst_8 : f32 to vector<64x1xf32>
    %14 = arith.mulf %10, %13 : vector<64x1xf32>
    %15 = arith.mulf %12, %12 : vector<64x1xf32>
    %16 = arith.subf %14, %15 : vector<64x1xf32>
    %cst_9 = arith.constant 0.000000e+00 : f32
    %17 = vector.broadcast %cst_9 : f32 to vector<64x1xf32>
    %18 = arith.maximumf %16, %17 : vector<64x1xf32>
    %cst_10 = arith.constant 9.99999974E-6 : f32
    %19 = vector.broadcast %cst_10 : f32 to vector<64x1xf32>
    %20 = arith.addf %18, %19 : vector<64x1xf32>
    %21 = math.rsqrt %20 : vector<64x1xf32>
    %c0_11 = arith.constant 0 : index
    %c0_12 = arith.constant 0 : index
    %22 = vector.load %arg4[%c0_11, %c0_12] : memref<64x1xf32, #tpu.memory_space<vmem>>, vector<64x1xf32>
    %23 = arith.mulf %21, %22 : vector<64x1xf32>
    %c0_13 = arith.constant 0 : index
    %c0_14 = arith.constant 0 : index
    %24 = vector.load %arg5[%c0_13, %c0_14] : memref<64x1xf32, #tpu.memory_space<vmem>>, vector<64x1xf32>
    %25 = arith.mulf %12, %23 : vector<64x1xf32>
    %26 = arith.subf %24, %25 : vector<64x1xf32>
    %27 = vector.broadcast %23 : vector<64x1xf32> to vector<64x18xf32>
    %28 = arith.mulf %5, %27 : vector<64x18xf32>
    %29 = vector.broadcast %26 : vector<64x1xf32> to vector<64x18xf32>
    %30 = arith.addf %28, %29 : vector<64x18xf32>
    %cst_15 = arith.constant 0.000000e+00 : f32
    %31 = vector.broadcast %cst_15 : f32 to vector<64x18xf32>
    %32 = arith.maximumf %30, %31 : vector<64x18xf32>
    %c0_16 = arith.constant 0 : index
    %c0_17 = arith.constant 0 : index
    %33 = vector.load %arg6[%c0_16, %c0_17] : memref<64x18xf32, #tpu.memory_space<vmem>>, vector<64x18xf32>
    tpu.vector_store %arg6[%c0_16, %c0_17], %32 {strides = array<i32>} : memref<64x18xf32, #tpu.memory_space<vmem>>, vector<64x18xf32>,
    return
  }
  func.func @transform_0(%arg0: i32) -> (i32, i32) {
    %c0_i32 = arith.constant 0 : i32
    %c0_i32_0 = arith.constant 0 : i32
    %c0_i32_1 = arith.constant 0 : i32
    return %c0_i32, %c0_i32_0 : i32, i32
  }
  func.func @transform_1(%arg0: i32) -> (i32, i32) {
    %c0_i32 = arith.constant 0 : i32
    %c0_i32_0 = arith.constant 0 : i32
    %c0_i32_1 = arith.constant 0 : i32
    return %c0_i32, %c0_i32_0 : i32, i32
  }
  func.func @transform_2(%arg0: i32) -> (i32, i32) {
    %c0_i32 = arith.constant 0 : i32
    %c0_i32_0 = arith.constant 0 : i32
    %c0_i32_1 = arith.constant 0 : i32
    return %c0_i32, %c0_i32_0 : i32, i32
  }
  func.func @transform_3(%arg0: i32) -> (i32, i32) {
    %c0_i32 = arith.constant 0 : i32
    %c0_i32_0 = arith.constant 0 : i32
    %c0_i32_1 = arith.constant 0 : i32
    return %c0_i32, %c0_i32_0 : i32, i32
  }
  func.func @transform_4(%arg0: i32) -> (i32, i32) {
    %c0_i32 = arith.constant 0 : i32
    %c0_i32_0 = arith.constant 0 : i32
    %c0_i32_1 = arith.constant 0 : i32
    return %c0_i32, %c0_i32_0 : i32, i32
  }
  func.func @transform_5(%arg0: i32) -> (i32, i32) {
    %c0_i32 = arith.constant 0 : i32
    %c0_i32_0 = arith.constant 0 : i32
    %c0_i32_1 = arith.constant 0 : i32
    return %c0_i32, %c0_i32_0 : i32, i32
  }
}

module attributes {stable_mosaic.version = 11 : i64} {
  func.func @_conv_sigmoid_kernel(%arg0: i32, %arg1: memref<1600x2xf32, #tpu.memory_space<vmem>>, %arg2: memref<1x1600xf32, #tpu.memory_space<vmem>>, %arg3: memref<1x1xf32, #tpu.memory_space<vmem>>, %arg4: memref<1x2xf32, #tpu.memory_space<vmem>>) attributes {dimension_semantics = [#tpu.dimension_semantics<arbitrary>], iteration_bounds = array<i64: 1>, scalar_prefetch = 0 : i64, scratch_operands = 0 : i64, tpu.core_type = #tpu.core_type<tc>, window_params = [{pipeline_mode = #tpu.pipeline_mode<synchronous>, transform_indices = @transform_0, window_bounds = array<i64: 1600, 2>}, {pipeline_mode = #tpu.pipeline_mode<synchronous>, transform_indices = @transform_1, window_bounds = array<i64: 1, 1600>}, {pipeline_mode = #tpu.pipeline_mode<synchronous>, transform_indices = @transform_2, window_bounds = array<i64: 1, 1>}, {pipeline_mode = #tpu.pipeline_mode<synchronous>, transform_indices = @transform_3, window_bounds = array<i64: 1, 2>}]} {
    %c0 = arith.constant 0 : index
    %c0_0 = arith.constant 0 : index
    %0 = vector.load %arg2[%c0, %c0_0] : memref<1x1600xf32, #tpu.memory_space<vmem>>, vector<1x1600xf32>
    %c0_1 = arith.constant 0 : index
    %c0_2 = arith.constant 0 : index
    %1 = vector.load %arg1[%c0_1, %c0_2] : memref<1600x2xf32, #tpu.memory_space<vmem>>, vector<1600x2xf32>
    %cst = arith.constant dense<0.000000e+00> : vector<1x2xf32>
    %2 = tpu.matmul %0, %1, %cst {dimension_numbers = #tpu.dot_dimension_numbers<[1], [0], [0], [1], [0, 0, 1, 1], [], []>} : vector<1x1600xf32>, vector<1600x2xf32>, vector<1x2xf32> -> vector<1x2xf32>
    %c0_3 = arith.constant 0 : index
    %c0_4 = arith.constant 0 : index
    %3 = vector.load %arg3[%c0_3, %c0_4] : memref<1x1xf32, #tpu.memory_space<vmem>>, vector<1x1xf32>
    %4 = vector.broadcast %3 : vector<1x1xf32> to vector<1x2xf32>
    %5 = arith.addf %2, %4 : vector<1x2xf32>
    %6 = math.absf %5 : vector<1x2xf32>
    %cst_5 = arith.constant 0.000000e+00 : f32
    %7 = vector.broadcast %cst_5 : f32 to vector<1x2xf32>
    %8 = arith.subf %7, %6 : vector<1x2xf32>
    %9 = math.exp %8 : vector<1x2xf32>
    %cst_6 = arith.constant 1.000000e+00 : f32
    %10 = vector.broadcast %cst_6 : f32 to vector<1x2xf32>
    %11 = arith.addf %10, %9 : vector<1x2xf32>
    %12 = tpu.reciprocal %11 {approx = true} : vector<1x2xf32> -> vector<1x2xf32>
    %cst_7 = arith.constant 0.000000e+00 : f32
    %13 = vector.broadcast %cst_7 : f32 to vector<1x2xf32>
    %14 = arith.cmpf oge, %5, %13 : vector<1x2xf32>
    %15 = arith.mulf %9, %12 : vector<1x2xf32>
    %16 = arith.select %14, %12, %15 : vector<1x2xi1>, vector<1x2xf32>
    %c0_8 = arith.constant 0 : index
    %c0_9 = arith.constant 0 : index
    %17 = vector.load %arg4[%c0_8, %c0_9] : memref<1x2xf32, #tpu.memory_space<vmem>>, vector<1x2xf32>
    tpu.vector_store %arg4[%c0_8, %c0_9], %16 {strides = array<i32>} : memref<1x2xf32, #tpu.memory_space<vmem>>, vector<1x2xf32>,
    return
  }
  func.func @transform_0(%arg0: i32) -> (i32, i32) {
    %c0_i32 = arith.constant 0 : i32
    %c0_i32_0 = arith.constant 0 : i32
    %c0_i32_1 = arith.constant 0 : i32
    return %c0_i32, %c0_i32_0 : i32, i32
  }
  func.func @transform_1(%arg0: i32) -> (i32, i32) {
    %c0_i32 = arith.constant 0 : i32
    %c0_i32_0 = arith.constant 0 : i32
    %c0_i32_1 = arith.constant 0 : i32
    return %c0_i32, %c0_i32_0 : i32, i32
  }
  func.func @transform_2(%arg0: i32) -> (i32, i32) {
    %c0_i32 = arith.constant 0 : i32
    %c0_i32_0 = arith.constant 0 : i32
    %c0_i32_1 = arith.constant 0 : i32
    return %c0_i32, %c0_i32_0 : i32, i32
  }
  func.func @transform_3(%arg0: i32) -> (i32, i32) {
    %c0_i32 = arith.constant 0 : i32
    %c0_i32_0 = arith.constant 0 : i32
    %c0_i32_1 = arith.constant 0 : i32
    return %c0_i32, %c0_i32_0 : i32, i32
  }
}

</mosaic_0001>

<llo_original>
// kernel: critic_forward.5
$region0: #{critic_forward.5}
  #allocation0 [shape = 'u32[]', space=smem, size = 0x4, offset = 0x4, fixed_abs, tag = 'smem constant byte address 0x4 - core index']
  #allocation1 [shape = 'u32[72,128]{1,0:T(1,128)}', space=vmem, size = 0x9000, scoped, tag = 'internal scratch']
  %s0 = inlined_call_operand.vmem [shape: f32[75,1922], index: 0, kind: input, shape index: {}]
  %s1 = inlined_call_operand.vmem [shape: f32[8,75], index: 1, kind: input, shape index: {}]
  %s2 = inlined_call_operand.vmem [shape: f32[8,1], index: 2, kind: input, shape index: {}]
  %s3 = inlined_call_operand.vmem [shape: f32[8,1], index: 3, kind: input, shape index: {}]
  %s4 = inlined_call_operand.vmem [shape: f32[8,1], index: 4, kind: input, shape index: {}]
  %s5 = inlined_call_operand.vmem [shape: f32[8,1922], index: 5, kind: output, shape index: {}]
  %s6 = sld [smem:[#allocation0]]
  $region30: #{critic_forward.5} parent=0
    _
  %s8 = ssub.s32 1, %s6
  %s9 = scalar_select 0, %s8, %s6
  // Predicated region
  $region2: #{critic_forward.5} parent=0 // pred_check
    _
  $region3: #{critic_forward.5} parent=0 // pred_check_branch
    %11 = sbr.rel (0) target = $region5
  $region4: #{critic_forward.5} parent=0 // pred_region
    _
  $region5: #{critic_forward.5} parent=0 // pred_fallthru
    _
  // Predicated region
  $region6: #{critic_forward.5} parent=0 // pred_check
    _
  $region7: #{critic_forward.5} parent=0 // pred_check_branch
    %13 = sbr.rel (0) target = $region9
  $region8: #{critic_forward.5} parent=0 // pred_region
    _
  $region9: #{critic_forward.5} parent=0 // pred_fallthru
    _
  // Predicated region
  $region10: #{critic_forward.5} parent=0 // pred_check
    _
  $region11: #{critic_forward.5} parent=0 // pred_check_branch
    %15 = sbr.rel (0) target = $region13
  $region12: #{critic_forward.5} parent=0 // pred_region
    _
  $region13: #{critic_forward.5} parent=0 // pred_fallthru
    _
  // Predicated region
  $region14: #{critic_forward.5} parent=0 // pred_check
    _
  $region15: #{critic_forward.5} parent=0 // pred_check_branch
    %17 = sbr.rel (0) target = $region17
  $region16: #{critic_forward.5} parent=0 // pred_region
    _
  $region17: #{critic_forward.5} parent=0 // pred_fallthru
    _
  // Predicated region
  $region18: #{critic_forward.5} parent=0 // pred_check
    _
  $region19: #{critic_forward.5} parent=0 // pred_check_branch
    %19 = sbr.rel (0) target = $region21
  $region20: #{critic_forward.5} parent=0 // pred_region
    _
  $region21: #{critic_forward.5} parent=0 // pred_fallthru
    _
  %v20 = vld [vmem:[%s1] sm:$0xff]
  %v21 = vld [vmem:[%s0] sm:$0xff]
  %v22 = vld [vmem:[%s0 + $0x8] sm:$0xff]
  %v23 = vld [vmem:[%s0 + $0x10] sm:$0xff]
  %v24 = vld [vmem:[%s0 + $0x18] sm:$0xff]
  %v25 = vld [vmem:[%s0 + $0x20] sm:$0xff]
  %v26 = vld [vmem:[%s0 + $0x28] sm:$0xff]
  %v27 = vld [vmem:[%s0 + $0x30] sm:$0xff]
  %v28 = vld [vmem:[%s0 + $0x38] sm:$0xff]
  %v29 = vld [vmem:[%s0 + $0x40] sm:$0xff]
  %v30 = vld [vmem:[%s0 + $0x48] sm:$0xff]
  %v31 = vld [vmem:[%s0 + $0x50] sm:$0xff]
  %v32 = vld [vmem:[%s0 + $0x58] sm:$0xff]
  %v33 = vld [vmem:[%s0 + $0x60] sm:$0xff]
  %v34 = vld [vmem:[%s0 + $0x68] sm:$0xff]
  %v35 = vld [vmem:[%s0 + $0x70] sm:$0xff]
  %v36 = vld [vmem:[%s0 + $0x78] sm:$0xff]
  %v37 = vld [vmem:[%s0 + $0x80] sm:$0xff]
  %v38 = vld [vmem:[%s0 + $0x88] sm:$0xff]
  %v39 = vld [vmem:[%s0 + $0x90] sm:$0xff]
  %v40 = vld [vmem:[%s0 + $0x98] sm:$0xff]
  %v41 = vld [vmem:[%s0 + $0xa0] sm:$0xff]
  %v42 = vld [vmem:[%s0 + $0xa8] sm:$0xff]
  %v43 = vld [vmem:[%s0 + $0xb0] sm:$0xff]
  %v44 = vld [vmem:[%s0 + $0xb8] sm:$0xff]
  %v45 = vld [vmem:[%s0 + $0xc0] sm:$0xff]
  %v46 = vld [vmem:[%s0 + $0xc8] sm:$0xff]
  %v47 = vld [vmem:[%s0 + $0xd0] sm:$0xff]
  %v48 = vld [vmem:[%s0 + $0xd8] sm:$0xff]
  %v49 = vld [vmem:[%s0 + $0xe0] sm:$0xff]
  %v50 = vld [vmem:[%s0 + $0xe8] sm:$0xff]
  %v51 = vld [vmem:[%s0 + $0xf0] sm:$0xff]
  %v52 = vld [vmem:[%s0 + $0xf8] sm:$0xff]
  %v53 = vld [vmem:[%s0 + $0x100] sm:$0xff]
  %v54 = vld [vmem:[%s0 + $0x108] sm:$0xff]
  %v55 = vld [vmem:[%s0 + $0x110] sm:$0xff]
  %v56 = vld [vmem:[%s0 + $0x118] sm:$0xff]
  %v57 = vld [vmem:[%s0 + $0x120] sm:$0xff]
  %v58 = vld [vmem:[%s0 + $0x128] sm:$0xff]
  %v59 = vld [vmem:[%s0 + $0x130] sm:$0xff]
  %v60 = vld [vmem:[%s0 + $0x138] sm:$0xff]
  %v61 = vld [vmem:[%s0 + $0x140] sm:$0xff]
  %v62 = vld [vmem:[%s0 + $0x148] sm:$0xff]
  %v63 = vld [vmem:[%s0 + $0x150] sm:$0xff]
  %v64 = vld [vmem:[%s0 + $0x158] sm:$0xff]
  %v65 = vld [vmem:[%s0 + $0x160] sm:$0xff]
  %v66 = vld [vmem:[%s0 + $0x168] sm:$0xff]
  %v67 = vld [vmem:[%s0 + $0x170] sm:$0xff]
  %v68 = vld [vmem:[%s0 + $0x178] sm:$0xff]
  %v69 = vld [vmem:[%s0 + $0x180] sm:$0xff]
  %v70 = vld [vmem:[%s0 + $0x188] sm:$0xff]
  %v71 = vld [vmem:[%s0 + $0x190] sm:$0xff]
  %v72 = vld [vmem:[%s0 + $0x198] sm:$0xff]
  %v73 = vld [vmem:[%s0 + $0x1a0] sm:$0xff]
  %v74 = vld [vmem:[%s0 + $0x1a8] sm:$0xff]
  %v75 = vld [vmem:[%s0 + $0x1b0] sm:$0xff]
  %v76 = vld [vmem:[%s0 + $0x1b8] sm:$0xff]
  %v77 = vld [vmem:[%s0 + $0x1c0] sm:$0xff]
  %v78 = vld [vmem:[%s0 + $0x1c8] sm:$0xff]
  %v79 = vld [vmem:[%s0 + $0x1d0] sm:$0xff]
  %v80 = vld [vmem:[%s0 + $0x1d8] sm:$0xff]
  %v81 = vld [vmem:[%s0 + $0x1e0] sm:$0xff]
  %v82 = vld [vmem:[%s0 + $0x1e8] sm:$0xff]
  %v83 = vld [vmem:[%s0 + $0x1f0] sm:$0xff]
  %v84 = vld [vmem:[%s0 + $0x1f8] sm:$0xff]
  %v85 = vld [vmem:[%s0 + $0x200] sm:$0xff]
  %v86 = vld [vmem:[%s0 + $0x208] sm:$0xff]
  %v87 = vld [vmem:[%s0 + $0x210] sm:$0xff]
  %v88 = vld [vmem:[%s0 + $0x218] sm:$0xff]
  %v89 = vld [vmem:[%s0 + $0x220] sm:$0xff]
  %v90 = vld [vmem:[%s0 + $0x228] sm:$0xff]
  %v91 = vld [vmem:[%s0 + $0x230] sm:$0xff]
  %v92 = vld [vmem:[%s0 + $0x238] sm:$0xff]
  %v93 = vld [vmem:[%s0 + $0x240] sm:$0xff]
  %v94 = vld [vmem:[%s0 + $0x248] sm:$0xff]
  %v95 = vld [vmem:[%s0 + $0x250] sm:$0xff]
  %v96 = vld [vmem:[%s0 + $0x258] sm:$0xff]
  %v97 = vld [vmem:[%s0 + $0x260] sm:$0xff]
  %v98 = vld [vmem:[%s0 + $0x268] sm:$0xff]
  %v99 = vld [vmem:[%s0 + $0x270] sm:$0xff]
  %v100 = vld [vmem:[%s0 + $0x278] sm:$0xff]
  %v101 = vld [vmem:[%s0 + $0x280] sm:$0xff]
  %v102 = vld [vmem:[%s0 + $0x288] sm:$0xff]
  %v103 = vld [vmem:[%s0 + $0x290] sm:$0xff]
  %v104 = vld [vmem:[%s0 + $0x298] sm:$0xff]
  %v105 = vld [vmem:[%s0 + $0x2a0] sm:$0xff]
  %v106 = vld [vmem:[%s0 + $0x2a8] sm:$0xff]
  %v107 = vld [vmem:[%s0 + $0x2b0] sm:$0xff]
  %v108 = vld [vmem:[%s0 + $0x2b8] sm:$0xff]
  %v109 = vld [vmem:[%s0 + $0x2c0] sm:$0xff]
  %v110 = vld [vmem:[%s0 + $0x2c8] sm:$0xff]
  %v111 = vld [vmem:[%s0 + $0x2d0] sm:$0xff]
  %v112 = vld [vmem:[%s0 + $0x2d8] sm:$0xff]
  %v113 = vld [vmem:[%s0 + $0x2e0] sm:$0xff]
  %v114 = vld [vmem:[%s0 + $0x2e8] sm:$0xff]
  %v115 = vld [vmem:[%s0 + $0x2f0] sm:$0xff]
  %v116 = vld [vmem:[%s0 + $0x2f8] sm:$0xff]
  %v117 = vld [vmem:[%s0 + $0x300] sm:$0xff]
  %v118 = vld [vmem:[%s0 + $0x308] sm:$0xff]
  %v119 = vld [vmem:[%s0 + $0x310] sm:$0xff]
  %v120 = vld [vmem:[%s0 + $0x318] sm:$0xff]
  %v121 = vld [vmem:[%s0 + $0x320] sm:$0xff]
  %v122 = vld [vmem:[%s0 + $0x328] sm:$0xff]
  %v123 = vld [vmem:[%s0 + $0x330] sm:$0xff]
  %v124 = vld [vmem:[%s0 + $0x338] sm:$0xff]
  %v125 = vld [vmem:[%s0 + $0x340] sm:$0xff]
  %v126 = vld [vmem:[%s0 + $0x348] sm:$0xff]
  %v127 = vld [vmem:[%s0 + $0x350] sm:$0xff]
  %v128 = vld [vmem:[%s0 + $0x358] sm:$0xff]
  %v129 = vld [vmem:[%s0 + $0x360] sm:$0xff]
  %v130 = vld [vmem:[%s0 + $0x368] sm:$0xff]
  %v131 = vld [vmem:[%s0 + $0x370] sm:$0xff]
  %v132 = vld [vmem:[%s0 + $0x378] sm:$0xff]
  %v133 = vld [vmem:[%s0 + $0x380] sm:$0xff]
  %v134 = vld [vmem:[%s0 + $0x388] sm:$0xff]
  %v135 = vld [vmem:[%s0 + $0x390] sm:$0xff]
  %v136 = vld [vmem:[%s0 + $0x398] sm:$0xff]
  %v137 = vld [vmem:[%s0 + $0x3a0] sm:$0xff]
  %v138 = vld [vmem:[%s0 + $0x3a8] sm:$0xff]
  %v139 = vld [vmem:[%s0 + $0x3b0] sm:$0xff]
  %v140 = vld [vmem:[%s0 + $0x3b8] sm:$0xff]
  %v141 = vld [vmem:[%s0 + $0x3c0] sm:$0xff]
  %v142 = vld [vmem:[%s0 + $0x3c8] sm:$0xff]
  %v143 = vld [vmem:[%s0 + $0x3d0] sm:$0xff]
  %v144 = vld [vmem:[%s0 + $0x3d8] sm:$0xff]
  %v145 = vld [vmem:[%s0 + $0x3e0] sm:$0xff]
  %v146 = vld [vmem:[%s0 + $0x3e8] sm:$0xff]
  %v147 = vld [vmem:[%s0 + $0x3f0] sm:$0xff]
  %v148 = vld [vmem:[%s0 + $0x3f8] sm:$0xff]
  %v149 = vld [vmem:[%s0 + $0x400] sm:$0xff]
  %v150 = vld [vmem:[%s0 + $0x408] sm:$0xff]
  %v151 = vld [vmem:[%s0 + $0x410] sm:$0xff]
  %v152 = vld [vmem:[%s0 + $0x418] sm:$0xff]
  %v153 = vld [vmem:[%s0 + $0x420] sm:$0xff]
  %v154 = vld [vmem:[%s0 + $0x428] sm:$0xff]
  %v155 = vld [vmem:[%s0 + $0x430] sm:$0xff]
  %v156 = vld [vmem:[%s0 + $0x438] sm:$0xff]
  %v157 = vld [vmem:[%s0 + $0x440] sm:$0xff]
  %v158 = vld [vmem:[%s0 + $0x448] sm:$0xff]
  %v159 = vld [vmem:[%s0 + $0x450] sm:$0xff]
  %v160 = vld [vmem:[%s0 + $0x458] sm:$0xff]
  %v161 = vld [vmem:[%s0 + $0x460] sm:$0xff]
  %v162 = vld [vmem:[%s0 + $0x468] sm:$0xff]
  %v163 = vld [vmem:[%s0 + $0x470] sm:$0xff]
  %v164 = vld [vmem:[%s0 + $0x478] sm:$0xff]
  %v165 = vld [vmem:[%s0 + $0x480] sm:$0x7]
  %v166 = vld [vmem:[%s0 + $0x488] sm:$0x7]
  %v167 = vld [vmem:[%s0 + $0x490] sm:$0x7]
  %v168 = vld [vmem:[%s0 + $0x498] sm:$0x7]
  %v169 = vld [vmem:[%s0 + $0x4a0] sm:$0x7]
  %v170 = vld [vmem:[%s0 + $0x4a8] sm:$0x7]
  %v171 = vld [vmem:[%s0 + $0x4b0] sm:$0x7]
  %v172 = vld [vmem:[%s0 + $0x4b8] sm:$0x7]
  %v173 = vld [vmem:[%s0 + $0x4c0] sm:$0x7]
  %v174 = vld [vmem:[%s0 + $0x4c8] sm:$0x7]
  %v175 = vld [vmem:[%s0 + $0x4d0] sm:$0x7]
  %v176 = vld [vmem:[%s0 + $0x4d8] sm:$0x7]
  %v177 = vld [vmem:[%s0 + $0x4e0] sm:$0x7]
  %v178 = vld [vmem:[%s0 + $0x4e8] sm:$0x7]
  %v179 = vld [vmem:[%s0 + $0x4f0] sm:$0x7]
  %v180 = vld [vmem:[%s0 + $0x4f8] sm:$0x7]
  %v181 = vld [vmem:[%s2] sm:$0xff]
  %183 = vset.pattern.permute.xlu0 0
  %184 = vperm.xlu0 %183, %v181
  %v185 = vpop.permute.xlu0 %184
  %vm187 = vcmask 613376
  %v189 = vsel %vm187, %v20, 0
  %vm191 = vcmask 1042432
  %v193 = vsel %vm191, %v165, 0
  %v196 = vsel %vm191, %v166, 0
  %v199 = vsel %vm191, %v167, 0
  %v202 = vsel %vm191, %v168, 0
  %v205 = vsel %vm191, %v169, 0
  %v208 = vsel %vm191, %v170, 0
  %v211 = vsel %vm191, %v171, 0
  %v214 = vsel %vm191, %v172, 0
  %v217 = vsel %vm191, %v173, 0
  %v220 = vsel %vm191, %v174, 0
  %v223 = vsel %vm191, %v175, 0
  %v226 = vsel %vm191, %v176, 0
  %v229 = vsel %vm191, %v177, 0
  %v232 = vsel %vm191, %v178, 0
  %v235 = vsel %vm191, %v179, 0
  %v238 = vsel %vm191, %v180, 0
  %240 = vmatpush.msra.mxu0 0.0
  %241 = vmatpush.msra.mxu0 0.0
  %242 = vmatpush.msra.mxu0 0.0
  %243 = vmatpush.msra.mxu0 0.0
  %244 = vmatpush.msra.mxu0 0.0
  %245 = vmatpush.msra.mxu0 0.0
  %246 = vmatpush.msra.mxu0 %v193
  %247 = vmatpush.msra.mxu0 %v149
  %248 = vmatpush.msra.mxu0 %v133
  %249 = vmatpush.msra.mxu0 %v117
  %250 = vmatpush.msra.mxu0 %v101
  %251 = vmatpush.msra.mxu0 %v85
  %252 = vmatpush.msra.mxu0 %v69
  %253 = vmatpush.msra.mxu0 %v53
  %254 = vmatpush.msra.mxu0 %v37
  %255 = vmatpush.msra.mxu0 %v21
  %256 = vmatmul.f32.gmra.mxu0 %v189
  %v257 = vpop.f32.mrf.mxu0
  %v258 = vadd.f32 %v185, %v257
  %259 = vdwg.mxu0
  %260 = vmatpush.msra.mxu0 0.0
  %261 = vmatpush.msra.mxu0 0.0
  %262 = vmatpush.msra.mxu0 0.0
  %263 = vmatpush.msra.mxu0 0.0
  %264 = vmatpush.msra.mxu0 0.0
  %265 = vmatpush.msra.mxu0 0.0
  %266 = vmatpush.msra.mxu0 %v196
  %267 = vmatpush.msra.mxu0 %v150
  %268 = vmatpush.msra.mxu0 %v134
  %269 = vmatpush.msra.mxu0 %v118
  %270 = vmatpush.msra.mxu0 %v102
  %271 = vmatpush.msra.mxu0 %v86
  %272 = vmatpush.msra.mxu0 %v70
  %273 = vmatpush.msra.mxu0 %v54
  %274 = vmatpush.msra.mxu0 %v38
  %275 = vmatpush.msra.mxu0 %v22
  %276 = vmatmul.f32.gmra.mxu0 %v189
  %v277 = vpop.f32.mrf.mxu0
  %v278 = vadd.f32 %v185, %v277
  %279 = vdwg.mxu0
  %280 = vmatpush.msra.mxu0 0.0
  %281 = vmatpush.msra.mxu0 0.0
  %282 = vmatpush.msra.mxu0 0.0
  %283 = vmatpush.msra.mxu0 0.0
  %284 = vmatpush.msra.mxu0 0.0
  %285 = vmatpush.msra.mxu0 0.0
  %286 = vmatpush.msra.mxu0 %v199
  %287 = vmatpush.msra.mxu0 %v151
  %288 = vmatpush.msra.mxu0 %v135
  %289 = vmatpush.msra.mxu0 %v119
  %290 = vmatpush.msra.mxu0 %v103
  %291 = vmatpush.msra.mxu0 %v87
  %292 = vmatpush.msra.mxu0 %v71
  %293 = vmatpush.msra.mxu0 %v55
  %294 = vmatpush.msra.mxu0 %v39
  %295 = vmatpush.msra.mxu0 %v23
  %296 = vmatmul.f32.gmra.mxu0 %v189
  %v297 = vpop.f32.mrf.mxu0
  %v298 = vadd.f32 %v185, %v297
  %299 = vdwg.mxu0
  %300 = vmatpush.msra.mxu0 0.0
  %301 = vmatpush.msra.mxu0 0.0
  %302 = vmatpush.msra.mxu0 0.0
  %303 = vmatpush.msra.mxu0 0.0
  %304 = vmatpush.msra.mxu0 0.0
  %305 = vmatpush.msra.mxu0 0.0
  %306 = vmatpush.msra.mxu0 %v202
  %307 = vmatpush.msra.mxu0 %v152
  %308 = vmatpush.msra.mxu0 %v136
  %309 = vmatpush.msra.mxu0 %v120
  %310 = vmatpush.msra.mxu0 %v104
  %311 = vmatpush.msra.mxu0 %v88
  %312 = vmatpush.msra.mxu0 %v72
  %313 = vmatpush.msra.mxu0 %v56
  %314 = vmatpush.msra.mxu0 %v40
  %315 = vmatpush.msra.mxu0 %v24
  %316 = vmatmul.f32.gmra.mxu0 %v189
  %v317 = vpop.f32.mrf.mxu0
  %v318 = vadd.f32 %v185, %v317
  %319 = vdwg.mxu0
  %320 = vmatpush.msra.mxu0 0.0
  %321 = vmatpush.msra.mxu0 0.0
  %322 = vmatpush.msra.mxu0 0.0
  %323 = vmatpush.msra.mxu0 0.0
  %324 = vmatpush.msra.mxu0 0.0
  %325 = vmatpush.msra.mxu0 0.0
  %326 = vmatpush.msra.mxu0 %v205
  %327 = vmatpush.msra.mxu0 %v153
  %328 = vmatpush.msra.mxu0 %v137
  %329 = vmatpush.msra.mxu0 %v121
  %330 = vmatpush.msra.mxu0 %v105
  %331 = vmatpush.msra.mxu0 %v89
  %332 = vmatpush.msra.mxu0 %v73
  %333 = vmatpush.msra.mxu0 %v57
  %334 = vmatpush.msra.mxu0 %v41
  %335 = vmatpush.msra.mxu0 %v25
  %336 = vmatmul.f32.gmra.mxu0 %v189
  %v337 = vpop.f32.mrf.mxu0
  %v338 = vadd.f32 %v185, %v337
  %339 = vdwg.mxu0
  %340 = vmatpush.msra.mxu0 0.0
  %341 = vmatpush.msra.mxu0 0.0
  %342 = vmatpush.msra.mxu0 0.0
  %343 = vmatpush.msra.mxu0 0.0
  %344 = vmatpush.msra.mxu0 0.0
  %345 = vmatpush.msra.mxu0 0.0
  %346 = vmatpush.msra.mxu0 %v208
  %347 = vmatpush.msra.mxu0 %v154
  %348 = vmatpush.msra.mxu0 %v138
  %349 = vmatpush.msra.mxu0 %v122
  %350 = vmatpush.msra.mxu0 %v106
  %351 = vmatpush.msra.mxu0 %v90
  %352 = vmatpush.msra.mxu0 %v74
  %353 = vmatpush.msra.mxu0 %v58
  %354 = vmatpush.msra.mxu0 %v42
  %355 = vmatpush.msra.mxu0 %v26
  %356 = vmatmul.f32.gmra.mxu0 %v189
  %v357 = vpop.f32.mrf.mxu0
  %v358 = vadd.f32 %v185, %v357
  %359 = vdwg.mxu0
  %360 = vmatpush.msra.mxu0 0.0
  %361 = vmatpush.msra.mxu0 0.0
  %362 = vmatpush.msra.mxu0 0.0
  %363 = vmatpush.msra.mxu0 0.0
  %364 = vmatpush.msra.mxu0 0.0
  %365 = vmatpush.msra.mxu0 0.0
  %366 = vmatpush.msra.mxu0 %v211
  %367 = vmatpush.msra.mxu0 %v155
  %368 = vmatpush.msra.mxu0 %v139
  %369 = vmatpush.msra.mxu0 %v123
  %370 = vmatpush.msra.mxu0 %v107
  %371 = vmatpush.msra.mxu0 %v91
  %372 = vmatpush.msra.mxu0 %v75
  %373 = vmatpush.msra.mxu0 %v59
  %374 = vmatpush.msra.mxu0 %v43
  %375 = vmatpush.msra.mxu0 %v27
  %376 = vmatmul.f32.gmra.mxu0 %v189
  %v377 = vpop.f32.mrf.mxu0
  %v378 = vadd.f32 %v185, %v377
  %379 = vdwg.mxu0
  %380 = vmatpush.msra.mxu0 0.0
  %381 = vmatpush.msra.mxu0 0.0
  %382 = vmatpush.msra.mxu0 0.0
  %383 = vmatpush.msra.mxu0 0.0
  %384 = vmatpush.msra.mxu0 0.0
  %385 = vmatpush.msra.mxu0 0.0
  %386 = vmatpush.msra.mxu0 %v214
  %387 = vmatpush.msra.mxu0 %v156
  %388 = vmatpush.msra.mxu0 %v140
  %389 = vmatpush.msra.mxu0 %v124
  %390 = vmatpush.msra.mxu0 %v108
  %391 = vmatpush.msra.mxu0 %v92
  %392 = vmatpush.msra.mxu0 %v76
  %393 = vmatpush.msra.mxu0 %v60
  %394 = vmatpush.msra.mxu0 %v44
  %395 = vmatpush.msra.mxu0 %v28
  %396 = vmatmul.f32.gmra.mxu0 %v189
  %v397 = vpop.f32.mrf.mxu0
  %v398 = vadd.f32 %v185, %v397
  %399 = vdwg.mxu0
  %400 = vmatpush.msra.mxu0 0.0
  %401 = vmatpush.msra.mxu0 0.0
  %402 = vmatpush.msra.mxu0 0.0
  %403 = vmatpush.msra.mxu0 0.0
  %404 = vmatpush.msra.mxu0 0.0
  %405 = vmatpush.msra.mxu0 0.0
  %406 = vmatpush.msra.mxu0 %v217
  %407 = vmatpush.msra.mxu0 %v157
  %408 = vmatpush.msra.mxu0 %v141
  %409 = vmatpush.msra.mxu0 %v125
  %410 = vmatpush.msra.mxu0 %v109
  %411 = vmatpush.msra.mxu0 %v93
  %412 = vmatpush.msra.mxu0 %v77
  %413 = vmatpush.msra.mxu0 %v61
  %414 = vmatpush.msra.mxu0 %v45
  %415 = vmatpush.msra.mxu0 %v29
  %416 = vmatmul.f32.gmra.mxu0 %v189
  %v417 = vpop.f32.mrf.mxu0
  %v418 = vadd.f32 %v185, %v417
  %419 = vdwg.mxu0
  %420 = vmatpush.msra.mxu0 0.0
  %421 = vmatpush.msra.mxu0 0.0
  %422 = vmatpush.msra.mxu0 0.0
  %423 = vmatpush.msra.mxu0 0.0
  %424 = vmatpush.msra.mxu0 0.0
  %425 = vmatpush.msra.mxu0 0.0
  %426 = vmatpush.msra.mxu0 %v220
  %427 = vmatpush.msra.mxu0 %v158
  %428 = vmatpush.msra.mxu0 %v142
  %429 = vmatpush.msra.mxu0 %v126
  %430 = vmatpush.msra.mxu0 %v110
  %431 = vmatpush.msra.mxu0 %v94
  %432 = vmatpush.msra.mxu0 %v78
  %433 = vmatpush.msra.mxu0 %v62
  %434 = vmatpush.msra.mxu0 %v46
  %435 = vmatpush.msra.mxu0 %v30
  %436 = vmatmul.f32.gmra.mxu0 %v189
  %v437 = vpop.f32.mrf.mxu0
  %v438 = vadd.f32 %v185, %v437
  %439 = vdwg.mxu0
  %440 = vmatpush.msra.mxu0 0.0
  %441 = vmatpush.msra.mxu0 0.0
  %442 = vmatpush.msra.mxu0 0.0
  %443 = vmatpush.msra.mxu0 0.0
  %444 = vmatpush.msra.mxu0 0.0
  %445 = vmatpush.msra.mxu0 0.0
  %446 = vmatpush.msra.mxu0 %v223
  %447 = vmatpush.msra.mxu0 %v159
  %448 = vmatpush.msra.mxu0 %v143
  %449 = vmatpush.msra.mxu0 %v127
  %450 = vmatpush.msra.mxu0 %v111
  %451 = vmatpush.msra.mxu0 %v95
  %452 = vmatpush.msra.mxu0 %v79
  %453 = vmatpush.msra.mxu0 %v63
  %454 = vmatpush.msra.mxu0 %v47
  %455 = vmatpush.msra.mxu0 %v31
  %456 = vmatmul.f32.gmra.mxu0 %v189
  %v457 = vpop.f32.mrf.mxu0
  %v458 = vadd.f32 %v185, %v457
  %459 = vdwg.mxu0
  %460 = vmatpush.msra.mxu0 0.0
  %461 = vmatpush.msra.mxu0 0.0
  %462 = vmatpush.msra.mxu0 0.0
  %463 = vmatpush.msra.mxu0 0.0
  %464 = vmatpush.msra.mxu0 0.0
  %465 = vmatpush.msra.mxu0 0.0
  %466 = vmatpush.msra.mxu0 %v226
  %467 = vmatpush.msra.mxu0 %v160
  %468 = vmatpush.msra.mxu0 %v144
  %469 = vmatpush.msra.mxu0 %v128
  %470 = vmatpush.msra.mxu0 %v112
  %471 = vmatpush.msra.mxu0 %v96
  %472 = vmatpush.msra.mxu0 %v80
  %473 = vmatpush.msra.mxu0 %v64
  %474 = vmatpush.msra.mxu0 %v48
  %475 = vmatpush.msra.mxu0 %v32
  %476 = vmatmul.f32.gmra.mxu0 %v189
  %v477 = vpop.f32.mrf.mxu0
  %v478 = vadd.f32 %v185, %v477
  %479 = vdwg.mxu0
  %480 = vmatpush.msra.mxu0 0.0
  %481 = vmatpush.msra.mxu0 0.0
  %482 = vmatpush.msra.mxu0 0.0
  %483 = vmatpush.msra.mxu0 0.0
  %484 = vmatpush.msra.mxu0 0.0
  %485 = vmatpush.msra.mxu0 0.0
  %486 = vmatpush.msra.mxu0 %v229
  %487 = vmatpush.msra.mxu0 %v161
  %488 = vmatpush.msra.mxu0 %v145
  %489 = vmatpush.msra.mxu0 %v129
  %490 = vmatpush.msra.mxu0 %v113
  %491 = vmatpush.msra.mxu0 %v97
  %492 = vmatpush.msra.mxu0 %v81
  %493 = vmatpush.msra.mxu0 %v65
  %494 = vmatpush.msra.mxu0 %v49
  %495 = vmatpush.msra.mxu0 %v33
  %496 = vmatmul.f32.gmra.mxu0 %v189
  %v497 = vpop.f32.mrf.mxu0
  %v498 = vadd.f32 %v185, %v497
  %499 = vdwg.mxu0
  %500 = vmatpush.msra.mxu0 0.0
  %501 = vmatpush.msra.mxu0 0.0
  %502 = vmatpush.msra.mxu0 0.0
  %503 = vmatpush.msra.mxu0 0.0
  %504 = vmatpush.msra.mxu0 0.0
  %505 = vmatpush.msra.mxu0 0.0
  %506 = vmatpush.msra.mxu0 %v232
  %507 = vmatpush.msra.mxu0 %v162
  %508 = vmatpush.msra.mxu0 %v146
  %509 = vmatpush.msra.mxu0 %v130
  %510 = vmatpush.msra.mxu0 %v114
  %511 = vmatpush.msra.mxu0 %v98
  %512 = vmatpush.msra.mxu0 %v82
  %513 = vmatpush.msra.mxu0 %v66
  %514 = vmatpush.msra.mxu0 %v50
  %515 = vmatpush.msra.mxu0 %v34
  %516 = vmatmul.f32.gmra.mxu0 %v189
  %v517 = vpop.f32.mrf.mxu0
  %v518 = vadd.f32 %v185, %v517
  %519 = vdwg.mxu0
  %520 = vmatpush.msra.mxu0 0.0
  %521 = vmatpush.msra.mxu0 0.0
  %522 = vmatpush.msra.mxu0 0.0
  %523 = vmatpush.msra.mxu0 0.0
  %524 = vmatpush.msra.mxu0 0.0
  %525 = vmatpush.msra.mxu0 0.0
  %526 = vmatpush.msra.mxu0 %v235
  %527 = vmatpush.msra.mxu0 %v163
  %528 = vmatpush.msra.mxu0 %v147
  %529 = vmatpush.msra.mxu0 %v131
  %530 = vmatpush.msra.mxu0 %v115
  %531 = vmatpush.msra.mxu0 %v99
  %532 = vmatpush.msra.mxu0 %v83
  %533 = vmatpush.msra.mxu0 %v67
  %534 = vmatpush.msra.mxu0 %v51
  %535 = vmatpush.msra.mxu0 %v35
  %536 = vmatmul.f32.gmra.mxu0 %v189
  %v537 = vpop.f32.mrf.mxu0
  %v538 = vadd.f32 %v185, %v537
  %539 = vdwg.mxu0
  %540 = vmatpush.msra.mxu0 0.0
  %541 = vmatpush.msra.mxu0 0.0
  %542 = vmatpush.msra.mxu0 0.0
  %543 = vmatpush.msra.mxu0 0.0
  %544 = vmatpush.msra.mxu0 0.0
  %545 = vmatpush.msra.mxu0 0.0
  %546 = vmatpush.msra.mxu0 %v238
  %547 = vmatpush.msra.mxu0 %v164
  %548 = vmatpush.msra.mxu0 %v148
  %549 = vmatpush.msra.mxu0 %v132
  %550 = vmatpush.msra.mxu0 %v116
  %551 = vmatpush.msra.mxu0 %v100
  %552 = vmatpush.msra.mxu0 %v84
  %553 = vmatpush.msra.mxu0 %v68
  %554 = vmatpush.msra.mxu0 %v52
  %555 = vmatpush.msra.mxu0 %v36
  %556 = vmatmul.f32.gmra.mxu0 %v189
  %v557 = vpop.f32.mrf.mxu0
  %v558 = vadd.f32 %v185, %v557
  %559 = vdwg.mxu0
  %v560 = vadd.f32 %v258, %v278
  %v561 = vadd.f32 %v560, %v298
  %v562 = vadd.f32 %v561, %v318
  %v563 = vadd.f32 %v562, %v338
  %v564 = vadd.f32 %v563, %v358
  %v565 = vadd.f32 %v564, %v378
  %v566 = vadd.f32 %v565, %v398
  %v567 = vadd.f32 %v566, %v418
  %v568 = vadd.f32 %v567, %v438
  %v569 = vadd.f32 %v568, %v458
  %v570 = vadd.f32 %v569, %v478
  %v571 = vadd.f32 %v570, %v498
  %v572 = vadd.f32 %v571, %v518
  %v573 = vadd.f32 %v572, %v538
  %vm574 = vcmask 15360
  %v575 = vsel %vm574, %v558, 0.0
  %v576 = vadd.f32 %v573, %v575
  %577 = vadd.xlane.f32.xlu0 %v576
  %v578 = vpop.xlane.xlu0 %577
  %v579 = vmul.f32 %v258, %v258
  %v580 = vmul.f32 %v278, %v278
  %v581 = vmul.f32 %v298, %v298
  %v582 = vmul.f32 %v318, %v318
  %v583 = vmul.f32 %v338, %v338
  %v584 = vmul.f32 %v358, %v358
  %v585 = vmul.f32 %v378, %v378
  %v586 = vmul.f32 %v398, %v398
  %v587 = vmul.f32 %v418, %v418
  %v588 = vmul.f32 %v438, %v438
  %v589 = vmul.f32 %v458, %v458
  %v590 = vmul.f32 %v478, %v478
  %v591 = vmul.f32 %v498, %v498
  %v592 = vmul.f32 %v518, %v518
  %v593 = vmul.f32 %v538, %v538
  %v594 = vmul.f32 %v558, %v558
  %v595 = vadd.f32 %v579, %v580
  %v596 = vadd.f32 %v595, %v581
  %v597 = vadd.f32 %v596, %v582
  %v598 = vadd.f32 %v597, %v583
  %v599 = vadd.f32 %v598, %v584
  %v600 = vadd.f32 %v599, %v585
  %v601 = vadd.f32 %v600, %v586
  %v602 = vadd.f32 %v601, %v587
  %v603 = vadd.f32 %v602, %v588
  %v604 = vadd.f32 %v603, %v589
  %v605 = vadd.f32 %v604, %v590
  %v606 = vadd.f32 %v605, %v591
  %v607 = vadd.f32 %v606, %v592
  %v608 = vadd.f32 %v607, %v593
  %v609 = vsel %vm574, %v594, 0.0
  %v610 = vadd.f32 %v608, %v609
  %611 = vadd.xlane.f32.xlu0 %v610
  %v612 = vpop.xlane.xlu0 %611
  %v613 = vmul.f32 %v578, 0.0005202914
  %v614 = vmul.f32 %v612, 0.0005202914
  %v615 = vmul.f32 %v613, %v613
  %v616 = vsub.f32 %v614, %v615
  %v617 = vmax.f32 %v616, 0.0
  %v618 = vadd.f32 %v617, 1e-05
  %v619 = vrsqrt.pop %v618
  %v620 = vmul.f32 %v619, %v618
  %v621 = vmul.f32 %v620, %v619
  %v622 = vmul.f32 0.5, %v621
  %v623 = vsub.f32 1.5, %v622
  %v624 = vmul.f32 %v619, %v623
  %vm625 = vweird.f32 %v618
  %vm626 = vweird.f32 %v619
  %vm627 = vmor %vm625, %vm626
  %v628 = vsel %vm627, %v619, %v624
  %v629 = vld [vmem:[%s3] sm:$0xff]
  %v630 = vmul.f32 %v628, %v629
  %v631 = vld [vmem:[%s4] sm:$0xff]
  %v632 = vmul.f32 %v613, %v630
  %v633 = vsub.f32 %v631, %v632
  %635 = vset.pattern.permute.xlu0 0
  %636 = vperm.xlu0 %635, %v630
  %v637 = vpop.permute.xlu0 %636
  %v639 = vmul.f32 %v258, %v637
  %v640 = vmul.f32 %v278, %v637
  %v641 = vmul.f32 %v298, %v637
  %v642 = vmul.f32 %v318, %v637
  %v643 = vmul.f32 %v338, %v637
  %v644 = vmul.f32 %v358, %v637
  %v645 = vmul.f32 %v378, %v637
  %v646 = vmul.f32 %v398, %v637
  %v647 = vmul.f32 %v418, %v637
  %v648 = vmul.f32 %v438, %v637
  %v649 = vmul.f32 %v458, %v637
  %v650 = vmul.f32 %v478, %v637
  %v651 = vmul.f32 %v498, %v637
  %v652 = vmul.f32 %v518, %v637
  %v653 = vmul.f32 %v538, %v637
  %v654 = vmul.f32 %v558, %v637
  %656 = vset.pattern.permute.xlu0 0
  %657 = vperm.xlu0 %656, %v633
  %v658 = vpop.permute.xlu0 %657
  %v660 = vadd.f32 %v639, %v658
  %v661 = vadd.f32 %v640, %v658
  %v662 = vadd.f32 %v641, %v658
  %v663 = vadd.f32 %v642, %v658
  %v664 = vadd.f32 %v643, %v658
  %v665 = vadd.f32 %v644, %v658
  %v666 = vadd.f32 %v645, %v658
  %v667 = vadd.f32 %v646, %v658
  %v668 = vadd.f32 %v647, %v658
  %v669 = vadd.f32 %v648, %v658
  %v670 = vadd.f32 %v649, %v658
  %v671 = vadd.f32 %v650, %v658
  %v672 = vadd.f32 %v651, %v658
  %v673 = vadd.f32 %v652, %v658
  %v674 = vadd.f32 %v653, %v658
  %v675 = vadd.f32 %v654, %v658
  %v676 = vmax.f32 %v660, 0.0
  %v677 = vmax.f32 %v661, 0.0
  %v678 = vmax.f32 %v662, 0.0
  %v679 = vmax.f32 %v663, 0.0
  %v680 = vmax.f32 %v664, 0.0
  %v681 = vmax.f32 %v665, 0.0
  %v682 = vmax.f32 %v666, 0.0
  %v683 = vmax.f32 %v667, 0.0
  %v684 = vmax.f32 %v668, 0.0
  %v685 = vmax.f32 %v669, 0.0
  %v686 = vmax.f32 %v670, 0.0
  %v687 = vmax.f32 %v671, 0.0
  %v688 = vmax.f32 %v672, 0.0
  %v689 = vmax.f32 %v673, 0.0
  %v690 = vmax.f32 %v674, 0.0
  %v691 = vmax.f32 %v675, 0.0
  %692 = vst [vmem:[%s5] sm:$0xff] %v676
  %693 = vst [vmem:[%s5 + $0x8] sm:$0xff] %v677
  %694 = vst [vmem:[%s5 + $0x10] sm:$0xff] %v678
  %695 = vst [vmem:[%s5 + $0x18] sm:$0xff] %v679
  %696 = vst [vmem:[%s5 + $0x20] sm:$0xff] %v680
  %697 = vst [vmem:[%s5 + $0x28] sm:$0xff] %v681
  %698 = vst [vmem:[%s5 + $0x30] sm:$0xff] %v682
  %699 = vst [vmem:[%s5 + $0x38] sm:$0xff] %v683
  %700 = vst [vmem:[%s5 + $0x40] sm:$0xff] %v684
  %701 = vst [vmem:[%s5 + $0x48] sm:$0xff] %v685
  %702 = vst [vmem:[%s5 + $0x50] sm:$0xff] %v686
  %703 = vst [vmem:[%s5 + $0x58] sm:$0xff] %v687
  %704 = vst [vmem:[%s5 + $0x60] sm:$0xff] %v688
  %705 = vst [vmem:[%s5 + $0x68] sm:$0xff] %v689
  %706 = vst [vmem:[%s5 + $0x70] sm:$0xff] %v690
  %707 = vst.msk [vmem:[%s5 + $0x78] sm:$0xff] %vm574, %v691
  // Predicated region
  $region22: #{critic_forward.5} parent=0 // pred_check
    _
  $region23: #{critic_forward.5} parent=0 // pred_check_branch
    %709 = sbr.rel (0) target = $region25
  $region24: #{critic_forward.5} parent=0 // pred_region
    _
  $region25: #{critic_forward.5} parent=0 // pred_fallthru
    _
  // Predicated region
  $region26: #{critic_forward.5} parent=0 // pred_check
    _
  $region27: #{critic_forward.5} parent=0 // pred_check_branch
    %711 = sbr.rel (0) target = $region29
  $region28: #{critic_forward.5} parent=0 // pred_region
    _
  $region29: #{critic_forward.5} parent=0 // pred_fallthru
    _

// kernel: critic_forward.6
$region0: #{critic_forward.6}
  #allocation0 [shape = 'u32[]', space=smem, size = 0x4, offset = 0x4, fixed_abs, tag = 'smem constant byte address 0x4 - core index']
  #allocation1 [shape = 'u32[72,128]{1,0:T(1,128)}', space=vmem, size = 0x9000, scoped, tag = 'internal scratch']
  %s0 = inlined_call_operand.vmem [shape: f32[200,450], index: 0, kind: input, shape index: {}]
  %s1 = inlined_call_operand.vmem [shape: f32[16,200], index: 1, kind: input, shape index: {}]
  %s2 = inlined_call_operand.vmem [shape: f32[16,1], index: 2, kind: input, shape index: {}]
  %s3 = inlined_call_operand.vmem [shape: f32[16,1], index: 3, kind: input, shape index: {}]
  %s4 = inlined_call_operand.vmem [shape: f32[16,1], index: 4, kind: input, shape index: {}]
  %s5 = inlined_call_operand.vmem [shape: f32[16,450], index: 5, kind: output, shape index: {}]
  %s6 = sld [smem:[#allocation0]]
  $region30: #{critic_forward.6} parent=0
    _
  %s8 = ssub.s32 1, %s6
  %s9 = scalar_select 0, %s8, %s6
  // Predicated region
  $region2: #{critic_forward.6} parent=0 // pred_check
    _
  $region3: #{critic_forward.6} parent=0 // pred_check_branch
    %11 = sbr.rel (0) target = $region5
  $region4: #{critic_forward.6} parent=0 // pred_region
    _
  $region5: #{critic_forward.6} parent=0 // pred_fallthru
    _
  // Predicated region
  $region6: #{critic_forward.6} parent=0 // pred_check
    _
  $region7: #{critic_forward.6} parent=0 // pred_check_branch
    %13 = sbr.rel (0) target = $region9
  $region8: #{critic_forward.6} parent=0 // pred_region
    _
  $region9: #{critic_forward.6} parent=0 // pred_fallthru
    _
  // Predicated region
  $region10: #{critic_forward.6} parent=0 // pred_check
    _
  $region11: #{critic_forward.6} parent=0 // pred_check_branch
    %15 = sbr.rel (0) target = $region13
  $region12: #{critic_forward.6} parent=0 // pred_region
    _
  $region13: #{critic_forward.6} parent=0 // pred_fallthru
    _
  // Predicated region
  $region14: #{critic_forward.6} parent=0 // pred_check
    _
  $region15: #{critic_forward.6} parent=0 // pred_check_branch
    %17 = sbr.rel (0) target = $region17
  $region16: #{critic_forward.6} parent=0 // pred_region
    _
  $region17: #{critic_forward.6} parent=0 // pred_fallthru
    _
  // Predicated region
  $region18: #{critic_forward.6} parent=0 // pred_check
    _
  $region19: #{critic_forward.6} parent=0 // pred_check_branch
    %19 = sbr.rel (0) target = $region21
  $region20: #{critic_forward.6} parent=0 // pred_region
    _
  $region21: #{critic_forward.6} parent=0 // pred_fallthru
    _
  %v20 = vld [vmem:[%s1] sm:$0xff]
  %v21 = vld [vmem:[%s1 + $0x8] sm:$0xff]
  %v22 = vld [vmem:[%s1 + $0x10] sm:$0xff]
  %v23 = vld [vmem:[%s1 + $0x18] sm:$0xff]
  %v24 = vld [vmem:[%s0] sm:$0xff]
  %v25 = vld [vmem:[%s0 + $0x8] sm:$0xff]
  %v26 = vld [vmem:[%s0 + $0x10] sm:$0xff]
  %v27 = vld [vmem:[%s0 + $0x18] sm:$0xff]
  %v28 = vld [vmem:[%s0 + $0x20] sm:$0xff]
  %v29 = vld [vmem:[%s0 + $0x28] sm:$0xff]
  %v30 = vld [vmem:[%s0 + $0x30] sm:$0xff]
  %v31 = vld [vmem:[%s0 + $0x38] sm:$0xff]
  %v32 = vld [vmem:[%s0 + $0x40] sm:$0xff]
  %v33 = vld [vmem:[%s0 + $0x48] sm:$0xff]
  %v34 = vld [vmem:[%s0 + $0x50] sm:$0xff]
  %v35 = vld [vmem:[%s0 + $0x58] sm:$0xff]
  %v36 = vld [vmem:[%s0 + $0x60] sm:$0xff]
  %v37 = vld [vmem:[%s0 + $0x68] sm:$0xff]
  %v38 = vld [vmem:[%s0 + $0x70] sm:$0xff]
  %v39 = vld [vmem:[%s0 + $0x78] sm:$0xff]
  %v40 = vld [vmem:[%s0 + $0x80] sm:$0xff]
  %v41 = vld [vmem:[%s0 + $0x88] sm:$0xff]
  %v42 = vld [vmem:[%s0 + $0x90] sm:$0xff]
  %v43 = vld [vmem:[%s0 + $0x98] sm:$0xff]
  %v44 = vld [vmem:[%s0 + $0xa0] sm:$0xff]
  %v45 = vld [vmem:[%s0 + $0xa8] sm:$0xff]
  %v46 = vld [vmem:[%s0 + $0xb0] sm:$0xff]
  %v47 = vld [vmem:[%s0 + $0xb8] sm:$0xff]
  %v48 = vld [vmem:[%s0 + $0xc0] sm:$0xff]
  %v49 = vld [vmem:[%s0 + $0xc8] sm:$0xff]
  %v50 = vld [vmem:[%s0 + $0xd0] sm:$0xff]
  %v51 = vld [vmem:[%s0 + $0xd8] sm:$0xff]
  %v52 = vld [vmem:[%s0 + $0xe0] sm:$0xff]
  %v53 = vld [vmem:[%s0 + $0xe8] sm:$0xff]
  %v54 = vld [vmem:[%s0 + $0xf0] sm:$0xff]
  %v55 = vld [vmem:[%s0 + $0xf8] sm:$0xff]
  %v56 = vld [vmem:[%s0 + $0x100] sm:$0xff]
  %v57 = vld [vmem:[%s0 + $0x108] sm:$0xff]
  %v58 = vld [vmem:[%s0 + $0x110] sm:$0xff]
  %v59 = vld [vmem:[%s0 + $0x118] sm:$0xff]
  %v60 = vld [vmem:[%s0 + $0x120] sm:$0xff]
  %v61 = vld [vmem:[%s0 + $0x128] sm:$0xff]
  %v62 = vld [vmem:[%s0 + $0x130] sm:$0xff]
  %v63 = vld [vmem:[%s0 + $0x138] sm:$0xff]
  %v64 = vld [vmem:[%s0 + $0x140] sm:$0xff]
  %v65 = vld [vmem:[%s0 + $0x148] sm:$0xff]
  %v66 = vld [vmem:[%s0 + $0x150] sm:$0xff]
  %v67 = vld [vmem:[%s0 + $0x158] sm:$0xff]
  %v68 = vld [vmem:[%s0 + $0x160] sm:$0xff]
  %v69 = vld [vmem:[%s0 + $0x168] sm:$0xff]
  %v70 = vld [vmem:[%s0 + $0x170] sm:$0xff]
  %v71 = vld [vmem:[%s0 + $0x178] sm:$0xff]
  %v72 = vld [vmem:[%s0 + $0x180] sm:$0xff]
  %v73 = vld [vmem:[%s0 + $0x188] sm:$0xff]
  %v74 = vld [vmem:[%s0 + $0x190] sm:$0xff]
  %v75 = vld [vmem:[%s0 + $0x198] sm:$0xff]
  %v76 = vld [vmem:[%s0 + $0x1a0] sm:$0xff]
  %v77 = vld [vmem:[%s0 + $0x1a8] sm:$0xff]
  %v78 = vld [vmem:[%s0 + $0x1b0] sm:$0xff]
  %v79 = vld [vmem:[%s0 + $0x1b8] sm:$0xff]
  %v80 = vld [vmem:[%s0 + $0x1c0] sm:$0xff]
  %v81 = vld [vmem:[%s0 + $0x1c8] sm:$0xff]
  %v82 = vld [vmem:[%s0 + $0x1d0] sm:$0xff]
  %v83 = vld [vmem:[%s0 + $0x1d8] sm:$0xff]
  %v84 = vld [vmem:[%s0 + $0x1e0] sm:$0xff]
  %v85 = vld [vmem:[%s0 + $0x1e8] sm:$0xff]
  %v86 = vld [vmem:[%s0 + $0x1f0] sm:$0xff]
  %v87 = vld [vmem:[%s0 + $0x1f8] sm:$0xff]
  %v88 = vld [vmem:[%s0 + $0x200] sm:$0xff]
  %v89 = vld [vmem:[%s0 + $0x208] sm:$0xff]
  %v90 = vld [vmem:[%s0 + $0x210] sm:$0xff]
  %v91 = vld [vmem:[%s0 + $0x218] sm:$0xff]
  %v92 = vld [vmem:[%s0 + $0x220] sm:$0xff]
  %v93 = vld [vmem:[%s0 + $0x228] sm:$0xff]
  %v94 = vld [vmem:[%s0 + $0x230] sm:$0xff]
  %v95 = vld [vmem:[%s0 + $0x238] sm:$0xff]
  %v96 = vld [vmem:[%s0 + $0x240] sm:$0xff]
  %v97 = vld [vmem:[%s0 + $0x248] sm:$0xff]
  %v98 = vld [vmem:[%s0 + $0x250] sm:$0xff]
  %v99 = vld [vmem:[%s0 + $0x258] sm:$0xff]
  %v100 = vld [vmem:[%s0 + $0x260] sm:$0xff]
  %v101 = vld [vmem:[%s0 + $0x268] sm:$0xff]
  %v102 = vld [vmem:[%s0 + $0x270] sm:$0xff]
  %v103 = vld [vmem:[%s0 + $0x278] sm:$0xff]
  %v104 = vld [vmem:[%s0 + $0x280] sm:$0xff]
  %v105 = vld [vmem:[%s0 + $0x288] sm:$0xff]
  %v106 = vld [vmem:[%s0 + $0x290] sm:$0xff]
  %v107 = vld [vmem:[%s0 + $0x298] sm:$0xff]
  %v108 = vld [vmem:[%s0 + $0x2a0] sm:$0xff]
  %v109 = vld [vmem:[%s0 + $0x2a8] sm:$0xff]
  %v110 = vld [vmem:[%s0 + $0x2b0] sm:$0xff]
  %v111 = vld [vmem:[%s0 + $0x2b8] sm:$0xff]
  %v112 = vld [vmem:[%s0 + $0x2c0] sm:$0xff]
  %v113 = vld [vmem:[%s0 + $0x2c8] sm:$0xff]
  %v114 = vld [vmem:[%s0 + $0x2d0] sm:$0xff]
  %v115 = vld [vmem:[%s0 + $0x2d8] sm:$0xff]
  %v116 = vld [vmem:[%s0 + $0x2e0] sm:$0xff]
  %v117 = vld [vmem:[%s0 + $0x2e8] sm:$0xff]
  %v118 = vld [vmem:[%s0 + $0x2f0] sm:$0xff]
  %v119 = vld [vmem:[%s0 + $0x2f8] sm:$0xff]
  %v120 = vld [vmem:[%s0 + $0x300] sm:$0xff]
  %v121 = vld [vmem:[%s0 + $0x308] sm:$0xff]
  %v122 = vld [vmem:[%s0 + $0x310] sm:$0xff]
  %v123 = vld [vmem:[%s0 + $0x318] sm:$0xff]
  %v124 = vld [vmem:[%s2] sm:$0xff]
  %v125 = vld [vmem:[%s2 + $0x8] sm:$0xff]
  %127 = vset.pattern.permute.xlu0 0
  %128 = vperm.xlu0 %127, %v124
  %v129 = vpop.permute.xlu0 %128
  %132 = vset.pattern.permute.xlu0 0
  %133 = vperm.xlu0 %132, %v125
  %v134 = vpop.permute.xlu0 %133
  %vm136 = vcmask 588800
  %v138 = vsel %vm136, %v21, 0
  %v141 = vsel %vm136, %v23, 0
  %143 = vmatpush.msra.mxu0 %v84
  %144 = vmatpush.msra.mxu0 %v80
  %145 = vmatpush.msra.mxu0 %v76
  %146 = vmatpush.msra.mxu0 %v72
  %147 = vmatpush.msra.mxu0 %v68
  %148 = vmatpush.msra.mxu0 %v64
  %149 = vmatpush.msra.mxu0 %v60
  %150 = vmatpush.msra.mxu0 %v56
  %151 = vmatpush.msra.mxu0 %v52
  %152 = vmatpush.msra.mxu0 %v48
  %153 = vmatpush.msra.mxu0 %v44
  %154 = vmatpush.msra.mxu0 %v40
  %155 = vmatpush.msra.mxu0 %v36
  %156 = vmatpush.msra.mxu0 %v32
  %157 = vmatpush.msra.mxu0 %v28
  %158 = vmatpush.msra.mxu0 %v24
  %159 = vmatmul.f32.gmra.mxu0 %v20
  %v160 = vpop.f32.mrf.mxu0
  %v161 = vadd.f32 %v129, %v160
  %162 = vmatmul.f32.gmra.mxu0 %v22
  %v163 = vpop.f32.mrf.mxu0
  %v164 = vadd.f32 %v134, %v163
  %165 = vdwg.mxu0
  %166 = vmatpush.msra.mxu0 0.0
  %167 = vmatpush.msra.mxu0 0.0
  %168 = vmatpush.msra.mxu0 0.0
  %169 = vmatpush.msra.mxu0 0.0
  %170 = vmatpush.msra.mxu0 0.0
  %171 = vmatpush.msra.mxu0 0.0
  %172 = vmatpush.msra.mxu0 0.0
  %173 = vmatpush.msra.mxu0 %v120
  %174 = vmatpush.msra.mxu0 %v116
  %175 = vmatpush.msra.mxu0 %v112
  %176 = vmatpush.msra.mxu0 %v108
  %177 = vmatpush.msra.mxu0 %v104
  %178 = vmatpush.msra.mxu0 %v100
  %179 = vmatpush.msra.mxu0 %v96
  %180 = vmatpush.msra.mxu0 %v92
  %181 = vmatpush.msra.mxu0 %v88
  %182 = vmatmul.f32.gmra.mxu0 %v138
  %v183 = vpop.f32.mrf.mxu0
  %v184 = vadd.f32 %v161, %v183
  %185 = vmatmul.f32.gmra.mxu0 %v141
  %v186 = vpop.f32.mrf.mxu0
  %v187 = vadd.f32 %v164, %v186
  %188 = vdwg.mxu0
  %189 = vmatpush.msra.mxu0 %v85
  %190 = vmatpush.msra.mxu0 %v81
  %191 = vmatpush.msra.mxu0 %v77
  %192 = vmatpush.msra.mxu0 %v73
  %193 = vmatpush.msra.mxu0 %v69
  %194 = vmatpush.msra.mxu0 %v65
  %195 = vmatpush.msra.mxu0 %v61
  %196 = vmatpush.msra.mxu0 %v57
  %197 = vmatpush.msra.mxu0 %v53
  %198 = vmatpush.msra.mxu0 %v49
  %199 = vmatpush.msra.mxu0 %v45
  %200 = vmatpush.msra.mxu0 %v41
  %201 = vmatpush.msra.mxu0 %v37
  %202 = vmatpush.msra.mxu0 %v33
  %203 = vmatpush.msra.mxu0 %v29
  %204 = vmatpush.msra.mxu0 %v25
  %205 = vmatmul.f32.gmra.mxu0 %v20
  %v206 = vpop.f32.mrf.mxu0
  %v207 = vadd.f32 %v129, %v206
  %208 = vmatmul.f32.gmra.mxu0 %v22
  %v209 = vpop.f32.mrf.mxu0
  %v210 = vadd.f32 %v134, %v209
  %211 = vdwg.mxu0
  %212 = vmatpush.msra.mxu0 0.0
  %213 = vmatpush.msra.mxu0 0.0
  %214 = vmatpush.msra.mxu0 0.0
  %215 = vmatpush.msra.mxu0 0.0
  %216 = vmatpush.msra.mxu0 0.0
  %217 = vmatpush.msra.mxu0 0.0
  %218 = vmatpush.msra.mxu0 0.0
  %219 = vmatpush.msra.mxu0 %v121
  %220 = vmatpush.msra.mxu0 %v117
  %221 = vmatpush.msra.mxu0 %v113
  %222 = vmatpush.msra.mxu0 %v109
  %223 = vmatpush.msra.mxu0 %v105
  %224 = vmatpush.msra.mxu0 %v101
  %225 = vmatpush.msra.mxu0 %v97
  %226 = vmatpush.msra.mxu0 %v93
  %227 = vmatpush.msra.mxu0 %v89
  %228 = vmatmul.f32.gmra.mxu0 %v138
  %v229 = vpop.f32.mrf.mxu0
  %v230 = vadd.f32 %v207, %v229
  %231 = vmatmul.f32.gmra.mxu0 %v141
  %v232 = vpop.f32.mrf.mxu0
  %v233 = vadd.f32 %v210, %v232
  %234 = vdwg.mxu0
  %235 = vmatpush.msra.mxu0 %v86
  %236 = vmatpush.msra.mxu0 %v82
  %237 = vmatpush.msra.mxu0 %v78
  %238 = vmatpush.msra.mxu0 %v74
  %239 = vmatpush.msra.mxu0 %v70
  %240 = vmatpush.msra.mxu0 %v66
  %241 = vmatpush.msra.mxu0 %v62
  %242 = vmatpush.msra.mxu0 %v58
  %243 = vmatpush.msra.mxu0 %v54
  %244 = vmatpush.msra.mxu0 %v50
  %245 = vmatpush.msra.mxu0 %v46
  %246 = vmatpush.msra.mxu0 %v42
  %247 = vmatpush.msra.mxu0 %v38
  %248 = vmatpush.msra.mxu0 %v34
  %249 = vmatpush.msra.mxu0 %v30
  %250 = vmatpush.msra.mxu0 %v26
  %251 = vmatmul.f32.gmra.mxu0 %v20
  %v252 = vpop.f32.mrf.mxu0
  %v253 = vadd.f32 %v129, %v252
  %254 = vmatmul.f32.gmra.mxu0 %v22
  %v255 = vpop.f32.mrf.mxu0
  %v256 = vadd.f32 %v134, %v255
  %257 = vdwg.mxu0
  %258 = vmatpush.msra.mxu0 0.0
  %259 = vmatpush.msra.mxu0 0.0
  %260 = vmatpush.msra.mxu0 0.0
  %261 = vmatpush.msra.mxu0 0.0
  %262 = vmatpush.msra.mxu0 0.0
  %263 = vmatpush.msra.mxu0 0.0
  %264 = vmatpush.msra.mxu0 0.0
  %265 = vmatpush.msra.mxu0 %v122
  %266 = vmatpush.msra.mxu0 %v118
  %267 = vmatpush.msra.mxu0 %v114
  %268 = vmatpush.msra.mxu0 %v110
  %269 = vmatpush.msra.mxu0 %v106
  %270 = vmatpush.msra.mxu0 %v102
  %271 = vmatpush.msra.mxu0 %v98
  %272 = vmatpush.msra.mxu0 %v94
  %273 = vmatpush.msra.mxu0 %v90
  %274 = vmatmul.f32.gmra.mxu0 %v138
  %v275 = vpop.f32.mrf.mxu0
  %v276 = vadd.f32 %v253, %v275
  %277 = vmatmul.f32.gmra.mxu0 %v141
  %v278 = vpop.f32.mrf.mxu0
  %v279 = vadd.f32 %v256, %v278
  %280 = vdwg.mxu0
  %281 = vmatpush.msra.mxu0 %v87
  %282 = vmatpush.msra.mxu0 %v83
  %283 = vmatpush.msra.mxu0 %v79
  %284 = vmatpush.msra.mxu0 %v75
  %285 = vmatpush.msra.mxu0 %v71
  %286 = vmatpush.msra.mxu0 %v67
  %287 = vmatpush.msra.mxu0 %v63
  %288 = vmatpush.msra.mxu0 %v59
  %289 = vmatpush.msra.mxu0 %v55
  %290 = vmatpush.msra.mxu0 %v51
  %291 = vmatpush.msra.mxu0 %v47
  %292 = vmatpush.msra.mxu0 %v43
  %293 = vmatpush.msra.mxu0 %v39
  %294 = vmatpush.msra.mxu0 %v35
  %295 = vmatpush.msra.mxu0 %v31
  %296 = vmatpush.msra.mxu0 %v27
  %297 = vmatmul.f32.gmra.mxu0 %v20
  %v298 = vpop.f32.mrf.mxu0
  %v299 = vadd.f32 %v129, %v298
  %300 = vmatmul.f32.gmra.mxu0 %v22
  %v301 = vpop.f32.mrf.mxu0
  %v302 = vadd.f32 %v134, %v301
  %303 = vdwg.mxu0
  %304 = vmatpush.msra.mxu0 0.0
  %305 = vmatpush.msra.mxu0 0.0
  %306 = vmatpush.msra.mxu0 0.0
  %307 = vmatpush.msra.mxu0 0.0
  %308 = vmatpush.msra.mxu0 0.0
  %309 = vmatpush.msra.mxu0 0.0
  %310 = vmatpush.msra.mxu0 0.0
  %311 = vmatpush.msra.mxu0 %v123
  %312 = vmatpush.msra.mxu0 %v119
  %313 = vmatpush.msra.mxu0 %v115
  %314 = vmatpush.msra.mxu0 %v111
  %315 = vmatpush.msra.mxu0 %v107
  %316 = vmatpush.msra.mxu0 %v103
  %317 = vmatpush.msra.mxu0 %v99
  %318 = vmatpush.msra.mxu0 %v95
  %319 = vmatpush.msra.mxu0 %v91
  %320 = vmatmul.f32.gmra.mxu0 %v138
  %v321 = vpop.f32.mrf.mxu0
  %v322 = vadd.f32 %v299, %v321
  %323 = vmatmul.f32.gmra.mxu0 %v141
  %v324 = vpop.f32.mrf.mxu0
  %v325 = vadd.f32 %v302, %v324
  %326 = vdwg.mxu0
  %v327 = vadd.f32 %v184, %v230
  %v328 = vadd.f32 %v327, %v276
  %vm329 = vcmask 539648
  %v330 = vsel %vm329, %v322, 0.0
  %v331 = vadd.f32 %v328, %v330
  %332 = vadd.xlane.f32.xlu0 %v331
  %v333 = vpop.xlane.xlu0 %332
  %v334 = vadd.f32 %v187, %v233
  %v335 = vadd.f32 %v334, %v279
  %v336 = vsel %vm329, %v325, 0.0
  %v337 = vadd.f32 %v335, %v336
  %338 = vadd.xlane.f32.xlu0 %v337
  %v339 = vpop.xlane.xlu0 %338
  %v340 = vmul.f32 %v184, %v184
  %v341 = vmul.f32 %v230, %v230
  %v342 = vmul.f32 %v276, %v276
  %v343 = vmul.f32 %v322, %v322
  %v344 = vmul.f32 %v187, %v187
  %v345 = vmul.f32 %v233, %v233
  %v346 = vmul.f32 %v279, %v279
  %v347 = vmul.f32 %v325, %v325
  %v348 = vadd.f32 %v340, %v341
  %v349 = vadd.f32 %v348, %v342
  %v350 = vsel %vm329, %v343, 0.0
  %v351 = vadd.f32 %v349, %v350
  %352 = vadd.xlane.f32.xlu0 %v351
  %v353 = vpop.xlane.xlu0 %352
  %v354 = vadd.f32 %v344, %v345
  %v355 = vadd.f32 %v354, %v346
  %v356 = vsel %vm329, %v347, 0.0
  %v357 = vadd.f32 %v355, %v356
  %358 = vadd.xlane.f32.xlu0 %v357
  %v359 = vpop.xlane.xlu0 %358
  %v360 = vmul.f32 %v333, 0.0022222223
  %v361 = vmul.f32 %v339, 0.0022222223
  %v362 = vmul.f32 %v353, 0.0022222223
  %v363 = vmul.f32 %v359, 0.0022222223
  %v364 = vmul.f32 %v360, %v360
  %v365 = vmul.f32 %v361, %v361
  %v366 = vsub.f32 %v362, %v364
  %v367 = vsub.f32 %v363, %v365
  %v368 = vmax.f32 %v366, 0.0
  %v369 = vmax.f32 %v367, 0.0
  %v370 = vadd.f32 %v368, 1e-05
  %v371 = vadd.f32 %v369, 1e-05
  %v372 = vrsqrt.pop %v370
  %v373 = vmul.f32 %v372, %v370
  %v374 = vmul.f32 %v373, %v372
  %v375 = vmul.f32 0.5, %v374
  %v376 = vsub.f32 1.5, %v375
  %v377 = vmul.f32 %v372, %v376
  %vm378 = vweird.f32 %v370
  %vm379 = vweird.f32 %v372
  %vm380 = vmor %vm378, %vm379
  %v381 = vsel %vm380, %v372, %v377
  %v382 = vrsqrt.pop %v371
  %v383 = vmul.f32 %v382, %v371
  %v384 = vmul.f32 %v383, %v382
  %v385 = vmul.f32 0.5, %v384
  %v386 = vsub.f32 1.5, %v385
  %v387 = vmul.f32 %v382, %v386
  %vm388 = vweird.f32 %v371
  %vm389 = vweird.f32 %v382
  %vm390 = vmor %vm388, %vm389
  %v391 = vsel %vm390, %v382, %v387
  %v392 = vld [vmem:[%s3] sm:$0xff]
  %v393 = vld [vmem:[%s3 + $0x8] sm:$0xff]
  %v394 = vmul.f32 %v381, %v392
  %v395 = vmul.f32 %v391, %v393
  %v396 = vld [vmem:[%s4] sm:$0xff]
  %v397 = vld [vmem:[%s4 + $0x8] sm:$0xff]
  %v398 = vmul.f32 %v360, %v394
  %v399 = vmul.f32 %v361, %v395
  %v400 = vsub.f32 %v396, %v398
  %v401 = vsub.f32 %v397, %v399
  %403 = vset.pattern.permute.xlu0 0
  %404 = vperm.xlu0 %403, %v394
  %v405 = vpop.permute.xlu0 %404
  %408 = vset.pattern.permute.xlu0 0
  %409 = vperm.xlu0 %408, %v395
  %v410 = vpop.permute.xlu0 %409
  %v412 = vmul.f32 %v184, %v405
  %v413 = vmul.f32 %v230, %v405
  %v414 = vmul.f32 %v276, %v405
  %v415 = vmul.f32 %v322, %v405
  %v416 = vmul.f32 %v187, %v410
  %v417 = vmul.f32 %v233, %v410
  %v418 = vmul.f32 %v279, %v410
  %v419 = vmul.f32 %v325, %v410
  %421 = vset.pattern.permute.xlu0 0
  %422 = vperm.xlu0 %421, %v400
  %v423 = vpop.permute.xlu0 %422
  %426 = vset.pattern.permute.xlu0 0
  %427 = vperm.xlu0 %426, %v401
  %v428 = vpop.permute.xlu0 %427
  %v430 = vadd.f32 %v412, %v423
  %v431 = vadd.f32 %v413, %v423
  %v432 = vadd.f32 %v414, %v423
  %v433 = vadd.f32 %v415, %v423
  %v434 = vadd.f32 %v416, %v428
  %v435 = vadd.f32 %v417, %v428
  %v436 = vadd.f32 %v418, %v428
  %v437 = vadd.f32 %v419, %v428
  %v438 = vmax.f32 %v430, 0.0
  %v439 = vmax.f32 %v431, 0.0
  %v440 = vmax.f32 %v432, 0.0
  %v441 = vmax.f32 %v433, 0.0
  %v442 = vmax.f32 %v434, 0.0
  %v443 = vmax.f32 %v435, 0.0
  %v444 = vmax.f32 %v436, 0.0
  %v445 = vmax.f32 %v437, 0.0
  %446 = vst [vmem:[%s5] sm:$0xff] %v438
  %447 = vst [vmem:[%s5 + $0x8] sm:$0xff] %v439
  %448 = vst [vmem:[%s5 + $0x10] sm:$0xff] %v440
  %449 = vst.msk [vmem:[%s5 + $0x18] sm:$0xff] %vm329, %v441
  %450 = vst [vmem:[%s5 + $0x20] sm:$0xff] %v442
  %451 = vst [vmem:[%s5 + $0x28] sm:$0xff] %v443
  %452 = vst [vmem:[%s5 + $0x30] sm:$0xff] %v444
  %453 = vst.msk [vmem:[%s5 + $0x38] sm:$0xff] %vm329, %v445
  // Predicated region
  $region22: #{critic_forward.6} parent=0 // pred_check
    _
  $region23: #{critic_forward.6} parent=0 // pred_check_branch
    %455 = sbr.rel (0) target = $region25
  $region24: #{critic_forward.6} parent=0 // pred_region
    _
  $region25: #{critic_forward.6} parent=0 // pred_fallthru
    _
  // Predicated region
  $region26: #{critic_forward.6} parent=0 // pred_check
    _
  $region27: #{critic_forward.6} parent=0 // pred_check_branch
    %457 = sbr.rel (0) target = $region29
  $region28: #{critic_forward.6} parent=0 // pred_region
    _
  $region29: #{critic_forward.6} parent=0 // pred_fallthru
    _

// kernel: critic_forward.7
$region0: #{critic_forward.7}
  #allocation0 [shape = 'u32[]', space=smem, size = 0x4, offset = 0x4, fixed_abs, tag = 'smem constant byte address 0x4 - core index']
  #allocation1 [shape = 'u32[72,128]{1,0:T(1,128)}', space=vmem, size = 0x9000, scoped, tag = 'internal scratch']
  %s0 = inlined_call_operand.vmem [shape: f32[400,98], index: 0, kind: input, shape index: {}]
  %s1 = inlined_call_operand.vmem [shape: f32[32,400], index: 1, kind: input, shape index: {}]
  %s2 = inlined_call_operand.vmem [shape: f32[32,1], index: 2, kind: input, shape index: {}]
  %s3 = inlined_call_operand.vmem [shape: f32[32,1], index: 3, kind: input, shape index: {}]
  %s4 = inlined_call_operand.vmem [shape: f32[32,1], index: 4, kind: input, shape index: {}]
  %s5 = inlined_call_operand.vmem [shape: f32[32,98], index: 5, kind: output, shape index: {}]
  %s6 = sld [smem:[#allocation0]]
  $region30: #{critic_forward.7} parent=0
    _
  %s8 = ssub.s32 1, %s6
  %s9 = scalar_select 0, %s8, %s6
  // Predicated region
  $region2: #{critic_forward.7} parent=0 // pred_check
    _
  $region3: #{critic_forward.7} parent=0 // pred_check_branch
    %11 = sbr.rel (0) target = $region5
  $region4: #{critic_forward.7} parent=0 // pred_region
    _
  $region5: #{critic_forward.7} parent=0 // pred_fallthru
    _
  // Predicated region
  $region6: #{critic_forward.7} parent=0 // pred_check
    _
  $region7: #{critic_forward.7} parent=0 // pred_check_branch
    %13 = sbr.rel (0) target = $region9
  $region8: #{critic_forward.7} parent=0 // pred_region
    _
  $region9: #{critic_forward.7} parent=0 // pred_fallthru
    _
  // Predicated region
  $region10: #{critic_forward.7} parent=0 // pred_check
    _
  $region11: #{critic_forward.7} parent=0 // pred_check_branch
    %15 = sbr.rel (0) target = $region13
  $region12: #{critic_forward.7} parent=0 // pred_region
    _
  $region13: #{critic_forward.7} parent=0 // pred_fallthru
    _
  // Predicated region
  $region14: #{critic_forward.7} parent=0 // pred_check
    _
  $region15: #{critic_forward.7} parent=0 // pred_check_branch
    %17 = sbr.rel (0) target = $region17
  $region16: #{critic_forward.7} parent=0 // pred_region
    _
  $region17: #{critic_forward.7} parent=0 // pred_fallthru
    _
  // Predicated region
  $region18: #{critic_forward.7} parent=0 // pred_check
    _
  $region19: #{critic_forward.7} parent=0 // pred_check_branch
    %19 = sbr.rel (0) target = $region21
  $region20: #{critic_forward.7} parent=0 // pred_region
    _
  $region21: #{critic_forward.7} parent=0 // pred_fallthru
    _
  %v20 = vld [vmem:[%s1] sm:$0xff]
  %v21 = vld [vmem:[%s1 + $0x8] sm:$0xff]
  %v22 = vld [vmem:[%s1 + $0x10] sm:$0xff]
  %v23 = vld [vmem:[%s1 + $0x18] sm:$0xff]
  %v24 = vld [vmem:[%s1 + $0x20] sm:$0xff]
  %v25 = vld [vmem:[%s1 + $0x28] sm:$0xff]
  %v26 = vld [vmem:[%s1 + $0x30] sm:$0xff]
  %v27 = vld [vmem:[%s1 + $0x38] sm:$0xff]
  %v28 = vld [vmem:[%s1 + $0x40] sm:$0xff]
  %v29 = vld [vmem:[%s1 + $0x48] sm:$0xff]
  %v30 = vld [vmem:[%s1 + $0x50] sm:$0xff]
  %v31 = vld [vmem:[%s1 + $0x58] sm:$0xff]
  %v32 = vld [vmem:[%s1 + $0x60] sm:$0xff]
  %v33 = vld [vmem:[%s1 + $0x68] sm:$0xff]
  %v34 = vld [vmem:[%s1 + $0x70] sm:$0xff]
  %v35 = vld [vmem:[%s1 + $0x78] sm:$0xff]
  %v36 = vld [vmem:[%s0] sm:$0xff]
  %v37 = vld [vmem:[%s0 + $0x8] sm:$0xff]
  %v38 = vld [vmem:[%s0 + $0x10] sm:$0xff]
  %v39 = vld [vmem:[%s0 + $0x18] sm:$0xff]
  %v40 = vld [vmem:[%s0 + $0x20] sm:$0xff]
  %v41 = vld [vmem:[%s0 + $0x28] sm:$0xff]
  %v42 = vld [vmem:[%s0 + $0x30] sm:$0xff]
  %v43 = vld [vmem:[%s0 + $0x38] sm:$0xff]
  %v44 = vld [vmem:[%s0 + $0x40] sm:$0xff]
  %v45 = vld [vmem:[%s0 + $0x48] sm:$0xff]
  %v46 = vld [vmem:[%s0 + $0x50] sm:$0xff]
  %v47 = vld [vmem:[%s0 + $0x58] sm:$0xff]
  %v48 = vld [vmem:[%s0 + $0x60] sm:$0xff]
  %v49 = vld [vmem:[%s0 + $0x68] sm:$0xff]
  %v50 = vld [vmem:[%s0 + $0x70] sm:$0xff]
  %v51 = vld [vmem:[%s0 + $0x78] sm:$0xff]
  %v52 = vld [vmem:[%s0 + $0x80] sm:$0xff]
  %v53 = vld [vmem:[%s0 + $0x88] sm:$0xff]
  %v54 = vld [vmem:[%s0 + $0x90] sm:$0xff]
  %v55 = vld [vmem:[%s0 + $0x98] sm:$0xff]
  %v56 = vld [vmem:[%s0 + $0xa0] sm:$0xff]
  %v57 = vld [vmem:[%s0 + $0xa8] sm:$0xff]
  %v58 = vld [vmem:[%s0 + $0xb0] sm:$0xff]
  %v59 = vld [vmem:[%s0 + $0xb8] sm:$0xff]
  %v60 = vld [vmem:[%s0 + $0xc0] sm:$0xff]
  %v61 = vld [vmem:[%s0 + $0xc8] sm:$0xff]
  %v62 = vld [vmem:[%s0 + $0xd0] sm:$0xff]
  %v63 = vld [vmem:[%s0 + $0xd8] sm:$0xff]
  %v64 = vld [vmem:[%s0 + $0xe0] sm:$0xff]
  %v65 = vld [vmem:[%s0 + $0xe8] sm:$0xff]
  %v66 = vld [vmem:[%s0 + $0xf0] sm:$0xff]
  %v67 = vld [vmem:[%s0 + $0xf8] sm:$0xff]
  %v68 = vld [vmem:[%s0 + $0x100] sm:$0xff]
  %v69 = vld [vmem:[%s0 + $0x108] sm:$0xff]
  %v70 = vld [vmem:[%s0 + $0x110] sm:$0xff]
  %v71 = vld [vmem:[%s0 + $0x118] sm:$0xff]
  %v72 = vld [vmem:[%s0 + $0x120] sm:$0xff]
  %v73 = vld [vmem:[%s0 + $0x128] sm:$0xff]
  %v74 = vld [vmem:[%s0 + $0x130] sm:$0xff]
  %v75 = vld [vmem:[%s0 + $0x138] sm:$0xff]
  %v76 = vld [vmem:[%s0 + $0x140] sm:$0xff]
  %v77 = vld [vmem:[%s0 + $0x148] sm:$0xff]
  %v78 = vld [vmem:[%s0 + $0x150] sm:$0xff]
  %v79 = vld [vmem:[%s0 + $0x158] sm:$0xff]
  %v80 = vld [vmem:[%s0 + $0x160] sm:$0xff]
  %v81 = vld [vmem:[%s0 + $0x168] sm:$0xff]
  %v82 = vld [vmem:[%s0 + $0x170] sm:$0xff]
  %v83 = vld [vmem:[%s0 + $0x178] sm:$0xff]
  %v84 = vld [vmem:[%s0 + $0x180] sm:$0xff]
  %v85 = vld [vmem:[%s0 + $0x188] sm:$0xff]
  %v86 = vld [vmem:[%s2] sm:$0xff]
  %v87 = vld [vmem:[%s2 + $0x8] sm:$0xff]
  %v88 = vld [vmem:[%s2 + $0x10] sm:$0xff]
  %v89 = vld [vmem:[%s2 + $0x18] sm:$0xff]
  %91 = vset.pattern.permute.xlu0 0
  %92 = vperm.xlu0 %91, %v86
  %v93 = vpop.permute.xlu0 %92
  %96 = vset.pattern.permute.xlu0 0
  %97 = vperm.xlu0 %96, %v87
  %v98 = vpop.permute.xlu0 %97
  %101 = vset.pattern.permute.xlu0 0
  %102 = vperm.xlu0 %101, %v88
  %v103 = vpop.permute.xlu0 %102
  %106 = vset.pattern.permute.xlu0 0
  %107 = vperm.xlu0 %106, %v89
  %v108 = vpop.permute.xlu0 %107
  %vm110 = vcmask 130048
  %v112 = vsel %vm110, %v23, 0
  %v115 = vsel %vm110, %v27, 0
  %v118 = vsel %vm110, %v31, 0
  %v121 = vsel %vm110, %v35, 0
  %123 = vmatpush.msra.mxu0 %v51
  %124 = vmatpush.msra.mxu0 %v50
  %125 = vmatpush.msra.mxu0 %v49
  %126 = vmatpush.msra.mxu0 %v48
  %127 = vmatpush.msra.mxu0 %v47
  %128 = vmatpush.msra.mxu0 %v46
  %129 = vmatpush.msra.mxu0 %v45
  %130 = vmatpush.msra.mxu0 %v44
  %131 = vmatpush.msra.mxu0 %v43
  %132 = vmatpush.msra.mxu0 %v42
  %133 = vmatpush.msra.mxu0 %v41
  %134 = vmatpush.msra.mxu0 %v40
  %135 = vmatpush.msra.mxu0 %v39
  %136 = vmatpush.msra.mxu0 %v38
  %137 = vmatpush.msra.mxu0 %v37
  %138 = vmatpush.msra.mxu0 %v36
  %139 = vmatmul.f32.gmra.mxu0 %v20
  %v140 = vpop.f32.mrf.mxu0
  %v141 = vadd.f32 %v93, %v140
  %142 = vmatmul.f32.gmra.mxu0 %v24
  %v143 = vpop.f32.mrf.mxu0
  %v144 = vadd.f32 %v98, %v143
  %145 = vmatmul.f32.gmra.mxu0 %v28
  %v146 = vpop.f32.mrf.mxu0
  %v147 = vadd.f32 %v103, %v146
  %148 = vmatmul.f32.gmra.mxu0 %v32
  %v149 = vpop.f32.mrf.mxu0
  %v150 = vadd.f32 %v108, %v149
  %151 = vdwg.mxu0
  %152 = vmatpush.msra.mxu0 %v67
  %153 = vmatpush.msra.mxu0 %v66
  %154 = vmatpush.msra.mxu0 %v65
  %155 = vmatpush.msra.mxu0 %v64
  %156 = vmatpush.msra.mxu0 %v63
  %157 = vmatpush.msra.mxu0 %v62
  %158 = vmatpush.msra.mxu0 %v61
  %159 = vmatpush.msra.mxu0 %v60
  %160 = vmatpush.msra.mxu0 %v59
  %161 = vmatpush.msra.mxu0 %v58
  %162 = vmatpush.msra.mxu0 %v57
  %163 = vmatpush.msra.mxu0 %v56
  %164 = vmatpush.msra.mxu0 %v55
  %165 = vmatpush.msra.mxu0 %v54
  %166 = vmatpush.msra.mxu0 %v53
  %167 = vmatpush.msra.mxu0 %v52
  %168 = vmatmul.f32.gmra.mxu0 %v21
  %v169 = vpop.f32.mrf.mxu0
  %v170 = vadd.f32 %v141, %v169
  %171 = vmatmul.f32.gmra.mxu0 %v25
  %v172 = vpop.f32.mrf.mxu0
  %v173 = vadd.f32 %v144, %v172
  %174 = vmatmul.f32.gmra.mxu0 %v29
  %v175 = vpop.f32.mrf.mxu0
  %v176 = vadd.f32 %v147, %v175
  %177 = vmatmul.f32.gmra.mxu0 %v33
  %v178 = vpop.f32.mrf.mxu0
  %v179 = vadd.f32 %v150, %v178
  %180 = vdwg.mxu0
  %181 = vmatpush.msra.mxu0 %v83
  %182 = vmatpush.msra.mxu0 %v82
  %183 = vmatpush.msra.mxu0 %v81
  %184 = vmatpush.msra.mxu0 %v80
  %185 = vmatpush.msra.mxu0 %v79
  %186 = vmatpush.msra.mxu0 %v78
  %187 = vmatpush.msra.mxu0 %v77
  %188 = vmatpush.msra.mxu0 %v76
  %189 = vmatpush.msra.mxu0 %v75
  %190 = vmatpush.msra.mxu0 %v74
  %191 = vmatpush.msra.mxu0 %v73
  %192 = vmatpush.msra.mxu0 %v72
  %193 = vmatpush.msra.mxu0 %v71
  %194 = vmatpush.msra.mxu0 %v70
  %195 = vmatpush.msra.mxu0 %v69
  %196 = vmatpush.msra.mxu0 %v68
  %197 = vmatmul.f32.gmra.mxu0 %v22
  %v198 = vpop.f32.mrf.mxu0
  %v199 = vadd.f32 %v170, %v198
  %200 = vmatmul.f32.gmra.mxu0 %v26
  %v201 = vpop.f32.mrf.mxu0
  %v202 = vadd.f32 %v173, %v201
  %203 = vmatmul.f32.gmra.mxu0 %v30
  %v204 = vpop.f32.mrf.mxu0
  %v205 = vadd.f32 %v176, %v204
  %206 = vmatmul.f32.gmra.mxu0 %v34
  %v207 = vpop.f32.mrf.mxu0
  %v208 = vadd.f32 %v179, %v207
  %209 = vdwg.mxu0
  %210 = vmatpush.msra.mxu0 0.0
  %211 = vmatpush.msra.mxu0 0.0
  %212 = vmatpush.msra.mxu0 0.0
  %213 = vmatpush.msra.mxu0 0.0
  %214 = vmatpush.msra.mxu0 0.0
  %215 = vmatpush.msra.mxu0 0.0
  %216 = vmatpush.msra.mxu0 0.0
  %217 = vmatpush.msra.mxu0 0.0
  %218 = vmatpush.msra.mxu0 0.0
  %219 = vmatpush.msra.mxu0 0.0
  %220 = vmatpush.msra.mxu0 0.0
  %221 = vmatpush.msra.mxu0 0.0
  %222 = vmatpush.msra.mxu0 0.0
  %223 = vmatpush.msra.mxu0 0.0
  %224 = vmatpush.msra.mxu0 %v85
  %225 = vmatpush.msra.mxu0 %v84
  %226 = vmatmul.f32.gmra.mxu0 %v112
  %v227 = vpop.f32.mrf.mxu0
  %v228 = vadd.f32 %v199, %v227
  %229 = vmatmul.f32.gmra.mxu0 %v115
  %v230 = vpop.f32.mrf.mxu0
  %v231 = vadd.f32 %v202, %v230
  %232 = vmatmul.f32.gmra.mxu0 %v118
  %v233 = vpop.f32.mrf.mxu0
  %v234 = vadd.f32 %v205, %v233
  %235 = vmatmul.f32.gmra.mxu0 %v121
  %v236 = vpop.f32.mrf.mxu0
  %v237 = vadd.f32 %v208, %v236
  %238 = vdwg.mxu0
  %vm239 = vcmask 801792
  %v240 = vsel %vm239, %v228, 0.0
  %241 = vadd.xlane.f32.xlu0 %v240
  %v242 = vpop.xlane.xlu0 %241
  %v243 = vsel %vm239, %v231, 0.0
  %244 = vadd.xlane.f32.xlu0 %v243
  %v245 = vpop.xlane.xlu0 %244
  %v246 = vsel %vm239, %v234, 0.0
  %247 = vadd.xlane.f32.xlu0 %v246
  %v248 = vpop.xlane.xlu0 %247
  %v249 = vsel %vm239, %v237, 0.0
  %250 = vadd.xlane.f32.xlu0 %v249
  %v251 = vpop.xlane.xlu0 %250
  %v252 = vmul.f32 %v228, %v228
  %v253 = vmul.f32 %v231, %v231
  %v254 = vmul.f32 %v234, %v234
  %v255 = vmul.f32 %v237, %v237
  %v256 = vsel %vm239, %v252, 0.0
  %257 = vadd.xlane.f32.xlu0 %v256
  %v258 = vpop.xlane.xlu0 %257
  %v259 = vsel %vm239, %v253, 0.0
  %260 = vadd.xlane.f32.xlu0 %v259
  %v261 = vpop.xlane.xlu0 %260
  %v262 = vsel %vm239, %v254, 0.0
  %263 = vadd.xlane.f32.xlu0 %v262
  %v264 = vpop.xlane.xlu0 %263
  %v265 = vsel %vm239, %v255, 0.0
  %266 = vadd.xlane.f32.xlu0 %v265
  %v267 = vpop.xlane.xlu0 %266
  %v268 = vmul.f32 %v242, 0.010204081
  %v269 = vmul.f32 %v245, 0.010204081
  %v270 = vmul.f32 %v248, 0.010204081
  %v271 = vmul.f32 %v251, 0.010204081
  %v272 = vmul.f32 %v258, 0.010204081
  %v273 = vmul.f32 %v261, 0.010204081
  %v274 = vmul.f32 %v264, 0.010204081
  %v275 = vmul.f32 %v267, 0.010204081
  %v276 = vmul.f32 %v268, %v268
  %v277 = vmul.f32 %v269, %v269
  %v278 = vmul.f32 %v270, %v270
  %v279 = vmul.f32 %v271, %v271
  %v280 = vsub.f32 %v272, %v276
  %v281 = vsub.f32 %v273, %v277
  %v282 = vsub.f32 %v274, %v278
  %v283 = vsub.f32 %v275, %v279
  %v284 = vmax.f32 %v280, 0.0
  %v285 = vmax.f32 %v281, 0.0
  %v286 = vmax.f32 %v282, 0.0
  %v287 = vmax.f32 %v283, 0.0
  %v288 = vadd.f32 %v284, 1e-05
  %v289 = vadd.f32 %v285, 1e-05
  %v290 = vadd.f32 %v286, 1e-05
  %v291 = vadd.f32 %v287, 1e-05
  %v292 = vrsqrt.pop %v288
  %v293 = vmul.f32 %v292, %v288
  %v294 = vmul.f32 %v293, %v292
  %v295 = vmul.f32 0.5, %v294
  %v296 = vsub.f32 1.5, %v295
  %v297 = vmul.f32 %v292, %v296
  %vm298 = vweird.f32 %v288
  %vm299 = vweird.f32 %v292
  %vm300 = vmor %vm298, %vm299
  %v301 = vsel %vm300, %v292, %v297
  %v302 = vrsqrt.pop %v289
  %v303 = vmul.f32 %v302, %v289
  %v304 = vmul.f32 %v303, %v302
  %v305 = vmul.f32 0.5, %v304
  %v306 = vsub.f32 1.5, %v305
  %v307 = vmul.f32 %v302, %v306
  %vm308 = vweird.f32 %v289
  %vm309 = vweird.f32 %v302
  %vm310 = vmor %vm308, %vm309
  %v311 = vsel %vm310, %v302, %v307
  %v312 = vrsqrt.pop %v290
  %v313 = vmul.f32 %v312, %v290
  %v314 = vmul.f32 %v313, %v312
  %v315 = vmul.f32 0.5, %v314
  %v316 = vsub.f32 1.5, %v315
  %v317 = vmul.f32 %v312, %v316
  %vm318 = vweird.f32 %v290
  %vm319 = vweird.f32 %v312
  %vm320 = vmor %vm318, %vm319
  %v321 = vsel %vm320, %v312, %v317
  %v322 = vrsqrt.pop %v291
  %v323 = vmul.f32 %v322, %v291
  %v324 = vmul.f32 %v323, %v322
  %v325 = vmul.f32 0.5, %v324
  %v326 = vsub.f32 1.5, %v325
  %v327 = vmul.f32 %v322, %v326
  %vm328 = vweird.f32 %v291
  %vm329 = vweird.f32 %v322
  %vm330 = vmor %vm328, %vm329
  %v331 = vsel %vm330, %v322, %v327
  %v332 = vld [vmem:[%s3] sm:$0xff]
  %v333 = vld [vmem:[%s3 + $0x8] sm:$0xff]
  %v334 = vld [vmem:[%s3 + $0x10] sm:$0xff]
  %v335 = vld [vmem:[%s3 + $0x18] sm:$0xff]
  %v336 = vmul.f32 %v301, %v332
  %v337 = vmul.f32 %v311, %v333
  %v338 = vmul.f32 %v321, %v334
  %v339 = vmul.f32 %v331, %v335
  %v340 = vld [vmem:[%s4] sm:$0xff]
  %v341 = vld [vmem:[%s4 + $0x8] sm:$0xff]
  %v342 = vld [vmem:[%s4 + $0x10] sm:$0xff]
  %v343 = vld [vmem:[%s4 + $0x18] sm:$0xff]
  %v344 = vmul.f32 %v268, %v336
  %v345 = vmul.f32 %v269, %v337
  %v346 = vmul.f32 %v270, %v338
  %v347 = vmul.f32 %v271, %v339
  %v348 = vsub.f32 %v340, %v344
  %v349 = vsub.f32 %v341, %v345
  %v350 = vsub.f32 %v342, %v346
  %v351 = vsub.f32 %v343, %v347
  %353 = vset.pattern.permute.xlu0 0
  %354 = vperm.xlu0 %353, %v336
  %v355 = vpop.permute.xlu0 %354
  %358 = vset.pattern.permute.xlu0 0
  %359 = vperm.xlu0 %358, %v337
  %v360 = vpop.permute.xlu0 %359
  %363 = vset.pattern.permute.xlu0 0
  %364 = vperm.xlu0 %363, %v338
  %v365 = vpop.permute.xlu0 %364
  %368 = vset.pattern.permute.xlu0 0
  %369 = vperm.xlu0 %368, %v339
  %v370 = vpop.permute.xlu0 %369
  %v372 = vmul.f32 %v228, %v355
  %v373 = vmul.f32 %v231, %v360
  %v374 = vmul.f32 %v234, %v365
  %v375 = vmul.f32 %v237, %v370
  %377 = vset.pattern.permute.xlu0 0
  %378 = vperm.xlu0 %377, %v348
  %v379 = vpop.permute.xlu0 %378
  %382 = vset.pattern.permute.xlu0 0
  %383 = vperm.xlu0 %382, %v349
  %v384 = vpop.permute.xlu0 %383
  %387 = vset.pattern.permute.xlu0 0
  %388 = vperm.xlu0 %387, %v350
  %v389 = vpop.permute.xlu0 %388
  %392 = vset.pattern.permute.xlu0 0
  %393 = vperm.xlu0 %392, %v351
  %v394 = vpop.permute.xlu0 %393
  %v396 = vadd.f32 %v372, %v379
  %v397 = vadd.f32 %v373, %v384
  %v398 = vadd.f32 %v374, %v389
  %v399 = vadd.f32 %v375, %v394
  %v400 = vmax.f32 %v396, 0.0
  %v401 = vmax.f32 %v397, 0.0
  %v402 = vmax.f32 %v398, 0.0
  %v403 = vmax.f32 %v399, 0.0
  %404 = vst.msk [vmem:[%s5] sm:$0xff] %vm239, %v400
  %405 = vst.msk [vmem:[%s5 + $0x8] sm:$0xff] %vm239, %v401
  %406 = vst.msk [vmem:[%s5 + $0x10] sm:$0xff] %vm239, %v402
  %407 = vst.msk [vmem:[%s5 + $0x18] sm:$0xff] %vm239, %v403
  // Predicated region
  $region22: #{critic_forward.7} parent=0 // pred_check
    _
  $region23: #{critic_forward.7} parent=0 // pred_check_branch
    %409 = sbr.rel (0) target = $region25
  $region24: #{critic_forward.7} parent=0 // pred_region
    _
  $region25: #{critic_forward.7} parent=0 // pred_fallthru
    _
  // Predicated region
  $region26: #{critic_forward.7} parent=0 // pred_check
    _
  $region27: #{critic_forward.7} parent=0 // pred_check_branch
    %411 = sbr.rel (0) target = $region29
  $region28: #{critic_forward.7} parent=0 // pred_region
    _
  $region29: #{critic_forward.7} parent=0 // pred_fallthru
    _

// kernel: critic_forward.8
$region0: #{critic_forward.8}
  #allocation0 [shape = 'u32[]', space=smem, size = 0x4, offset = 0x4, fixed_abs, tag = 'smem constant byte address 0x4 - core index']
  #allocation1 [shape = 'u32[72,128]{1,0:T(1,128)}', space=vmem, size = 0x9000, scoped, tag = 'internal scratch']
  %s0 = inlined_call_operand.vmem [shape: f32[800,18], index: 0, kind: input, shape index: {}]
  %s1 = inlined_call_operand.vmem [shape: f32[64,800], index: 1, kind: input, shape index: {}]
  %s2 = inlined_call_operand.vmem [shape: f32[64,1], index: 2, kind: input, shape index: {}]
  %s3 = inlined_call_operand.vmem [shape: f32[64,1], index: 3, kind: input, shape index: {}]
  %s4 = inlined_call_operand.vmem [shape: f32[64,1], index: 4, kind: input, shape index: {}]
  %s5 = inlined_call_operand.vmem [shape: f32[64,18], index: 5, kind: output, shape index: {}]
  %s6 = sld [smem:[#allocation0]]
  $region30: #{critic_forward.8} parent=0
    _
  %s8 = ssub.s32 1, %s6
  %s9 = scalar_select 0, %s8, %s6
  // Predicated region
  $region2: #{critic_forward.8} parent=0 // pred_check
    _
  $region3: #{critic_forward.8} parent=0 // pred_check_branch
    %11 = sbr.rel (0) target = $region5
  $region4: #{critic_forward.8} parent=0 // pred_region
    _
  $region5: #{critic_forward.8} parent=0 // pred_fallthru
    _
  // Predicated region
  $region6: #{critic_forward.8} parent=0 // pred_check
    _
  $region7: #{critic_forward.8} parent=0 // pred_check_branch
    %13 = sbr.rel (0) target = $region9
  $region8: #{critic_forward.8} parent=0 // pred_region
    _
  $region9: #{critic_forward.8} parent=0 // pred_fallthru
    _
  // Predicated region
  $region10: #{critic_forward.8} parent=0 // pred_check
    _
  $region11: #{critic_forward.8} parent=0 // pred_check_branch
    %15 = sbr.rel (0) target = $region13
  $region12: #{critic_forward.8} parent=0 // pred_region
    _
  $region13: #{critic_forward.8} parent=0 // pred_fallthru
    _
  // Predicated region
  $region14: #{critic_forward.8} parent=0 // pred_check
    _
  $region15: #{critic_forward.8} parent=0 // pred_check_branch
    %17 = sbr.rel (0) target = $region17
  $region16: #{critic_forward.8} parent=0 // pred_region
    _
  $region17: #{critic_forward.8} parent=0 // pred_fallthru
    _
  // Predicated region
  $region18: #{critic_forward.8} parent=0 // pred_check
    _
  $region19: #{critic_forward.8} parent=0 // pred_check_branch
    %19 = sbr.rel (0) target = $region21
  $region20: #{critic_forward.8} parent=0 // pred_region
    _
  $region21: #{critic_forward.8} parent=0 // pred_fallthru
    _
  %v20 = vld [vmem:[%s1] sm:$0xff]
  %v21 = vld [vmem:[%s1 + $0x8] sm:$0xff]
  %v22 = vld [vmem:[%s1 + $0x10] sm:$0xff]
  %v23 = vld [vmem:[%s1 + $0x18] sm:$0xff]
  %v24 = vld [vmem:[%s1 + $0x20] sm:$0xff]
  %v25 = vld [vmem:[%s1 + $0x28] sm:$0xff]
  %v26 = vld [vmem:[%s1 + $0x30] sm:$0xff]
  %v27 = vld [vmem:[%s1 + $0x38] sm:$0xff]
  %v28 = vld [vmem:[%s1 + $0x40] sm:$0xff]
  %v29 = vld [vmem:[%s1 + $0x48] sm:$0xff]
  %v30 = vld [vmem:[%s1 + $0x50] sm:$0xff]
  %v31 = vld [vmem:[%s1 + $0x58] sm:$0xff]
  %v32 = vld [vmem:[%s1 + $0x60] sm:$0xff]
  %v33 = vld [vmem:[%s1 + $0x68] sm:$0xff]
  %v34 = vld [vmem:[%s1 + $0x70] sm:$0xff]
  %v35 = vld [vmem:[%s1 + $0x78] sm:$0xff]
  %v36 = vld [vmem:[%s1 + $0x80] sm:$0xff]
  %v37 = vld [vmem:[%s1 + $0x88] sm:$0xff]
  %v38 = vld [vmem:[%s1 + $0x90] sm:$0xff]
  %v39 = vld [vmem:[%s1 + $0x98] sm:$0xff]
  %v40 = vld [vmem:[%s1 + $0xa0] sm:$0xff]
  %v41 = vld [vmem:[%s1 + $0xa8] sm:$0xff]
  %v42 = vld [vmem:[%s1 + $0xb0] sm:$0xff]
  %v43 = vld [vmem:[%s1 + $0xb8] sm:$0xff]
  %v44 = vld [vmem:[%s1 + $0xc0] sm:$0xff]
  %v45 = vld [vmem:[%s1 + $0xc8] sm:$0xff]
  %v46 = vld [vmem:[%s1 + $0xd0] sm:$0xff]
  %v47 = vld [vmem:[%s1 + $0xd8] sm:$0xff]
  %v48 = vld [vmem:[%s1 + $0xe0] sm:$0xff]
  %v49 = vld [vmem:[%s1 + $0xe8] sm:$0xff]
  %v50 = vld [vmem:[%s1 + $0xf0] sm:$0xff]
  %v51 = vld [vmem:[%s1 + $0xf8] sm:$0xff]
  %v52 = vld [vmem:[%s1 + $0x100] sm:$0xff]
  %v53 = vld [vmem:[%s1 + $0x108] sm:$0xff]
  %v54 = vld [vmem:[%s1 + $0x110] sm:$0xff]
  %v55 = vld [vmem:[%s1 + $0x118] sm:$0xff]
  %v56 = vld [vmem:[%s1 + $0x120] sm:$0xff]
  %v57 = vld [vmem:[%s1 + $0x128] sm:$0xff]
  %v58 = vld [vmem:[%s1 + $0x130] sm:$0xff]
  %v59 = vld [vmem:[%s1 + $0x138] sm:$0xff]
  %v60 = vld [vmem:[%s1 + $0x140] sm:$0xff]
  %v61 = vld [vmem:[%s1 + $0x148] sm:$0xff]
  %v62 = vld [vmem:[%s1 + $0x150] sm:$0xff]
  %v63 = vld [vmem:[%s1 + $0x158] sm:$0xff]
  %v64 = vld [vmem:[%s1 + $0x160] sm:$0xff]
  %v65 = vld [vmem:[%s1 + $0x168] sm:$0xff]
  %v66 = vld [vmem:[%s1 + $0x170] sm:$0xff]
  %v67 = vld [vmem:[%s1 + $0x178] sm:$0xff]
  %v68 = vld [vmem:[%s1 + $0x180] sm:$0xff]
  %v69 = vld [vmem:[%s1 + $0x188] sm:$0xff]
  %v70 = vld [vmem:[%s1 + $0x190] sm:$0xff]
  %v71 = vld [vmem:[%s1 + $0x198] sm:$0xff]
  %v72 = vld [vmem:[%s1 + $0x1a0] sm:$0xff]
  %v73 = vld [vmem:[%s1 + $0x1a8] sm:$0xff]
  %v74 = vld [vmem:[%s1 + $0x1b0] sm:$0xff]
  %v75 = vld [vmem:[%s1 + $0x1b8] sm:$0xff]
  %v76 = vld [vmem:[%s0] sm:$0xff]
  %v77 = vld [vmem:[%s0 + $0x8] sm:$0xff]
  %v78 = vld [vmem:[%s0 + $0x10] sm:$0xff]
  %v79 = vld [vmem:[%s0 + $0x18] sm:$0xff]
  %v80 = vld [vmem:[%s0 + $0x20] sm:$0xff]
  %v81 = vld [vmem:[%s0 + $0x28] sm:$0xff]
  %v82 = vld [vmem:[%s0 + $0x30] sm:$0xff]
  %v83 = vld [vmem:[%s0 + $0x38] sm:$0xff]
  %v84 = vld [vmem:[%s0 + $0x40] sm:$0xff]
  %v85 = vld [vmem:[%s0 + $0x48] sm:$0xff]
  %v86 = vld [vmem:[%s0 + $0x50] sm:$0xff]
  %v87 = vld [vmem:[%s0 + $0x58] sm:$0xff]
  %v88 = vld [vmem:[%s0 + $0x60] sm:$0xff]
  %v89 = vld [vmem:[%s0 + $0x68] sm:$0xff]
  %v90 = vld [vmem:[%s0 + $0x70] sm:$0xff]
  %v91 = vld [vmem:[%s0 + $0x78] sm:$0xff]
  %v92 = vld [vmem:[%s0 + $0x80] sm:$0xff]
  %v93 = vld [vmem:[%s0 + $0x88] sm:$0xff]
  %v94 = vld [vmem:[%s0 + $0x90] sm:$0xff]
  %v95 = vld [vmem:[%s0 + $0x98] sm:$0xff]
  %v96 = vld [vmem:[%s0 + $0xa0] sm:$0xff]
  %v97 = vld [vmem:[%s0 + $0xa8] sm:$0xff]
  %v98 = vld [vmem:[%s0 + $0xb0] sm:$0xff]
  %v99 = vld [vmem:[%s0 + $0xb8] sm:$0xff]
  %v100 = vld [vmem:[%s0 + $0xc0] sm:$0xff]
  %v101 = vld [vmem:[%s0 + $0xc8] sm:$0xff]
  %v102 = vld [vmem:[%s0 + $0xd0] sm:$0xff]
  %v103 = vld [vmem:[%s0 + $0xd8] sm:$0xff]
  %v104 = vld [vmem:[%s0 + $0xe0] sm:$0xff]
  %v105 = vld [vmem:[%s0 + $0xe8] sm:$0xff]
  %v106 = vld [vmem:[%s0 + $0xf0] sm:$0xff]
  %v107 = vld [vmem:[%s0 + $0xf8] sm:$0xff]
  %v108 = vld [vmem:[%s0 + $0x100] sm:$0xff]
  %v109 = vld [vmem:[%s0 + $0x108] sm:$0xff]
  %v110 = vld [vmem:[%s0 + $0x110] sm:$0xff]
  %v111 = vld [vmem:[%s0 + $0x118] sm:$0xff]
  %v112 = vld [vmem:[%s0 + $0x120] sm:$0xff]
  %v113 = vld [vmem:[%s0 + $0x128] sm:$0xff]
  %v114 = vld [vmem:[%s0 + $0x130] sm:$0xff]
  %v115 = vld [vmem:[%s0 + $0x138] sm:$0xff]
  %v116 = vld [vmem:[%s0 + $0x140] sm:$0xff]
  %v117 = vld [vmem:[%s0 + $0x148] sm:$0xff]
  %v118 = vld [vmem:[%s0 + $0x150] sm:$0xff]
  %v119 = vld [vmem:[%s0 + $0x158] sm:$0xff]
  %v120 = vld [vmem:[%s0 + $0x160] sm:$0xff]
  %v121 = vld [vmem:[%s0 + $0x168] sm:$0xff]
  %v122 = vld [vmem:[%s0 + $0x170] sm:$0xff]
  %v123 = vld [vmem:[%s0 + $0x178] sm:$0xff]
  %v124 = vld [vmem:[%s0 + $0x180] sm:$0xff]
  %v125 = vld [vmem:[%s0 + $0x188] sm:$0xff]
  %v126 = vld [vmem:[%s0 + $0x190] sm:$0xff]
  %v127 = vld [vmem:[%s0 + $0x198] sm:$0xff]
  %v128 = vld [vmem:[%s0 + $0x1a0] sm:$0xff]
  %v129 = vld [vmem:[%s0 + $0x1a8] sm:$0xff]
  %v130 = vld [vmem:[%s0 + $0x1b0] sm:$0xff]
  %v131 = vld [vmem:[%s0 + $0x1b8] sm:$0xff]
  %v132 = vld [vmem:[%s0 + $0x1c0] sm:$0xff]
  %v133 = vld [vmem:[%s0 + $0x1c8] sm:$0xff]
  %v134 = vld [vmem:[%s0 + $0x1d0] sm:$0xff]
  %v135 = vld [vmem:[%s0 + $0x1d8] sm:$0xff]
  %v136 = vld [vmem:[%s0 + $0x1e0] sm:$0xff]
  %v137 = vld [vmem:[%s0 + $0x1e8] sm:$0xff]
  %v138 = vld [vmem:[%s0 + $0x1f0] sm:$0xff]
  %v139 = vld [vmem:[%s0 + $0x1f8] sm:$0xff]
  %v140 = vld [vmem:[%s0 + $0x200] sm:$0xff]
  %v141 = vld [vmem:[%s0 + $0x208] sm:$0xff]
  %v142 = vld [vmem:[%s0 + $0x210] sm:$0xff]
  %v143 = vld [vmem:[%s0 + $0x218] sm:$0xff]
  %v144 = vld [vmem:[%s0 + $0x220] sm:$0xff]
  %v145 = vld [vmem:[%s0 + $0x228] sm:$0xff]
  %v146 = vld [vmem:[%s0 + $0x230] sm:$0xff]
  %v147 = vld [vmem:[%s0 + $0x238] sm:$0xff]
  %v148 = vld [vmem:[%s0 + $0x240] sm:$0xff]
  %v149 = vld [vmem:[%s0 + $0x248] sm:$0xff]
  %v150 = vld [vmem:[%s0 + $0x250] sm:$0xff]
  %v151 = vld [vmem:[%s0 + $0x258] sm:$0xff]
  %v152 = vld [vmem:[%s0 + $0x260] sm:$0xff]
  %v153 = vld [vmem:[%s0 + $0x268] sm:$0xff]
  %v154 = vld [vmem:[%s0 + $0x270] sm:$0xff]
  %v155 = vld [vmem:[%s0 + $0x278] sm:$0xff]
  %v156 = vld [vmem:[%s0 + $0x280] sm:$0xff]
  %v157 = vld [vmem:[%s0 + $0x288] sm:$0xff]
  %v158 = vld [vmem:[%s0 + $0x290] sm:$0xff]
  %v159 = vld [vmem:[%s0 + $0x298] sm:$0xff]
  %v160 = vld [vmem:[%s0 + $0x2a0] sm:$0xff]
  %v161 = vld [vmem:[%s0 + $0x2a8] sm:$0xff]
  %v162 = vld [vmem:[%s0 + $0x2b0] sm:$0xff]
  %v163 = vld [vmem:[%s0 + $0x2b8] sm:$0xff]
  %v164 = vld [vmem:[%s0 + $0x2c0] sm:$0xff]
  %v165 = vld [vmem:[%s0 + $0x2c8] sm:$0xff]
  %v166 = vld [vmem:[%s0 + $0x2d0] sm:$0xff]
  %v167 = vld [vmem:[%s0 + $0x2d8] sm:$0xff]
  %v168 = vld [vmem:[%s0 + $0x2e0] sm:$0xff]
  %v169 = vld [vmem:[%s0 + $0x2e8] sm:$0xff]
  %v170 = vld [vmem:[%s0 + $0x2f0] sm:$0xff]
  %v171 = vld [vmem:[%s0 + $0x2f8] sm:$0xff]
  %v172 = vld [vmem:[%s0 + $0x300] sm:$0xff]
  %v173 = vld [vmem:[%s0 + $0x308] sm:$0xff]
  %v174 = vld [vmem:[%s0 + $0x310] sm:$0xff]
  %v175 = vld [vmem:[%s0 + $0x318] sm:$0xff]
  %v176 = vld [vmem:[%s2] sm:$0xff]
  %v177 = vld [vmem:[%s2 + $0x8] sm:$0xff]
  %v178 = vld [vmem:[%s2 + $0x10] sm:$0xff]
  %v179 = vld [vmem:[%s2 + $0x18] sm:$0xff]
  %v180 = vld [vmem:[%s2 + $0x20] sm:$0xff]
  %v181 = vld [vmem:[%s2 + $0x28] sm:$0xff]
  %v182 = vld [vmem:[%s2 + $0x30] sm:$0xff]
  %v183 = vld [vmem:[%s2 + $0x38] sm:$0xff]
  %185 = vset.pattern.permute.xlu0 0
  %186 = vperm.xlu0 %185, %v176
  %v187 = vpop.permute.xlu0 %186
  %190 = vset.pattern.permute.xlu0 0
  %191 = vperm.xlu0 %190, %v177
  %v192 = vpop.permute.xlu0 %191
  %195 = vset.pattern.permute.xlu0 0
  %196 = vperm.xlu0 %195, %v178
  %v197 = vpop.permute.xlu0 %196
  %200 = vset.pattern.permute.xlu0 0
  %201 = vperm.xlu0 %200, %v179
  %v202 = vpop.permute.xlu0 %201
  %205 = vset.pattern.permute.xlu0 0
  %206 = vperm.xlu0 %205, %v180
  %v207 = vpop.permute.xlu0 %206
  %210 = vset.pattern.permute.xlu0 0
  %211 = vperm.xlu0 %210, %v181
  %v212 = vpop.permute.xlu0 %211
  %215 = vset.pattern.permute.xlu0 0
  %216 = vperm.xlu0 %215, %v182
  %v217 = vpop.permute.xlu0 %216
  %220 = vset.pattern.permute.xlu0 0
  %221 = vperm.xlu0 %220, %v183
  %v222 = vpop.permute.xlu0 %221
  %vm224 = vcmask 261120
  %v226 = vsel %vm224, %v26, 0
  %v229 = vsel %vm224, %v33, 0
  %v232 = vsel %vm224, %v40, 0
  %v235 = vsel %vm224, %v47, 0
  %v238 = vsel %vm224, %v54, 0
  %v241 = vsel %vm224, %v61, 0
  %v244 = vsel %vm224, %v68, 0
  %v247 = vsel %vm224, %v75, 0
  %249 = vmatpush.msra.mxu0 %v91
  %250 = vmatpush.msra.mxu0 %v90
  %251 = vmatpush.msra.mxu0 %v89
  %252 = vmatpush.msra.mxu0 %v88
  %253 = vmatpush.msra.mxu0 %v87
  %254 = vmatpush.msra.mxu0 %v86
  %255 = vmatpush.msra.mxu0 %v85
  %256 = vmatpush.msra.mxu0 %v84
  %257 = vmatpush.msra.mxu0 %v83
  %258 = vmatpush.msra.mxu0 %v82
  %259 = vmatpush.msra.mxu0 %v81
  %260 = vmatpush.msra.mxu0 %v80
  %261 = vmatpush.msra.mxu0 %v79
  %262 = vmatpush.msra.mxu0 %v78
  %263 = vmatpush.msra.mxu0 %v77
  %264 = vmatpush.msra.mxu0 %v76
  %265 = vmatmul.f32.gmra.mxu0 %v20
  %v266 = vpop.f32.mrf.mxu0
  %v267 = vadd.f32 %v187, %v266
  %268 = vmatmul.f32.gmra.mxu0 %v27
  %v269 = vpop.f32.mrf.mxu0
  %v270 = vadd.f32 %v192, %v269
  %271 = vmatmul.f32.gmra.mxu0 %v34
  %v272 = vpop.f32.mrf.mxu0
  %v273 = vadd.f32 %v197, %v272
  %274 = vmatmul.f32.gmra.mxu0 %v41
  %v275 = vpop.f32.mrf.mxu0
  %v276 = vadd.f32 %v202, %v275
  %277 = vmatmul.f32.gmra.mxu0 %v48
  %v278 = vpop.f32.mrf.mxu0
  %v279 = vadd.f32 %v207, %v278
  %280 = vmatmul.f32.gmra.mxu0 %v55
  %v281 = vpop.f32.mrf.mxu0
  %v282 = vadd.f32 %v212, %v281
  %283 = vmatmul.f32.gmra.mxu0 %v62
  %v284 = vpop.f32.mrf.mxu0
  %v285 = vadd.f32 %v217, %v284
  %286 = vmatmul.f32.gmra.mxu0 %v69
  %v287 = vpop.f32.mrf.mxu0
  %v288 = vadd.f32 %v222, %v287
  %289 = vdwg.mxu0
  %290 = vmatpush.msra.mxu0 %v107
  %291 = vmatpush.msra.mxu0 %v106
  %292 = vmatpush.msra.mxu0 %v105
  %293 = vmatpush.msra.mxu0 %v104
  %294 = vmatpush.msra.mxu0 %v103
  %295 = vmatpush.msra.mxu0 %v102
  %296 = vmatpush.msra.mxu0 %v101
  %297 = vmatpush.msra.mxu0 %v100
  %298 = vmatpush.msra.mxu0 %v99
  %299 = vmatpush.msra.mxu0 %v98
  %300 = vmatpush.msra.mxu0 %v97
  %301 = vmatpush.msra.mxu0 %v96
  %302 = vmatpush.msra.mxu0 %v95
  %303 = vmatpush.msra.mxu0 %v94
  %304 = vmatpush.msra.mxu0 %v93
  %305 = vmatpush.msra.mxu0 %v92
  %306 = vmatmul.f32.gmra.mxu0 %v21
  %v307 = vpop.f32.mrf.mxu0
  %v308 = vadd.f32 %v267, %v307
  %309 = vmatmul.f32.gmra.mxu0 %v28
  %v310 = vpop.f32.mrf.mxu0
  %v311 = vadd.f32 %v270, %v310
  %312 = vmatmul.f32.gmra.mxu0 %v35
  %v313 = vpop.f32.mrf.mxu0
  %v314 = vadd.f32 %v273, %v313
  %315 = vmatmul.f32.gmra.mxu0 %v42
  %v316 = vpop.f32.mrf.mxu0
  %v317 = vadd.f32 %v276, %v316
  %318 = vmatmul.f32.gmra.mxu0 %v49
  %v319 = vpop.f32.mrf.mxu0
  %v320 = vadd.f32 %v279, %v319
  %321 = vmatmul.f32.gmra.mxu0 %v56
  %v322 = vpop.f32.mrf.mxu0
  %v323 = vadd.f32 %v282, %v322
  %324 = vmatmul.f32.gmra.mxu0 %v63
  %v325 = vpop.f32.mrf.mxu0
  %v326 = vadd.f32 %v285, %v325
  %327 = vmatmul.f32.gmra.mxu0 %v70
  %v328 = vpop.f32.mrf.mxu0
  %v329 = vadd.f32 %v288, %v328
  %330 = vdwg.mxu0
  %331 = vmatpush.msra.mxu0 %v123
  %332 = vmatpush.msra.mxu0 %v122
  %333 = vmatpush.msra.mxu0 %v121
  %334 = vmatpush.msra.mxu0 %v120
  %335 = vmatpush.msra.mxu0 %v119
  %336 = vmatpush.msra.mxu0 %v118
  %337 = vmatpush.msra.mxu0 %v117
  %338 = vmatpush.msra.mxu0 %v116
  %339 = vmatpush.msra.mxu0 %v115
  %340 = vmatpush.msra.mxu0 %v114
  %341 = vmatpush.msra.mxu0 %v113
  %342 = vmatpush.msra.mxu0 %v112
  %343 = vmatpush.msra.mxu0 %v111
  %344 = vmatpush.msra.mxu0 %v110
  %345 = vmatpush.msra.mxu0 %v109
  %346 = vmatpush.msra.mxu0 %v108
  %347 = vmatmul.f32.gmra.mxu0 %v22
  %v348 = vpop.f32.mrf.mxu0
  %v349 = vadd.f32 %v308, %v348
  %350 = vmatmul.f32.gmra.mxu0 %v29
  %v351 = vpop.f32.mrf.mxu0
  %v352 = vadd.f32 %v311, %v351
  %353 = vmatmul.f32.gmra.mxu0 %v36
  %v354 = vpop.f32.mrf.mxu0
  %v355 = vadd.f32 %v314, %v354
  %356 = vmatmul.f32.gmra.mxu0 %v43
  %v357 = vpop.f32.mrf.mxu0
  %v358 = vadd.f32 %v317, %v357
  %359 = vmatmul.f32.gmra.mxu0 %v50
  %v360 = vpop.f32.mrf.mxu0
  %v361 = vadd.f32 %v320, %v360
  %362 = vmatmul.f32.gmra.mxu0 %v57
  %v363 = vpop.f32.mrf.mxu0
  %v364 = vadd.f32 %v323, %v363
  %365 = vmatmul.f32.gmra.mxu0 %v64
  %v366 = vpop.f32.mrf.mxu0
  %v367 = vadd.f32 %v326, %v366
  %368 = vmatmul.f32.gmra.mxu0 %v71
  %v369 = vpop.f32.mrf.mxu0
  %v370 = vadd.f32 %v329, %v369
  %371 = vdwg.mxu0
  %372 = vmatpush.msra.mxu0 %v139
  %373 = vmatpush.msra.mxu0 %v138
  %374 = vmatpush.msra.mxu0 %v137
  %375 = vmatpush.msra.mxu0 %v136
  %376 = vmatpush.msra.mxu0 %v135
  %377 = vmatpush.msra.mxu0 %v134
  %378 = vmatpush.msra.mxu0 %v133
  %379 = vmatpush.msra.mxu0 %v132
  %380 = vmatpush.msra.mxu0 %v131
  %381 = vmatpush.msra.mxu0 %v130
  %382 = vmatpush.msra.mxu0 %v129
  %383 = vmatpush.msra.mxu0 %v128
  %384 = vmatpush.msra.mxu0 %v127
  %385 = vmatpush.msra.mxu0 %v126
  %386 = vmatpush.msra.mxu0 %v125
  %387 = vmatpush.msra.mxu0 %v124
  %388 = vmatmul.f32.gmra.mxu0 %v23
  %v389 = vpop.f32.mrf.mxu0
  %v390 = vadd.f32 %v349, %v389
  %391 = vmatmul.f32.gmra.mxu0 %v30
  %v392 = vpop.f32.mrf.mxu0
  %v393 = vadd.f32 %v352, %v392
  %394 = vmatmul.f32.gmra.mxu0 %v37
  %v395 = vpop.f32.mrf.mxu0
  %v396 = vadd.f32 %v355, %v395
  %397 = vmatmul.f32.gmra.mxu0 %v44
  %v398 = vpop.f32.mrf.mxu0
  %v399 = vadd.f32 %v358, %v398
  %400 = vmatmul.f32.gmra.mxu0 %v51
  %v401 = vpop.f32.mrf.mxu0
  %v402 = vadd.f32 %v361, %v401
  %403 = vmatmul.f32.gmra.mxu0 %v58
  %v404 = vpop.f32.mrf.mxu0
  %v405 = vadd.f32 %v364, %v404
  %406 = vmatmul.f32.gmra.mxu0 %v65
  %v407 = vpop.f32.mrf.mxu0
  %v408 = vadd.f32 %v367, %v407
  %409 = vmatmul.f32.gmra.mxu0 %v72
  %v410 = vpop.f32.mrf.mxu0
  %v411 = vadd.f32 %v370, %v410
  %412 = vdwg.mxu0
  %413 = vmatpush.msra.mxu0 %v155
  %414 = vmatpush.msra.mxu0 %v154
  %415 = vmatpush.msra.mxu0 %v153
  %416 = vmatpush.msra.mxu0 %v152
  %417 = vmatpush.msra.mxu0 %v151
  %418 = vmatpush.msra.mxu0 %v150
  %419 = vmatpush.msra.mxu0 %v149
  %420 = vmatpush.msra.mxu0 %v148
  %421 = vmatpush.msra.mxu0 %v147
  %422 = vmatpush.msra.mxu0 %v146
  %423 = vmatpush.msra.mxu0 %v145
  %424 = vmatpush.msra.mxu0 %v144
  %425 = vmatpush.msra.mxu0 %v143
  %426 = vmatpush.msra.mxu0 %v142
  %427 = vmatpush.msra.mxu0 %v141
  %428 = vmatpush.msra.mxu0 %v140
  %429 = vmatmul.f32.gmra.mxu0 %v24
  %v430 = vpop.f32.mrf.mxu0
  %v431 = vadd.f32 %v390, %v430
  %432 = vmatmul.f32.gmra.mxu0 %v31
  %v433 = vpop.f32.mrf.mxu0
  %v434 = vadd.f32 %v393, %v433
  %435 = vmatmul.f32.gmra.mxu0 %v38
  %v436 = vpop.f32.mrf.mxu0
  %v437 = vadd.f32 %v396, %v436
  %438 = vmatmul.f32.gmra.mxu0 %v45
  %v439 = vpop.f32.mrf.mxu0
  %v440 = vadd.f32 %v399, %v439
  %441 = vmatmul.f32.gmra.mxu0 %v52
  %v442 = vpop.f32.mrf.mxu0
  %v443 = vadd.f32 %v402, %v442
  %444 = vmatmul.f32.gmra.mxu0 %v59
  %v445 = vpop.f32.mrf.mxu0
  %v446 = vadd.f32 %v405, %v445
  %447 = vmatmul.f32.gmra.mxu0 %v66
  %v448 = vpop.f32.mrf.mxu0
  %v449 = vadd.f32 %v408, %v448
  %450 = vmatmul.f32.gmra.mxu0 %v73
  %v451 = vpop.f32.mrf.mxu0
  %v452 = vadd.f32 %v411, %v451
  %453 = vdwg.mxu0
  %454 = vmatpush.msra.mxu0 %v171
  %455 = vmatpush.msra.mxu0 %v170
  %456 = vmatpush.msra.mxu0 %v169
  %457 = vmatpush.msra.mxu0 %v168
  %458 = vmatpush.msra.mxu0 %v167
  %459 = vmatpush.msra.mxu0 %v166
  %460 = vmatpush.msra.mxu0 %v165
  %461 = vmatpush.msra.mxu0 %v164
  %462 = vmatpush.msra.mxu0 %v163
  %463 = vmatpush.msra.mxu0 %v162
  %464 = vmatpush.msra.mxu0 %v161
  %465 = vmatpush.msra.mxu0 %v160
  %466 = vmatpush.msra.mxu0 %v159
  %467 = vmatpush.msra.mxu0 %v158
  %468 = vmatpush.msra.mxu0 %v157
  %469 = vmatpush.msra.mxu0 %v156
  %470 = vmatmul.f32.gmra.mxu0 %v25
  %v471 = vpop.f32.mrf.mxu0
  %v472 = vadd.f32 %v431, %v471
  %473 = vmatmul.f32.gmra.mxu0 %v32
  %v474 = vpop.f32.mrf.mxu0
  %v475 = vadd.f32 %v434, %v474
  %476 = vmatmul.f32.gmra.mxu0 %v39
  %v477 = vpop.f32.mrf.mxu0
  %v478 = vadd.f32 %v437, %v477
  %479 = vmatmul.f32.gmra.mxu0 %v46
  %v480 = vpop.f32.mrf.mxu0
  %v481 = vadd.f32 %v440, %v480
  %482 = vmatmul.f32.gmra.mxu0 %v53
  %v483 = vpop.f32.mrf.mxu0
  %v484 = vadd.f32 %v443, %v483
  %485 = vmatmul.f32.gmra.mxu0 %v60
  %v486 = vpop.f32.mrf.mxu0
  %v487 = vadd.f32 %v446, %v486
  %488 = vmatmul.f32.gmra.mxu0 %v67
  %v489 = vpop.f32.mrf.mxu0
  %v490 = vadd.f32 %v449, %v489
  %491 = vmatmul.f32.gmra.mxu0 %v74
  %v492 = vpop.f32.mrf.mxu0
  %v493 = vadd.f32 %v452, %v492
  %494 = vdwg.mxu0
  %495 = vmatpush.msra.mxu0 0.0
  %496 = vmatpush.msra.mxu0 0.0
  %497 = vmatpush.msra.mxu0 0.0
  %498 = vmatpush.msra.mxu0 0.0
  %499 = vmatpush.msra.mxu0 0.0
  %500 = vmatpush.msra.mxu0 0.0
  %501 = vmatpush.msra.mxu0 0.0
  %502 = vmatpush.msra.mxu0 0.0
  %503 = vmatpush.msra.mxu0 0.0
  %504 = vmatpush.msra.mxu0 0.0
  %505 = vmatpush.msra.mxu0 0.0
  %506 = vmatpush.msra.mxu0 0.0
  %507 = vmatpush.msra.mxu0 %v175
  %508 = vmatpush.msra.mxu0 %v174
  %509 = vmatpush.msra.mxu0 %v173
  %510 = vmatpush.msra.mxu0 %v172
  %511 = vmatmul.f32.gmra.mxu0 %v226
  %v512 = vpop.f32.mrf.mxu0
  %v513 = vadd.f32 %v472, %v512
  %514 = vmatmul.f32.gmra.mxu0 %v229
  %v515 = vpop.f32.mrf.mxu0
  %v516 = vadd.f32 %v475, %v515
  %517 = vmatmul.f32.gmra.mxu0 %v232
  %v518 = vpop.f32.mrf.mxu0
  %v519 = vadd.f32 %v478, %v518
  %520 = vmatmul.f32.gmra.mxu0 %v235
  %v521 = vpop.f32.mrf.mxu0
  %v522 = vadd.f32 %v481, %v521
  %523 = vmatmul.f32.gmra.mxu0 %v238
  %v524 = vpop.f32.mrf.mxu0
  %v525 = vadd.f32 %v484, %v524
  %526 = vmatmul.f32.gmra.mxu0 %v241
  %v527 = vpop.f32.mrf.mxu0
  %v528 = vadd.f32 %v487, %v527
  %529 = vmatmul.f32.gmra.mxu0 %v244
  %v530 = vpop.f32.mrf.mxu0
  %v531 = vadd.f32 %v490, %v530
  %532 = vmatmul.f32.gmra.mxu0 %v247
  %v533 = vpop.f32.mrf.mxu0
  %v534 = vadd.f32 %v493, %v533
  %535 = vdwg.mxu0
  %vm536 = vcmask 146432
  %v537 = vsel %vm536, %v513, 0.0
  %538 = vadd.xlane.f32.xlu0 %v537
  %v539 = vpop.xlane.xlu0 %538
  %v540 = vsel %vm536, %v516, 0.0
  %541 = vadd.xlane.f32.xlu0 %v540
  %v542 = vpop.xlane.xlu0 %541
  %v543 = vsel %vm536, %v519, 0.0
  %544 = vadd.xlane.f32.xlu0 %v543
  %v545 = vpop.xlane.xlu0 %544
  %v546 = vsel %vm536, %v522, 0.0
  %547 = vadd.xlane.f32.xlu0 %v546
  %v548 = vpop.xlane.xlu0 %547
  %v549 = vsel %vm536, %v525, 0.0
  %550 = vadd.xlane.f32.xlu0 %v549
  %v551 = vpop.xlane.xlu0 %550
  %v552 = vsel %vm536, %v528, 0.0
  %553 = vadd.xlane.f32.xlu0 %v552
  %v554 = vpop.xlane.xlu0 %553
  %v555 = vsel %vm536, %v531, 0.0
  %556 = vadd.xlane.f32.xlu0 %v555
  %v557 = vpop.xlane.xlu0 %556
  %v558 = vsel %vm536, %v534, 0.0
  %559 = vadd.xlane.f32.xlu0 %v558
  %v560 = vpop.xlane.xlu0 %559
  %v561 = vmul.f32 %v513, %v513
  %v562 = vmul.f32 %v516, %v516
  %v563 = vmul.f32 %v519, %v519
  %v564 = vmul.f32 %v522, %v522
  %v565 = vmul.f32 %v525, %v525
  %v566 = vmul.f32 %v528, %v528
  %v567 = vmul.f32 %v531, %v531
  %v568 = vmul.f32 %v534, %v534
  %v569 = vsel %vm536, %v561, 0.0
  %570 = vadd.xlane.f32.xlu0 %v569
  %v571 = vpop.xlane.xlu0 %570
  %v572 = vsel %vm536, %v562, 0.0
  %573 = vadd.xlane.f32.xlu0 %v572
  %v574 = vpop.xlane.xlu0 %573
  %v575 = vsel %vm536, %v563, 0.0
  %576 = vadd.xlane.f32.xlu0 %v575
  %v577 = vpop.xlane.xlu0 %576
  %v578 = vsel %vm536, %v564, 0.0
  %579 = vadd.xlane.f32.xlu0 %v578
  %v580 = vpop.xlane.xlu0 %579
  %v581 = vsel %vm536, %v565, 0.0
  %582 = vadd.xlane.f32.xlu0 %v581
  %v583 = vpop.xlane.xlu0 %582
  %v584 = vsel %vm536, %v566, 0.0
  %585 = vadd.xlane.f32.xlu0 %v584
  %v586 = vpop.xlane.xlu0 %585
  %v587 = vsel %vm536, %v567, 0.0
  %588 = vadd.xlane.f32.xlu0 %v587
  %v589 = vpop.xlane.xlu0 %588
  %v590 = vsel %vm536, %v568, 0.0
  %591 = vadd.xlane.f32.xlu0 %v590
  %v592 = vpop.xlane.xlu0 %591
  %v593 = vmul.f32 %v539, 0.055555556
  %v594 = vmul.f32 %v542, 0.055555556
  %v595 = vmul.f32 %v545, 0.055555556
  %v596 = vmul.f32 %v548, 0.055555556
  %v597 = vmul.f32 %v551, 0.055555556
  %v598 = vmul.f32 %v554, 0.055555556
  %v599 = vmul.f32 %v557, 0.055555556
  %v600 = vmul.f32 %v560, 0.055555556
  %v601 = vmul.f32 %v571, 0.055555556
  %v602 = vmul.f32 %v574, 0.055555556
  %v603 = vmul.f32 %v577, 0.055555556
  %v604 = vmul.f32 %v580, 0.055555556
  %v605 = vmul.f32 %v583, 0.055555556
  %v606 = vmul.f32 %v586, 0.055555556
  %v607 = vmul.f32 %v589, 0.055555556
  %v608 = vmul.f32 %v592, 0.055555556
  %v609 = vmul.f32 %v593, %v593
  %v610 = vmul.f32 %v594, %v594
  %v611 = vmul.f32 %v595, %v595
  %v612 = vmul.f32 %v596, %v596
  %v613 = vmul.f32 %v597, %v597
  %v614 = vmul.f32 %v598, %v598
  %v615 = vmul.f32 %v599, %v599
  %v616 = vmul.f32 %v600, %v600
  %v617 = vsub.f32 %v601, %v609
  %v618 = vsub.f32 %v602, %v610
  %v619 = vsub.f32 %v603, %v611
  %v620 = vsub.f32 %v604, %v612
  %v621 = vsub.f32 %v605, %v613
  %v622 = vsub.f32 %v606, %v614
  %v623 = vsub.f32 %v607, %v615
  %v624 = vsub.f32 %v608, %v616
  %v625 = vmax.f32 %v617, 0.0
  %v626 = vmax.f32 %v618, 0.0
  %v627 = vmax.f32 %v619, 0.0
  %v628 = vmax.f32 %v620, 0.0
  %v629 = vmax.f32 %v621, 0.0
  %v630 = vmax.f32 %v622, 0.0
  %v631 = vmax.f32 %v623, 0.0
  %v632 = vmax.f32 %v624, 0.0
  %v633 = vadd.f32 %v625, 1e-05
  %v634 = vadd.f32 %v626, 1e-05
  %v635 = vadd.f32 %v627, 1e-05
  %v636 = vadd.f32 %v628, 1e-05
  %v637 = vadd.f32 %v629, 1e-05
  %v638 = vadd.f32 %v630, 1e-05
  %v639 = vadd.f32 %v631, 1e-05
  %v640 = vadd.f32 %v632, 1e-05
  %v641 = vrsqrt.pop %v633
  %v642 = vmul.f32 %v641, %v633
  %v643 = vmul.f32 %v642, %v641
  %v644 = vmul.f32 0.5, %v643
  %v645 = vsub.f32 1.5, %v644
  %v646 = vmul.f32 %v641, %v645
  %vm647 = vweird.f32 %v633
  %vm648 = vweird.f32 %v641
  %vm649 = vmor %vm647, %vm648
  %v650 = vsel %vm649, %v641, %v646
  %v651 = vrsqrt.pop %v634
  %v652 = vmul.f32 %v651, %v634
  %v653 = vmul.f32 %v652, %v651
  %v654 = vmul.f32 0.5, %v653
  %v655 = vsub.f32 1.5, %v654
  %v656 = vmul.f32 %v651, %v655
  %vm657 = vweird.f32 %v634
  %vm658 = vweird.f32 %v651
  %vm659 = vmor %vm657, %vm658
  %v660 = vsel %vm659, %v651, %v656
  %v661 = vrsqrt.pop %v635
  %v662 = vmul.f32 %v661, %v635
  %v663 = vmul.f32 %v662, %v661
  %v664 = vmul.f32 0.5, %v663
  %v665 = vsub.f32 1.5, %v664
  %v666 = vmul.f32 %v661, %v665
  %vm667 = vweird.f32 %v635
  %vm668 = vweird.f32 %v661
  %vm669 = vmor %vm667, %vm668
  %v670 = vsel %vm669, %v661, %v666
  %v671 = vrsqrt.pop %v636
  %v672 = vmul.f32 %v671, %v636
  %v673 = vmul.f32 %v672, %v671
  %v674 = vmul.f32 0.5, %v673
  %v675 = vsub.f32 1.5, %v674
  %v676 = vmul.f32 %v671, %v675
  %vm677 = vweird.f32 %v636
  %vm678 = vweird.f32 %v671
  %vm679 = vmor %vm677, %vm678
  %v680 = vsel %vm679, %v671, %v676
  %v681 = vrsqrt.pop %v637
  %v682 = vmul.f32 %v681, %v637
  %v683 = vmul.f32 %v682, %v681
  %v684 = vmul.f32 0.5, %v683
  %v685 = vsub.f32 1.5, %v684
  %v686 = vmul.f32 %v681, %v685
  %vm687 = vweird.f32 %v637
  %vm688 = vweird.f32 %v681
  %vm689 = vmor %vm687, %vm688
  %v690 = vsel %vm689, %v681, %v686
  %v691 = vrsqrt.pop %v638
  %v692 = vmul.f32 %v691, %v638
  %v693 = vmul.f32 %v692, %v691
  %v694 = vmul.f32 0.5, %v693
  %v695 = vsub.f32 1.5, %v694
  %v696 = vmul.f32 %v691, %v695
  %vm697 = vweird.f32 %v638
  %vm698 = vweird.f32 %v691
  %vm699 = vmor %vm697, %vm698
  %v700 = vsel %vm699, %v691, %v696
  %v701 = vrsqrt.pop %v639
  %v702 = vmul.f32 %v701, %v639
  %v703 = vmul.f32 %v702, %v701
  %v704 = vmul.f32 0.5, %v703
  %v705 = vsub.f32 1.5, %v704
  %v706 = vmul.f32 %v701, %v705
  %vm707 = vweird.f32 %v639
  %vm708 = vweird.f32 %v701
  %vm709 = vmor %vm707, %vm708
  %v710 = vsel %vm709, %v701, %v706
  %v711 = vrsqrt.pop %v640
  %v712 = vmul.f32 %v711, %v640
  %v713 = vmul.f32 %v712, %v711
  %v714 = vmul.f32 0.5, %v713
  %v715 = vsub.f32 1.5, %v714
  %v716 = vmul.f32 %v711, %v715
  %vm717 = vweird.f32 %v640
  %vm718 = vweird.f32 %v711
  %vm719 = vmor %vm717, %vm718
  %v720 = vsel %vm719, %v711, %v716
  %v721 = vld [vmem:[%s3] sm:$0xff]
  %v722 = vld [vmem:[%s3 + $0x8] sm:$0xff]
  %v723 = vld [vmem:[%s3 + $0x10] sm:$0xff]
  %v724 = vld [vmem:[%s3 + $0x18] sm:$0xff]
  %v725 = vld [vmem:[%s3 + $0x20] sm:$0xff]
  %v726 = vld [vmem:[%s3 + $0x28] sm:$0xff]
  %v727 = vld [vmem:[%s3 + $0x30] sm:$0xff]
  %v728 = vld [vmem:[%s3 + $0x38] sm:$0xff]
  %v729 = vmul.f32 %v650, %v721
  %v730 = vmul.f32 %v660, %v722
  %v731 = vmul.f32 %v670, %v723
  %v732 = vmul.f32 %v680, %v724
  %v733 = vmul.f32 %v690, %v725
  %v734 = vmul.f32 %v700, %v726
  %v735 = vmul.f32 %v710, %v727
  %v736 = vmul.f32 %v720, %v728
  %v737 = vld [vmem:[%s4] sm:$0xff]
  %v738 = vld [vmem:[%s4 + $0x8] sm:$0xff]
  %v739 = vld [vmem:[%s4 + $0x10] sm:$0xff]
  %v740 = vld [vmem:[%s4 + $0x18] sm:$0xff]
  %v741 = vld [vmem:[%s4 + $0x20] sm:$0xff]
  %v742 = vld [vmem:[%s4 + $0x28] sm:$0xff]
  %v743 = vld [vmem:[%s4 + $0x30] sm:$0xff]
  %v744 = vld [vmem:[%s4 + $0x38] sm:$0xff]
  %v745 = vmul.f32 %v593, %v729
  %v746 = vmul.f32 %v594, %v730
  %v747 = vmul.f32 %v595, %v731
  %v748 = vmul.f32 %v596, %v732
  %v749 = vmul.f32 %v597, %v733
  %v750 = vmul.f32 %v598, %v734
  %v751 = vmul.f32 %v599, %v735
  %v752 = vmul.f32 %v600, %v736
  %v753 = vsub.f32 %v737, %v745
  %v754 = vsub.f32 %v738, %v746
  %v755 = vsub.f32 %v739, %v747
  %v756 = vsub.f32 %v740, %v748
  %v757 = vsub.f32 %v741, %v749
  %v758 = vsub.f32 %v742, %v750
  %v759 = vsub.f32 %v743, %v751
  %v760 = vsub.f32 %v744, %v752
  %762 = vset.pattern.permute.xlu0 0
  %763 = vperm.xlu0 %762, %v729
  %v764 = vpop.permute.xlu0 %763
  %767 = vset.pattern.permute.xlu0 0
  %768 = vperm.xlu0 %767, %v730
  %v769 = vpop.permute.xlu0 %768
  %772 = vset.pattern.permute.xlu0 0
  %773 = vperm.xlu0 %772, %v731
  %v774 = vpop.permute.xlu0 %773
  %777 = vset.pattern.permute.xlu0 0
  %778 = vperm.xlu0 %777, %v732
  %v779 = vpop.permute.xlu0 %778
  %782 = vset.pattern.permute.xlu0 0
  %783 = vperm.xlu0 %782, %v733
  %v784 = vpop.permute.xlu0 %783
  %787 = vset.pattern.permute.xlu0 0
  %788 = vperm.xlu0 %787, %v734
  %v789 = vpop.permute.xlu0 %788
  %792 = vset.pattern.permute.xlu0 0
  %793 = vperm.xlu0 %792, %v735
  %v794 = vpop.permute.xlu0 %793
  %797 = vset.pattern.permute.xlu0 0
  %798 = vperm.xlu0 %797, %v736
  %v799 = vpop.permute.xlu0 %798
  %v801 = vmul.f32 %v513, %v764
  %v802 = vmul.f32 %v516, %v769
  %v803 = vmul.f32 %v519, %v774
  %v804 = vmul.f32 %v522, %v779
  %v805 = vmul.f32 %v525, %v784
  %v806 = vmul.f32 %v528, %v789
  %v807 = vmul.f32 %v531, %v794
  %v808 = vmul.f32 %v534, %v799
  %810 = vset.pattern.permute.xlu0 0
  %811 = vperm.xlu0 %810, %v753
  %v812 = vpop.permute.xlu0 %811
  %815 = vset.pattern.permute.xlu0 0
  %816 = vperm.xlu0 %815, %v754
  %v817 = vpop.permute.xlu0 %816
  %820 = vset.pattern.permute.xlu0 0
  %821 = vperm.xlu0 %820, %v755
  %v822 = vpop.permute.xlu0 %821
  %825 = vset.pattern.permute.xlu0 0
  %826 = vperm.xlu0 %825, %v756
  %v827 = vpop.permute.xlu0 %826
  %830 = vset.pattern.permute.xlu0 0
  %831 = vperm.xlu0 %830, %v757
  %v832 = vpop.permute.xlu0 %831
  %835 = vset.pattern.permute.xlu0 0
  %836 = vperm.xlu0 %835, %v758
  %v837 = vpop.permute.xlu0 %836
  %840 = vset.pattern.permute.xlu0 0
  %841 = vperm.xlu0 %840, %v759
  %v842 = vpop.permute.xlu0 %841
  %845 = vset.pattern.permute.xlu0 0
  %846 = vperm.xlu0 %845, %v760
  %v847 = vpop.permute.xlu0 %846
  %v849 = vadd.f32 %v801, %v812
  %v850 = vadd.f32 %v802, %v817
  %v851 = vadd.f32 %v803, %v822
  %v852 = vadd.f32 %v804, %v827
  %v853 = vadd.f32 %v805, %v832
  %v854 = vadd.f32 %v806, %v837
  %v855 = vadd.f32 %v807, %v842
  %v856 = vadd.f32 %v808, %v847
  %v857 = vmax.f32 %v849, 0.0
  %v858 = vmax.f32 %v850, 0.0
  %v859 = vmax.f32 %v851, 0.0
  %v860 = vmax.f32 %v852, 0.0
  %v861 = vmax.f32 %v853, 0.0
  %v862 = vmax.f32 %v854, 0.0
  %v863 = vmax.f32 %v855, 0.0
  %v864 = vmax.f32 %v856, 0.0
  %865 = vst.msk [vmem:[%s5] sm:$0xff] %vm536, %v857
  %866 = vst.msk [vmem:[%s5 + $0x8] sm:$0xff] %vm536, %v858
  %867 = vst.msk [vmem:[%s5 + $0x10] sm:$0xff] %vm536, %v859
  %868 = vst.msk [vmem:[%s5 + $0x18] sm:$0xff] %vm536, %v860
  %869 = vst.msk [vmem:[%s5 + $0x20] sm:$0xff] %vm536, %v861
  %870 = vst.msk [vmem:[%s5 + $0x28] sm:$0xff] %vm536, %v862
  %871 = vst.msk [vmem:[%s5 + $0x30] sm:$0xff] %vm536, %v863
  %872 = vst.msk [vmem:[%s5 + $0x38] sm:$0xff] %vm536, %v864
  // Predicated region
  $region22: #{critic_forward.8} parent=0 // pred_check
    _
  $region23: #{critic_forward.8} parent=0 // pred_check_branch
    %874 = sbr.rel (0) target = $region25
  $region24: #{critic_forward.8} parent=0 // pred_region
    _
  $region25: #{critic_forward.8} parent=0 // pred_fallthru
    _
  // Predicated region
  $region26: #{critic_forward.8} parent=0 // pred_check
    _
  $region27: #{critic_forward.8} parent=0 // pred_check_branch
    %876 = sbr.rel (0) target = $region29
  $region28: #{critic_forward.8} parent=0 // pred_region
    _
  $region29: #{critic_forward.8} parent=0 // pred_fallthru
    _

// kernel: critic_forward.9
$region0: #{critic_forward.9}
  #allocation0 [shape = 'u32[]', space=smem, size = 0x4, offset = 0x4, fixed_abs, tag = 'smem constant byte address 0x4 - core index']
  #allocation1 [shape = 'u32[72,128]{1,0:T(1,128)}', space=vmem, size = 0x9000, scoped, tag = 'internal scratch']
  #allocation2 [shape = 'f32[1,1]{1,0:T(1,128)S(1)}', space=vmem, size = 0x200, scoped, tag = 'scoped memory for critic_forward.9']
  %s0 = inlined_call_operand.vmem [shape: f32[1600,2], index: 0, kind: input, shape index: {}]
  %s1 = inlined_call_operand.vmem [shape: f32[1,1600], index: 1, kind: input, shape index: {}]
  %s2 = inlined_call_operand.<no memory space> [shape: f32[1,1], index: 2, kind: input, shape index: {}]
  %s3 = inlined_call_operand.hbm [shape: f32[1,2], index: 3, kind: output, shape index: {}]
  %s4 = sld [smem:[#allocation0]]
  $region22: #{critic_forward.9} parent=0
    _
  %s6 = ssub.s32 1, %s4
  %s7 = scalar_select 0, %s6, %s4
  %v8 = vstv %s2
  %9 = vst [vmem:[#allocation2] sm:$0x1] %v8
  $region1: #{critic_forward.9} parent=0
    #allocation3 [shape = 'u8[512]{0}', space=vmem, size = 0x400, scoped, tag = 'output window, operand 0, single buffered']
    #allocation4 [shape = 's32[1]{0}', space=sflag, size = 0x4, scoped, tag = 'scoped memory for critic_forward.9']
    %10 = vsyncpa [#allocation4], 0
    // Predicated region
    $region2: #{critic_forward.9} parent=1 // pred_check
      _
    $region3: #{critic_forward.9} parent=1 // pred_check_branch
      %12 = sbr.rel (0) target = $region5
    $region4: #{critic_forward.9} parent=1 // pred_region
      _
    $region5: #{critic_forward.9} parent=1 // pred_fallthru
      _
    // Predicated region
    $region6: #{critic_forward.9} parent=1 // pred_check
      _
    $region7: #{critic_forward.9} parent=1 // pred_check_branch
      %14 = sbr.rel (0) target = $region9
    $region8: #{critic_forward.9} parent=1 // pred_region
      _
    $region9: #{critic_forward.9} parent=1 // pred_fallthru
      _
    // Predicated region
    $region10: #{critic_forward.9} parent=1 // pred_check
      _
    $region11: #{critic_forward.9} parent=1 // pred_check_branch
      %16 = sbr.rel (0) target = $region13
    $region12: #{critic_forward.9} parent=1 // pred_region
      _
    $region13: #{critic_forward.9} parent=1 // pred_fallthru
      _
    %v17 = vld [vmem:[%s1] sm:$0xff]
    %v18 = vld [vmem:[%s1 + $0x8] sm:$0x1f]
    %v19 = vld [vmem:[%s0] sm:$0xff]
    %v20 = vld [vmem:[%s0 + $0x8] sm:$0xff]
    %v21 = vld [vmem:[%s0 + $0x10] sm:$0xff]
    %v22 = vld [vmem:[%s0 + $0x18] sm:$0xff]
    %v23 = vld [vmem:[%s0 + $0x20] sm:$0xff]
    %v24 = vld [vmem:[%s0 + $0x28] sm:$0xff]
    %v25 = vld [vmem:[%s0 + $0x30] sm:$0xff]
    %v26 = vld [vmem:[%s0 + $0x38] sm:$0xff]
    %v27 = vld [vmem:[%s0 + $0x40] sm:$0xff]
    %v28 = vld [vmem:[%s0 + $0x48] sm:$0xff]
    %v29 = vld [vmem:[%s0 + $0x50] sm:$0xff]
    %v30 = vld [vmem:[%s0 + $0x58] sm:$0xff]
    %v31 = vld [vmem:[%s0 + $0x60] sm:$0xff]
    %v32 = vld [vmem:[%s0 + $0x68] sm:$0xff]
    %v33 = vld [vmem:[%s0 + $0x70] sm:$0xff]
    %v34 = vld [vmem:[%s0 + $0x78] sm:$0xff]
    %v35 = vld [vmem:[%s0 + $0x80] sm:$0xff]
    %v36 = vld [vmem:[%s0 + $0x88] sm:$0xff]
    %v37 = vld [vmem:[%s0 + $0x90] sm:$0xff]
    %v38 = vld [vmem:[%s0 + $0x98] sm:$0xff]
    %v39 = vld [vmem:[%s0 + $0xa0] sm:$0xff]
    %v40 = vld [vmem:[%s0 + $0xa8] sm:$0xff]
    %v41 = vld [vmem:[%s0 + $0xb0] sm:$0xff]
    %v42 = vld [vmem:[%s0 + $0xb8] sm:$0xff]
    %v43 = vld [vmem:[%s0 + $0xc0] sm:$0xff]
    %v44 = vld [vmem:[%s0 + $0xc8] sm:$0xff]
    %v45 = vld [vmem:[%s0 + $0xd0] sm:$0xff]
    %v46 = vld [vmem:[%s0 + $0xd8] sm:$0xff]
    %v47 = vld [vmem:[%s0 + $0xe0] sm:$0xff]
    %v48 = vld [vmem:[%s0 + $0xe8] sm:$0xff]
    %v49 = vld [vmem:[%s0 + $0xf0] sm:$0xff]
    %v50 = vld [vmem:[%s0 + $0xf8] sm:$0xff]
    %v51 = vld [vmem:[%s0 + $0x100] sm:$0xff]
    %v52 = vld [vmem:[%s0 + $0x108] sm:$0xff]
    %v53 = vld [vmem:[%s0 + $0x110] sm:$0xff]
    %v54 = vld [vmem:[%s0 + $0x118] sm:$0xff]
    %v55 = vld [vmem:[%s0 + $0x120] sm:$0xff]
    %v56 = vld [vmem:[%s0 + $0x128] sm:$0xff]
    %v57 = vld [vmem:[%s0 + $0x130] sm:$0xff]
    %v58 = vld [vmem:[%s0 + $0x138] sm:$0xff]
    %v59 = vld [vmem:[%s0 + $0x140] sm:$0xff]
    %v60 = vld [vmem:[%s0 + $0x148] sm:$0xff]
    %v61 = vld [vmem:[%s0 + $0x150] sm:$0xff]
    %v62 = vld [vmem:[%s0 + $0x158] sm:$0xff]
    %v63 = vld [vmem:[%s0 + $0x160] sm:$0xff]
    %v64 = vld [vmem:[%s0 + $0x168] sm:$0xff]
    %v65 = vld [vmem:[%s0 + $0x170] sm:$0xff]
    %v66 = vld [vmem:[%s0 + $0x178] sm:$0xff]
    %v67 = vld [vmem:[%s0 + $0x180] sm:$0xff]
    %v68 = vld [vmem:[%s0 + $0x188] sm:$0xff]
    %v69 = vld [vmem:[%s0 + $0x190] sm:$0xff]
    %v70 = vld [vmem:[%s0 + $0x198] sm:$0xff]
    %v71 = vld [vmem:[%s0 + $0x1a0] sm:$0xff]
    %v72 = vld [vmem:[%s0 + $0x1a8] sm:$0xff]
    %v73 = vld [vmem:[%s0 + $0x1b0] sm:$0xff]
    %v74 = vld [vmem:[%s0 + $0x1b8] sm:$0xff]
    %v75 = vld [vmem:[%s0 + $0x1c0] sm:$0xff]
    %v76 = vld [vmem:[%s0 + $0x1c8] sm:$0xff]
    %v77 = vld [vmem:[%s0 + $0x1d0] sm:$0xff]
    %v78 = vld [vmem:[%s0 + $0x1d8] sm:$0xff]
    %v79 = vld [vmem:[%s0 + $0x1e0] sm:$0xff]
    %v80 = vld [vmem:[%s0 + $0x1e8] sm:$0xff]
    %v81 = vld [vmem:[%s0 + $0x1f0] sm:$0xff]
    %v82 = vld [vmem:[%s0 + $0x1f8] sm:$0xff]
    %v83 = vld [vmem:[%s0 + $0x200] sm:$0xff]
    %v84 = vld [vmem:[%s0 + $0x208] sm:$0xff]
    %v85 = vld [vmem:[%s0 + $0x210] sm:$0xff]
    %v86 = vld [vmem:[%s0 + $0x218] sm:$0xff]
    %v87 = vld [vmem:[%s0 + $0x220] sm:$0xff]
    %v88 = vld [vmem:[%s0 + $0x228] sm:$0xff]
    %v89 = vld [vmem:[%s0 + $0x230] sm:$0xff]
    %v90 = vld [vmem:[%s0 + $0x238] sm:$0xff]
    %v91 = vld [vmem:[%s0 + $0x240] sm:$0xff]
    %v92 = vld [vmem:[%s0 + $0x248] sm:$0xff]
    %v93 = vld [vmem:[%s0 + $0x250] sm:$0xff]
    %v94 = vld [vmem:[%s0 + $0x258] sm:$0xff]
    %v95 = vld [vmem:[%s0 + $0x260] sm:$0xff]
    %v96 = vld [vmem:[%s0 + $0x268] sm:$0xff]
    %v97 = vld [vmem:[%s0 + $0x270] sm:$0xff]
    %v98 = vld [vmem:[%s0 + $0x278] sm:$0xff]
    %v99 = vld [vmem:[%s0 + $0x280] sm:$0xff]
    %v100 = vld [vmem:[%s0 + $0x288] sm:$0xff]
    %v101 = vld [vmem:[%s0 + $0x290] sm:$0xff]
    %v102 = vld [vmem:[%s0 + $0x298] sm:$0xff]
    %v103 = vld [vmem:[%s0 + $0x2a0] sm:$0xff]
    %v104 = vld [vmem:[%s0 + $0x2a8] sm:$0xff]
    %v105 = vld [vmem:[%s0 + $0x2b0] sm:$0xff]
    %v106 = vld [vmem:[%s0 + $0x2b8] sm:$0xff]
    %v107 = vld [vmem:[%s0 + $0x2c0] sm:$0xff]
    %v108 = vld [vmem:[%s0 + $0x2c8] sm:$0xff]
    %v109 = vld [vmem:[%s0 + $0x2d0] sm:$0xff]
    %v110 = vld [vmem:[%s0 + $0x2d8] sm:$0xff]
    %v111 = vld [vmem:[%s0 + $0x2e0] sm:$0xff]
    %v112 = vld [vmem:[%s0 + $0x2e8] sm:$0xff]
    %v113 = vld [vmem:[%s0 + $0x2f0] sm:$0xff]
    %v114 = vld [vmem:[%s0 + $0x2f8] sm:$0xff]
    %v115 = vld [vmem:[%s0 + $0x300] sm:$0xff]
    %v116 = vld [vmem:[%s0 + $0x308] sm:$0xff]
    %v117 = vld [vmem:[%s0 + $0x310] sm:$0xff]
    %v118 = vld [vmem:[%s0 + $0x318] sm:$0xff]
    %v119 = vld [vmem:[%s0 + $0x320] sm:$0xff]
    %v120 = vld [vmem:[%s0 + $0x328] sm:$0xff]
    %v121 = vld [vmem:[%s0 + $0x330] sm:$0xff]
    %v122 = vld [vmem:[%s0 + $0x338] sm:$0xff]
    %v123 = vld [vmem:[%s0 + $0x340] sm:$0xff]
    %v124 = vld [vmem:[%s0 + $0x348] sm:$0xff]
    %v125 = vld [vmem:[%s0 + $0x350] sm:$0xff]
    %v126 = vld [vmem:[%s0 + $0x358] sm:$0xff]
    %v127 = vld [vmem:[%s0 + $0x360] sm:$0xff]
    %v128 = vld [vmem:[%s0 + $0x368] sm:$0xff]
    %v129 = vld [vmem:[%s0 + $0x370] sm:$0xff]
    %v130 = vld [vmem:[%s0 + $0x378] sm:$0xff]
    %v131 = vld [vmem:[%s0 + $0x380] sm:$0xff]
    %v132 = vld [vmem:[%s0 + $0x388] sm:$0xff]
    %v133 = vld [vmem:[%s0 + $0x390] sm:$0xff]
    %v134 = vld [vmem:[%s0 + $0x398] sm:$0xff]
    %v135 = vld [vmem:[%s0 + $0x3a0] sm:$0xff]
    %v136 = vld [vmem:[%s0 + $0x3a8] sm:$0xff]
    %v137 = vld [vmem:[%s0 + $0x3b0] sm:$0xff]
    %v138 = vld [vmem:[%s0 + $0x3b8] sm:$0xff]
    %v139 = vld [vmem:[%s0 + $0x3c0] sm:$0xff]
    %v140 = vld [vmem:[%s0 + $0x3c8] sm:$0xff]
    %v141 = vld [vmem:[%s0 + $0x3d0] sm:$0xff]
    %v142 = vld [vmem:[%s0 + $0x3d8] sm:$0xff]
    %v143 = vld [vmem:[%s0 + $0x3e0] sm:$0xff]
    %v144 = vld [vmem:[%s0 + $0x3e8] sm:$0xff]
    %v145 = vld [vmem:[%s0 + $0x3f0] sm:$0xff]
    %v146 = vld [vmem:[%s0 + $0x3f8] sm:$0xff]
    %v147 = vld [vmem:[%s0 + $0x400] sm:$0xff]
    %v148 = vld [vmem:[%s0 + $0x408] sm:$0xff]
    %v149 = vld [vmem:[%s0 + $0x410] sm:$0xff]
    %v150 = vld [vmem:[%s0 + $0x418] sm:$0xff]
    %v151 = vld [vmem:[%s0 + $0x420] sm:$0xff]
    %v152 = vld [vmem:[%s0 + $0x428] sm:$0xff]
    %v153 = vld [vmem:[%s0 + $0x430] sm:$0xff]
    %v154 = vld [vmem:[%s0 + $0x438] sm:$0xff]
    %v155 = vld [vmem:[%s0 + $0x440] sm:$0xff]
    %v156 = vld [vmem:[%s0 + $0x448] sm:$0xff]
    %v157 = vld [vmem:[%s0 + $0x450] sm:$0xff]
    %v158 = vld [vmem:[%s0 + $0x458] sm:$0xff]
    %v159 = vld [vmem:[%s0 + $0x460] sm:$0xff]
    %v160 = vld [vmem:[%s0 + $0x468] sm:$0xff]
    %v161 = vld [vmem:[%s0 + $0x470] sm:$0xff]
    %v162 = vld [vmem:[%s0 + $0x478] sm:$0xff]
    %v163 = vld [vmem:[%s0 + $0x480] sm:$0xff]
    %v164 = vld [vmem:[%s0 + $0x488] sm:$0xff]
    %v165 = vld [vmem:[%s0 + $0x490] sm:$0xff]
    %v166 = vld [vmem:[%s0 + $0x498] sm:$0xff]
    %v167 = vld [vmem:[%s0 + $0x4a0] sm:$0xff]
    %v168 = vld [vmem:[%s0 + $0x4a8] sm:$0xff]
    %v169 = vld [vmem:[%s0 + $0x4b0] sm:$0xff]
    %v170 = vld [vmem:[%s0 + $0x4b8] sm:$0xff]
    %v171 = vld [vmem:[%s0 + $0x4c0] sm:$0xff]
    %v172 = vld [vmem:[%s0 + $0x4c8] sm:$0xff]
    %v173 = vld [vmem:[%s0 + $0x4d0] sm:$0xff]
    %v174 = vld [vmem:[%s0 + $0x4d8] sm:$0xff]
    %v175 = vld [vmem:[%s0 + $0x4e0] sm:$0xff]
    %v176 = vld [vmem:[%s0 + $0x4e8] sm:$0xff]
    %v177 = vld [vmem:[%s0 + $0x4f0] sm:$0xff]
    %v178 = vld [vmem:[%s0 + $0x4f8] sm:$0xff]
    %v179 = vld [vmem:[%s0 + $0x500] sm:$0xff]
    %v180 = vld [vmem:[%s0 + $0x508] sm:$0xff]
    %v181 = vld [vmem:[%s0 + $0x510] sm:$0xff]
    %v182 = vld [vmem:[%s0 + $0x518] sm:$0xff]
    %v183 = vld [vmem:[%s0 + $0x520] sm:$0xff]
    %v184 = vld [vmem:[%s0 + $0x528] sm:$0xff]
    %v185 = vld [vmem:[%s0 + $0x530] sm:$0xff]
    %v186 = vld [vmem:[%s0 + $0x538] sm:$0xff]
    %v187 = vld [vmem:[%s0 + $0x540] sm:$0xff]
    %v188 = vld [vmem:[%s0 + $0x548] sm:$0xff]
    %v189 = vld [vmem:[%s0 + $0x550] sm:$0xff]
    %v190 = vld [vmem:[%s0 + $0x558] sm:$0xff]
    %v191 = vld [vmem:[%s0 + $0x560] sm:$0xff]
    %v192 = vld [vmem:[%s0 + $0x568] sm:$0xff]
    %v193 = vld [vmem:[%s0 + $0x570] sm:$0xff]
    %v194 = vld [vmem:[%s0 + $0x578] sm:$0xff]
    %v195 = vld [vmem:[%s0 + $0x580] sm:$0xff]
    %v196 = vld [vmem:[%s0 + $0x588] sm:$0xff]
    %v197 = vld [vmem:[%s0 + $0x590] sm:$0xff]
    %v198 = vld [vmem:[%s0 + $0x598] sm:$0xff]
    %v199 = vld [vmem:[%s0 + $0x5a0] sm:$0xff]
    %v200 = vld [vmem:[%s0 + $0x5a8] sm:$0xff]
    %v201 = vld [vmem:[%s0 + $0x5b0] sm:$0xff]
    %v202 = vld [vmem:[%s0 + $0x5b8] sm:$0xff]
    %v203 = vld [vmem:[%s0 + $0x5c0] sm:$0xff]
    %v204 = vld [vmem:[%s0 + $0x5c8] sm:$0xff]
    %v205 = vld [vmem:[%s0 + $0x5d0] sm:$0xff]
    %v206 = vld [vmem:[%s0 + $0x5d8] sm:$0xff]
    %v207 = vld [vmem:[%s0 + $0x5e0] sm:$0xff]
    %v208 = vld [vmem:[%s0 + $0x5e8] sm:$0xff]
    %v209 = vld [vmem:[%s0 + $0x5f0] sm:$0xff]
    %v210 = vld [vmem:[%s0 + $0x5f8] sm:$0xff]
    %v211 = vld [vmem:[%s0 + $0x600] sm:$0xff]
    %v212 = vld [vmem:[%s0 + $0x608] sm:$0xff]
    %v213 = vld [vmem:[%s0 + $0x610] sm:$0xff]
    %v214 = vld [vmem:[%s0 + $0x618] sm:$0xff]
    %v215 = vld [vmem:[%s0 + $0x620] sm:$0xff]
    %v216 = vld [vmem:[%s0 + $0x628] sm:$0xff]
    %v217 = vld [vmem:[%s0 + $0x630] sm:$0xff]
    %v218 = vld [vmem:[%s0 + $0x638] sm:$0xff]
    %v219 = vld [vmem:[#allocation2] sm:$0x1]
    %221 = vset.pattern.permute.xlu0 0
    %222 = vperm.xlu0 %221, %v219
    %v223 = vpop.permute.xlu0 %222
    %v225 = vperm.slane %v223, 0
    %v228 = vperm.slane %v17, 0
    %v229 = vperm.slane %v17, 1
    %v230 = vperm.slane %v17, 2
    %v231 = vperm.slane %v17, 3
    %v232 = vperm.slane %v17, 4
    %v233 = vperm.slane %v17, 5
    %v234 = vperm.slane %v17, 6
    %v235 = vperm.slane %v17, 7
    %v236 = vperm.slane %v18, 0
    %v237 = vperm.slane %v18, 1
    %v238 = vperm.slane %v18, 2
    %v239 = vperm.slane %v18, 3
    %v240 = vperm.slane %v18, 4
    %vm253 = vcmask 523264
    %v254 = vsel %vm253, %v240, 0
    %256 = vmatpush.msra.mxu0 %v34
    %257 = vmatpush.msra.mxu0 %v33
    %258 = vmatpush.msra.mxu0 %v32
    %259 = vmatpush.msra.mxu0 %v31
    %260 = vmatpush.msra.mxu0 %v30
    %261 = vmatpush.msra.mxu0 %v29
    %262 = vmatpush.msra.mxu0 %v28
    %263 = vmatpush.msra.mxu0 %v27
    %264 = vmatpush.msra.mxu0 %v26
    %265 = vmatpush.msra.mxu0 %v25
    %266 = vmatpush.msra.mxu0 %v24
    %267 = vmatpush.msra.mxu0 %v23
    %268 = vmatpush.msra.mxu0 %v22
    %269 = vmatpush.msra.mxu0 %v21
    %270 = vmatpush.msra.mxu0 %v20
    %271 = vmatpush.msra.mxu0 %v19
    %272 = vmatmul.f32.gmra.mxu0 %v228
    %v273 = vpop.f32.mrf.mxu0
    %v274 = vadd.f32 %v225, %v273
    %275 = vdwg.mxu0
    %276 = vmatpush.msra.mxu0 %v50
    %277 = vmatpush.msra.mxu0 %v49
    %278 = vmatpush.msra.mxu0 %v48
    %279 = vmatpush.msra.mxu0 %v47
    %280 = vmatpush.msra.mxu0 %v46
    %281 = vmatpush.msra.mxu0 %v45
    %282 = vmatpush.msra.mxu0 %v44
    %283 = vmatpush.msra.mxu0 %v43
    %284 = vmatpush.msra.mxu0 %v42
    %285 = vmatpush.msra.mxu0 %v41
    %286 = vmatpush.msra.mxu0 %v40
    %287 = vmatpush.msra.mxu0 %v39
    %288 = vmatpush.msra.mxu0 %v38
    %289 = vmatpush.msra.mxu0 %v37
    %290 = vmatpush.msra.mxu0 %v36
    %291 = vmatpush.msra.mxu0 %v35
    %292 = vmatmul.f32.gmra.mxu0 %v229
    %v293 = vpop.f32.mrf.mxu0
    %v294 = vadd.f32 %v274, %v293
    %295 = vdwg.mxu0
    %296 = vmatpush.msra.mxu0 %v66
    %297 = vmatpush.msra.mxu0 %v65
    %298 = vmatpush.msra.mxu0 %v64
    %299 = vmatpush.msra.mxu0 %v63
    %300 = vmatpush.msra.mxu0 %v62
    %301 = vmatpush.msra.mxu0 %v61
    %302 = vmatpush.msra.mxu0 %v60
    %303 = vmatpush.msra.mxu0 %v59
    %304 = vmatpush.msra.mxu0 %v58
    %305 = vmatpush.msra.mxu0 %v57
    %306 = vmatpush.msra.mxu0 %v56
    %307 = vmatpush.msra.mxu0 %v55
    %308 = vmatpush.msra.mxu0 %v54
    %309 = vmatpush.msra.mxu0 %v53
    %310 = vmatpush.msra.mxu0 %v52
    %311 = vmatpush.msra.mxu0 %v51
    %312 = vmatmul.f32.gmra.mxu0 %v230
    %v313 = vpop.f32.mrf.mxu0
    %v314 = vadd.f32 %v294, %v313
    %315 = vdwg.mxu0
    %316 = vmatpush.msra.mxu0 %v82
    %317 = vmatpush.msra.mxu0 %v81
    %318 = vmatpush.msra.mxu0 %v80
    %319 = vmatpush.msra.mxu0 %v79
    %320 = vmatpush.msra.mxu0 %v78
    %321 = vmatpush.msra.mxu0 %v77
    %322 = vmatpush.msra.mxu0 %v76
    %323 = vmatpush.msra.mxu0 %v75
    %324 = vmatpush.msra.mxu0 %v74
    %325 = vmatpush.msra.mxu0 %v73
    %326 = vmatpush.msra.mxu0 %v72
    %327 = vmatpush.msra.mxu0 %v71
    %328 = vmatpush.msra.mxu0 %v70
    %329 = vmatpush.msra.mxu0 %v69
    %330 = vmatpush.msra.mxu0 %v68
    %331 = vmatpush.msra.mxu0 %v67
    %332 = vmatmul.f32.gmra.mxu0 %v231
    %v333 = vpop.f32.mrf.mxu0
    %v334 = vadd.f32 %v314, %v333
    %335 = vdwg.mxu0
    %336 = vmatpush.msra.mxu0 %v98
    %337 = vmatpush.msra.mxu0 %v97
    %338 = vmatpush.msra.mxu0 %v96
    %339 = vmatpush.msra.mxu0 %v95
    %340 = vmatpush.msra.mxu0 %v94
    %341 = vmatpush.msra.mxu0 %v93
    %342 = vmatpush.msra.mxu0 %v92
    %343 = vmatpush.msra.mxu0 %v91
    %344 = vmatpush.msra.mxu0 %v90
    %345 = vmatpush.msra.mxu0 %v89
    %346 = vmatpush.msra.mxu0 %v88
    %347 = vmatpush.msra.mxu0 %v87
    %348 = vmatpush.msra.mxu0 %v86
    %349 = vmatpush.msra.mxu0 %v85
    %350 = vmatpush.msra.mxu0 %v84
    %351 = vmatpush.msra.mxu0 %v83
    %352 = vmatmul.f32.gmra.mxu0 %v232
    %v353 = vpop.f32.mrf.mxu0
    %v354 = vadd.f32 %v334, %v353
    %355 = vdwg.mxu0
    %356 = vmatpush.msra.mxu0 %v114
    %357 = vmatpush.msra.mxu0 %v113
    %358 = vmatpush.msra.mxu0 %v112
    %359 = vmatpush.msra.mxu0 %v111
    %360 = vmatpush.msra.mxu0 %v110
    %361 = vmatpush.msra.mxu0 %v109
    %362 = vmatpush.msra.mxu0 %v108
    %363 = vmatpush.msra.mxu0 %v107
    %364 = vmatpush.msra.mxu0 %v106
    %365 = vmatpush.msra.mxu0 %v105
    %366 = vmatpush.msra.mxu0 %v104
    %367 = vmatpush.msra.mxu0 %v103
    %368 = vmatpush.msra.mxu0 %v102
    %369 = vmatpush.msra.mxu0 %v101
    %370 = vmatpush.msra.mxu0 %v100
    %371 = vmatpush.msra.mxu0 %v99
    %372 = vmatmul.f32.gmra.mxu0 %v233
    %v373 = vpop.f32.mrf.mxu0
    %v374 = vadd.f32 %v354, %v373
    %375 = vdwg.mxu0
    %376 = vmatpush.msra.mxu0 %v130
    %377 = vmatpush.msra.mxu0 %v129
    %378 = vmatpush.msra.mxu0 %v128
    %379 = vmatpush.msra.mxu0 %v127
    %380 = vmatpush.msra.mxu0 %v126
    %381 = vmatpush.msra.mxu0 %v125
    %382 = vmatpush.msra.mxu0 %v124
    %383 = vmatpush.msra.mxu0 %v123
    %384 = vmatpush.msra.mxu0 %v122
    %385 = vmatpush.msra.mxu0 %v121
    %386 = vmatpush.msra.mxu0 %v120
    %387 = vmatpush.msra.mxu0 %v119
    %388 = vmatpush.msra.mxu0 %v118
    %389 = vmatpush.msra.mxu0 %v117
    %390 = vmatpush.msra.mxu0 %v116
    %391 = vmatpush.msra.mxu0 %v115
    %392 = vmatmul.f32.gmra.mxu0 %v234
    %v393 = vpop.f32.mrf.mxu0
    %v394 = vadd.f32 %v374, %v393
    %395 = vdwg.mxu0
    %396 = vmatpush.msra.mxu0 %v146
    %397 = vmatpush.msra.mxu0 %v145
    %398 = vmatpush.msra.mxu0 %v144
    %399 = vmatpush.msra.mxu0 %v143
    %400 = vmatpush.msra.mxu0 %v142
    %401 = vmatpush.msra.mxu0 %v141
    %402 = vmatpush.msra.mxu0 %v140
    %403 = vmatpush.msra.mxu0 %v139
    %404 = vmatpush.msra.mxu0 %v138
    %405 = vmatpush.msra.mxu0 %v137
    %406 = vmatpush.msra.mxu0 %v136
    %407 = vmatpush.msra.mxu0 %v135
    %408 = vmatpush.msra.mxu0 %v134
    %409 = vmatpush.msra.mxu0 %v133
    %410 = vmatpush.msra.mxu0 %v132
    %411 = vmatpush.msra.mxu0 %v131
    %412 = vmatmul.f32.gmra.mxu0 %v235
    %v413 = vpop.f32.mrf.mxu0
    %v414 = vadd.f32 %v394, %v413
    %415 = vdwg.mxu0
    %416 = vmatpush.msra.mxu0 %v162
    %417 = vmatpush.msra.mxu0 %v161
    %418 = vmatpush.msra.mxu0 %v160
    %419 = vmatpush.msra.mxu0 %v159
    %420 = vmatpush.msra.mxu0 %v158
    %421 = vmatpush.msra.mxu0 %v157
    %422 = vmatpush.msra.mxu0 %v156
    %423 = vmatpush.msra.mxu0 %v155
    %424 = vmatpush.msra.mxu0 %v154
    %425 = vmatpush.msra.mxu0 %v153
    %426 = vmatpush.msra.mxu0 %v152
    %427 = vmatpush.msra.mxu0 %v151
    %428 = vmatpush.msra.mxu0 %v150
    %429 = vmatpush.msra.mxu0 %v149
    %430 = vmatpush.msra.mxu0 %v148
    %431 = vmatpush.msra.mxu0 %v147
    %432 = vmatmul.f32.gmra.mxu0 %v236
    %v433 = vpop.f32.mrf.mxu0
    %v434 = vadd.f32 %v414, %v433
    %435 = vdwg.mxu0
    %436 = vmatpush.msra.mxu0 %v178
    %437 = vmatpush.msra.mxu0 %v177
    %438 = vmatpush.msra.mxu0 %v176
    %439 = vmatpush.msra.mxu0 %v175
    %440 = vmatpush.msra.mxu0 %v174
    %441 = vmatpush.msra.mxu0 %v173
    %442 = vmatpush.msra.mxu0 %v172
    %443 = vmatpush.msra.mxu0 %v171
    %444 = vmatpush.msra.mxu0 %v170
    %445 = vmatpush.msra.mxu0 %v169
    %446 = vmatpush.msra.mxu0 %v168
    %447 = vmatpush.msra.mxu0 %v167
    %448 = vmatpush.msra.mxu0 %v166
    %449 = vmatpush.msra.mxu0 %v165
    %450 = vmatpush.msra.mxu0 %v164
    %451 = vmatpush.msra.mxu0 %v163
    %452 = vmatmul.f32.gmra.mxu0 %v237
    %v453 = vpop.f32.mrf.mxu0
    %v454 = vadd.f32 %v434, %v453
    %455 = vdwg.mxu0
    %456 = vmatpush.msra.mxu0 %v194
    %457 = vmatpush.msra.mxu0 %v193
    %458 = vmatpush.msra.mxu0 %v192
    %459 = vmatpush.msra.mxu0 %v191
    %460 = vmatpush.msra.mxu0 %v190
    %461 = vmatpush.msra.mxu0 %v189
    %462 = vmatpush.msra.mxu0 %v188
    %463 = vmatpush.msra.mxu0 %v187
    %464 = vmatpush.msra.mxu0 %v186
    %465 = vmatpush.msra.mxu0 %v185
    %466 = vmatpush.msra.mxu0 %v184
    %467 = vmatpush.msra.mxu0 %v183
    %468 = vmatpush.msra.mxu0 %v182
    %469 = vmatpush.msra.mxu0 %v181
    %470 = vmatpush.msra.mxu0 %v180
    %471 = vmatpush.msra.mxu0 %v179
    %472 = vmatmul.f32.gmra.mxu0 %v238
    %v473 = vpop.f32.mrf.mxu0
    %v474 = vadd.f32 %v454, %v473
    %475 = vdwg.mxu0
    %476 = vmatpush.msra.mxu0 %v210
    %477 = vmatpush.msra.mxu0 %v209
    %478 = vmatpush.msra.mxu0 %v208
    %479 = vmatpush.msra.mxu0 %v207
    %480 = vmatpush.msra.mxu0 %v206
    %481 = vmatpush.msra.mxu0 %v205
    %482 = vmatpush.msra.mxu0 %v204
    %483 = vmatpush.msra.mxu0 %v203
    %484 = vmatpush.msra.mxu0 %v202
    %485 = vmatpush.msra.mxu0 %v201
    %486 = vmatpush.msra.mxu0 %v200
    %487 = vmatpush.msra.mxu0 %v199
    %488 = vmatpush.msra.mxu0 %v198
    %489 = vmatpush.msra.mxu0 %v197
    %490 = vmatpush.msra.mxu0 %v196
    %491 = vmatpush.msra.mxu0 %v195
    %492 = vmatmul.f32.gmra.mxu0 %v239
    %v493 = vpop.f32.mrf.mxu0
    %v494 = vadd.f32 %v474, %v493
    %495 = vdwg.mxu0
    %496 = vmatpush.msra.mxu0 0.0
    %497 = vmatpush.msra.mxu0 0.0
    %498 = vmatpush.msra.mxu0 0.0
    %499 = vmatpush.msra.mxu0 0.0
    %500 = vmatpush.msra.mxu0 0.0
    %501 = vmatpush.msra.mxu0 0.0
    %502 = vmatpush.msra.mxu0 0.0
    %503 = vmatpush.msra.mxu0 0.0
    %504 = vmatpush.msra.mxu0 %v218
    %505 = vmatpush.msra.mxu0 %v217
    %506 = vmatpush.msra.mxu0 %v216
    %507 = vmatpush.msra.mxu0 %v215
    %508 = vmatpush.msra.mxu0 %v214
    %509 = vmatpush.msra.mxu0 %v213
    %510 = vmatpush.msra.mxu0 %v212
    %511 = vmatpush.msra.mxu0 %v211
    %512 = vmatmul.f32.gmra.mxu0 %v254
    %v513 = vpop.f32.mrf.mxu0
    %v514 = vadd.f32 %v494, %v513
    %515 = vdwg.mxu0
    %v516 = vand.u32 2147483647, %v514
    %v517 = vsub.f32 0.0, %v516
    %v518 = vmul.f32 %v517, 1.442695
    %v519 = vpow.pop %v518
    %v520 = vadd.f32 %v519, 1.0
    %v521 = vrcp.pop %v520
    %vm522 = vcmp.ge.f32.partialorder %v514, 0.0
    %v523 = vmul.f32 %v519, %v521
    %v524 = vsel %vm522, %v521, %v523
    %vm525 = vcmask 8192
    %526 = vst.msk [vmem:[#allocation3] sm:$0x1] %vm525, %v524
    // Predicated region
    $region14: #{critic_forward.9} parent=1 // pred_check
      _
    $region15: #{critic_forward.9} parent=1 // pred_check_branch
      %528 = sbr.rel (0) target = $region17
    $region16: #{critic_forward.9} parent=1 // pred_region
      %530 = vsyncadd [#allocation4], 0
      %s532 = sshll.u32 [#allocation3], 4
      %s533 = int_to_ptr.vmem [resolvable:$true] %s532
      %s534 = sshll.u32 %s3, 4
      %s535 = int_to_ptr.hbm [resolvable:$true] %s534
      %537 = dma.vmem_to_hbm [thread:$0]  %s533, 16, %s535, [#allocation4]
    $region17: #{critic_forward.9} parent=1 // pred_fallthru
      _
    // Predicated region
    $region18: #{critic_forward.9} parent=1 // pred_check
      _
    $region19: #{critic_forward.9} parent=1 // pred_check_branch
      %539 = sbr.rel (0) target = $region21
    $region20: #{critic_forward.9} parent=1 // pred_region
      %541 = dma.done [#allocation4], 16
    $region21: #{critic_forward.9} parent=1 // pred_fallthru
      _
    %542 = vsyncpa [#allocation4], 1

</llo_original>
